<compile_context>
chip_gen: v6e
topology: v6e:2x2x1
jax: 0.10.0
libtpu: 0.0.40
codegen_flags: <defaults>
</compile_context>

<pallas_src>
import functools

import jax
import jax.numpy as jnp
import numpy as np
from jax.experimental import pallas as pl
from jax.experimental.pallas import tpu as pltpu

EPS = 1e-5  # nn.InstanceNorm1d default eps


# ---------------------------------------------------------------------------
# in-kernel math helpers (traced inside the Pallas kernel body)
# ---------------------------------------------------------------------------
def _gelu_tanh(x):
    # tanh-form GELU (abs err ~3e-4 vs exact erf GELU); tanh runs on the EUP.
    # TODO(synk): PyTorch F.gelu defaults to exact erf; tolerance covers the gap.
    c = 0.7978845608028654  # sqrt(2/pi)
    return 0.5 * x * (1.0 + jnp.tanh(c * (x + 0.044715 * x * x * x)))


def _add_instance_norm(x, y, gamma, beta):
    # AddAndInstanceNormalization: per-(batch, channel) stats over the sequence
    # axis (axis 0 of the 2-D (n, E) tile), biased variance, affine.
    a = x + y
    mean = jnp.mean(a, axis=0, keepdims=True)
    var = jnp.mean((a - mean) ** 2, axis=0, keepdims=True)
    return (a - mean) * jax.lax.rsqrt(var + EPS) * gamma + beta


# ---------------------------------------------------------------------------
# Pallas kernel: one full encoder branch for Bt batch elements per grid step
# ---------------------------------------------------------------------------
def branch_kernel(x1_ref, kv_ref, pref_ref,
                  wq_ref, wkv_ref, wc_ref, bc_ref, wv2c_ref,
                  g1_ref, be1_ref, wf1_ref, bf1_ref, wf2_ref, bf2_ref,
                  g2_ref, be2_ref,
                  out_ref, out1_scr,
                  *, head_num, qkv_dim, bn_num, bt, n1, nkv):
    hd = head_num * qkv_dim
    x1 = x1_ref[...]        # (bt*n1, E)   rows of cat(fcp, input), bt batches
    kv = kv_ref[...]        # (bt*nkv, E)  rows of cat(fcp, input, fcp_other)
    pref = pref_ref[...]    # (bt, E)      preference node (input[-1]) per batch
    emb = x1.shape[1]

    # ---- batched projections (large M = bt * rows) -------------------------
    q_all = jnp.dot(x1, wq_ref[...], preferred_element_type=jnp.float32)       # (bt*n1, HD)
    kv_all = jnp.dot(kv, wkv_ref[...], preferred_element_type=jnp.float32)     # (bt*nkv, 2HD)
    # Branch-2 attention collapses (softmax over a single key == 1):
    # its contribution after multi_head_combine is pref @ (Wv2 @ Wc), broadcast
    # over rows [bn_num, n1-1).  wv2c is pre-folded in the wrapper.
    r_all = jnp.dot(pref, wv2c_ref[...], preferred_element_type=jnp.float32)   # (bt, E)

    scale = 1.0 / float(np.sqrt(qkv_dim))
    row_ids = jax.lax.broadcasted_iota(jnp.int32, (n1, 1), 0)
    res_mask = ((row_ids >= bn_num) & (row_ids < n1 - 1)).astype(jnp.float32)  # (n1, 1)

    wc = wc_ref[...]
    bc = bc_ref[...]
    g1, be1 = g1_ref[...], be1_ref[...]
    g2, be2 = g2_ref[...], be2_ref[...]

    # ---- per-batch attention + combine + Add&InstanceNorm 1 ----------------
    for b in range(bt):
        qb = q_all[b * n1:(b + 1) * n1, :]           # (n1, HD)
        kb = kv_all[b * nkv:(b + 1) * nkv, :hd]      # (nkv, HD)
        vb = kv_all[b * nkv:(b + 1) * nkv, hd:]      # (nkv, HD)

        # start mh with the combine bias + the collapsed branch-2 residual
        mh = bc + res_mask * r_all[b:b + 1, :]       # (n1, E)
        for h in range(head_num):
            lo, hi = h * qkv_dim, (h + 1) * qkv_dim
            s = jnp.dot(qb[:, lo:hi], kb[:, lo:hi].T,
                        preferred_element_type=jnp.float32) * scale
            s = s - jnp.max(s, axis=-1, keepdims=True)
            e = jnp.exp(s)
            w = e * pl.reciprocal(jnp.sum(e, axis=-1, keepdims=True), approx=True)
            oh = jnp.dot(w, vb[:, lo:hi], preferred_element_type=jnp.float32)   # (n1, d)
            # fold multi_head_combine into the head loop (no lane concat)
            mh = mh + jnp.dot(oh, wc[lo:hi, :], preferred_element_type=jnp.float32)

        x1b = x1[b * n1:(b + 1) * n1, :]
        out1_scr[b * n1:(b + 1) * n1, :] = _add_instance_norm(x1b, mh, g1, be1)

    # ---- batched FeedForward over all bt*n1 rows ----------------------------
    o1 = out1_scr[...]                                                          # (bt*n1, E)
    hdn = jnp.dot(o1, wf1_ref[...], preferred_element_type=jnp.float32) + bf1_ref[...]
    hdn = _gelu_tanh(hdn)
    o2 = jnp.dot(hdn, wf2_ref[...], preferred_element_type=jnp.float32) + bf2_ref[...]

    # ---- per-batch Add & InstanceNorm 2 -------------------------------------
    for b in range(bt):
        lo, hi = b * n1, (b + 1) * n1
        out_ref[lo:hi, :] = _add_instance_norm(o1[lo:hi, :], o2[lo:hi, :], g2, be2)
    del emb


# ---------------------------------------------------------------------------
# wrapper: prep params, flatten to 2-D, call pallas_call
# ---------------------------------------------------------------------------
def _choose_bt(B):
    # Pack as many batch elements per grid step as possible while keeping the
    # sublane dim of every 2-D block either the full array or a multiple of 8.
    if B <= 8:
        return B
    for bt in (64, 32, 16, 8):
        if B % bt == 0:
            return bt
    return B  # fall back: single grid step over the whole batch


def prep_kernel_params(params):
    (Wq1, Wk1, Wv1, Wq2, Wk2, Wv2, Wc, bc, g1, be1,
     Wf1, bf1, Wf2, bf2, g2, be2) = params
    del Wq2, Wk2  # second attention collapses: q2/k2 never affect the output
    Wkv = jnp.concatenate([Wk1, Wv1], axis=1)   # (E, 2*HD) fused K/V projection
    Wv2c = Wv2 @ Wc                             # (E, E) collapsed branch-2 path
    return [Wq1, Wkv, Wc, bc, Wv2c, g1, be1, Wf1, bf1, Wf2, bf2, g2, be2]


def run_branch(input1, kv_in, pref_node, params, head_num, qkv_dim, bn_num):
    B, n1, E = input1.shape
    nkv = kv_in.shape[1]
    bt = _choose_bt(B)
    kparams = prep_kernel_params(params)

    x1_2d = input1.reshape(B * n1, E)
    kv_2d = kv_in.reshape(B * nkv, E)
    pref_2d = pref_node.reshape(B, E)

    kernel = functools.partial(branch_kernel, head_num=head_num, qkv_dim=qkv_dim,
                               bn_num=bn_num, bt=bt, n1=n1, nkv=nkv)

    data_specs = [
        pl.BlockSpec((bt * n1, E), lambda i: (i, 0)),
        pl.BlockSpec((bt * nkv, E), lambda i: (i, 0)),
        pl.BlockSpec((bt, E), lambda i: (i, 0)),
    ]
    # all parameters are 2-D and passed untiled (same full block every step)
    param_specs = [pl.BlockSpec(p.shape, lambda i: (0, 0)) for p in kparams]

    out2d = pl.pallas_call(
        kernel,
        out_shape=jax.ShapeDtypeStruct((B * n1, E), jnp.float32),
        grid_spec=pltpu.PrefetchScalarGridSpec(
            num_scalar_prefetch=0,
            grid=(B // bt,),
            in_specs=data_specs + param_specs,
            out_specs=pl.BlockSpec((bt * n1, E), lambda i: (i, 0)),
            scratch_shapes=[pltpu.VMEM((bt * n1, E), jnp.float32)],
        ),
        compiler_params=pltpu.CompilerParams(dimension_semantics=("parallel",)),
    )(x1_2d, kv_2d, pref_2d, *kparams)
    return out2d.reshape(B, n1, E)


# ---------------------------------------------------------------------------
# EncoderFusionLayer forward (JAX glue around the two branch kernels)
# ---------------------------------------------------------------------------
def encoder_fusion_layer(inp, inp_img, fcp, fcp_img, params_main, params_img,
                         *, head_num, qkv_dim, bn_num, bn_img_num):
    input1 = jnp.concatenate([fcp, inp], axis=1)
    input1_img = jnp.concatenate([fcp_img, inp_img], axis=1)
    kv_main = jnp.concatenate([input1, fcp_img], axis=1)
    kv_img = jnp.concatenate([input1_img, fcp], axis=1)

    pref_node = inp[:, -1:, :]
    pref_node_img = inp_img[:, -1:, :]

    # TODO(synk): fusing both branches into one pallas_call needs equal n1
    # (bn_num == bn_img_num) or padding; kept as two calls.
    out3 = run_branch(input1, kv_main, pref_node,
                      params_main, head_num, qkv_dim, bn_num)
    out3_img = run_branch(input1_img, kv_img, pref_node_img,
                          params_img, head_num, qkv_dim, bn_img_num)

    return (out3[:, bn_num:], out3_img[:, bn_img_num:],
            out3[:, :bn_num], out3_img[:, :bn_img_num])


# ---------------------------------------------------------------------------
# pure-JAX reference (mirrors the PyTorch forward, full un-collapsed path)
# ---------------------------------------------------------------------------
def reference_branch(input1, kv_in, embed_nodes, pref_node, params,
                     head_num, qkv_dim, bn_num):
    (Wq1, Wk1, Wv1, Wq2, Wk2, Wv2, Wc, bc, g1, be1,
     Wf1, bf1, Wf2, bf2, g2, be2) = params

    def heads(x, W):
        y = x @ W
        B, n, _ = y.shape
        return y.reshape(B, n, head_num, qkv_dim).transpose(0, 2, 1, 3)

    def mha(q, k, v):
        s = jnp.einsum('bhnd,bhmd->bhnm', q, k) / jnp.sqrt(jnp.float32(qkv_dim))
        w = jax.nn.softmax(s, axis=-1)
        o = jnp.einsum('bhnm,bhmd->bhnd', w, v)
        B, H, n, d = o.shape
        return o.transpose(0, 2, 1, 3).reshape(B, n, H * d)

    out_concat = mha(heads(input1, Wq1), heads(kv_in, Wk1), heads(kv_in, Wv1))
    add_concat = mha(heads(embed_nodes, Wq2), heads(pref_node, Wk2),
                     heads(pref_node, Wv2))
    out_concat = out_concat.at[:, bn_num:-1].add(add_concat)
    mh_out = out_concat @ Wc + bc

    def add_norm(x, y, g, be):
        a = x + y
        mean = a.mean(axis=1, keepdims=True)
        var = ((a - mean) ** 2).mean(axis=1, keepdims=True)
        return (a - mean) / jnp.sqrt(var + EPS) * g + be

    out1 = add_norm(input1, mh_out, g1, be1)
    h = jax.nn.gelu(out1 @ Wf1 + bf1, approximate=False)
    out2 = h @ Wf2 + bf2
    return add_norm(out1, out2, g2, be2)


def reference_forward(inp, inp_img, fcp, fcp_img, params_main, params_img,
                      *, head_num, qkv_dim, bn_num, bn_img_num):
    input1 = jnp.concatenate([fcp, inp], axis=1)
    input1_img = jnp.concatenate([fcp_img, inp_img], axis=1)
    kv_main = jnp.concatenate([input1, fcp_img], axis=1)
    kv_img = jnp.concatenate([input1_img, fcp], axis=1)
    out3 = reference_branch(input1, kv_main, inp[:, :-1, :], inp[:, -1:, :],
                            params_main, head_num, qkv_dim, bn_num)
    out3_img = reference_branch(input1_img, kv_img, inp_img[:, :-1, :],
                                inp_img[:, -1:, :], params_img,
                                head_num, qkv_dim, bn_img_num)
    return (out3[:, bn_num:], out3_img[:, bn_img_num:],
            out3[:, :bn_num], out3_img[:, :bn_img_num])


# ---------------------------------------------------------------------------
# deterministic parameter init (synthetic; no checkpoint load)
# ---------------------------------------------------------------------------
def init_branch_params(key, E, H, d, F):
    HD = H * d
    ks = jax.random.split(key, 16)

    def w(k, shape, scale=0.1):
        return jax.random.normal(k, shape, jnp.float32) * scale

    return [
        w(ks[0], (E, HD)), w(ks[1], (E, HD)), w(ks[2], (E, HD)),   # Wq1, Wk1, Wv1
        w(ks[3], (E, HD)), w(ks[4], (E, HD)), w(ks[5], (E, HD)),   # Wq2, Wk2, Wv2
        w(ks[6], (HD, E)), w(ks[7], (1, E), 0.05),                 # multi_head_combine W, b
        1.0 + w(ks[8], (1, E), 0.05), w(ks[9], (1, E), 0.05),      # norm1 gamma, beta
        w(ks[10], (E, F)), w(ks[11], (1, F), 0.05),                # FF W1, b1
        w(ks[12], (F, E)), w(ks[13], (1, E), 0.05),                # FF W2, b2
        1.0 + w(ks[14], (1, E), 0.05), w(ks[15], (1, E), 0.05),    # norm2 gamma, beta
    ]


if __name__ == "__main__":
    key = jax.random.PRNGKey(0)
    B, N, E = 2, 8, 32           # batch, seq (incl. preference node), embedding_dim
    H, d, F = 4, 8, 64           # head_num, qkv_dim, ff_hidden_dim
    bn_num, bn_img_num = 3, 2    # model_params['bn_num'], model_params['bn_img_num']

    k_in, k_img, k_fcp, k_fcpi, k_p1, k_p2 = jax.random.split(key, 6)
    inp = jax.random.normal(k_in, (B, N, E), jnp.float32)
    inp_img = jax.random.normal(k_img, (B, N, E), jnp.float32)
    fcp = jax.random.normal(k_fcp, (B, bn_num, E), jnp.float32)
    fcp_img = jax.random.normal(k_fcpi, (B, bn_img_num, E), jnp.float32)

    params_main = init_branch_params(k_p1, E, H, d, F)
    params_img = init_branch_params(k_p2, E, H, d, F)

    outs = encoder_fusion_layer(inp, inp_img, fcp, fcp_img,
                                params_main, params_img,
                                head_num=H, qkv_dim=d,
                                bn_num=bn_num, bn_img_num=bn_img_num)
    outs = jax.block_until_ready(outs)

    refs = reference_forward(inp, inp_img, fcp, fcp_img,
                             params_main, params_img,
                             head_num=H, qkv_dim=d,
                             bn_num=bn_num, bn_img_num=bn_img_num)
    refs = jax.block_until_ready(refs)

    for o, r in zip(outs, refs):
        np.testing.assert_allclose(np.asarray(o), np.asarray(r),
                                   atol=2e-3, rtol=2e-3)

    print("KERNEL_OK")
</pallas_src>

<mosaic_0001>
module attributes {stable_mosaic.version = 11 : i64} {
  func.func @branch_kernel(%arg0: i32, %arg1: memref<22x32xf32, #tpu.memory_space<vmem>>, %arg2: memref<26x32xf32, #tpu.memory_space<vmem>>, %arg3: memref<2x32xf32, #tpu.memory_space<vmem>>, %arg4: memref<32x32xf32, #tpu.memory_space<vmem>>, %arg5: memref<32x64xf32, #tpu.memory_space<vmem>>, %arg6: memref<32x32xf32, #tpu.memory_space<vmem>>, %arg7: memref<1x32xf32, #tpu.memory_space<vmem>>, %arg8: memref<32x32xf32, #tpu.memory_space<vmem>>, %arg9: memref<1x32xf32, #tpu.memory_space<vmem>>, %arg10: memref<1x32xf32, #tpu.memory_space<vmem>>, %arg11: memref<32x64xf32, #tpu.memory_space<vmem>>, %arg12: memref<1x64xf32, #tpu.memory_space<vmem>>, %arg13: memref<64x32xf32, #tpu.memory_space<vmem>>, %arg14: memref<1x32xf32, #tpu.memory_space<vmem>>, %arg15: memref<1x32xf32, #tpu.memory_space<vmem>>, %arg16: memref<1x32xf32, #tpu.memory_space<vmem>>, %arg17: memref<22x32xf32, #tpu.memory_space<vmem>>, %arg18: memref<22x32xf32, #tpu.memory_space<vmem>>) attributes {dimension_semantics = [#tpu.dimension_semantics<parallel>], iteration_bounds = array<i64: 1>, scalar_prefetch = 0 : i64, scratch_operands = 1 : i64, tpu.core_type = #tpu.core_type<tc>, window_params = [{transform_indices = @transform_0, window_bounds = array<i64: 22, 32>}, {transform_indices = @transform_1, window_bounds = array<i64: 26, 32>}, {transform_indices = @transform_2, window_bounds = array<i64: 2, 32>}, {pipeline_mode = #tpu.pipeline_mode<synchronous>, transform_indices = @transform_3, window_bounds = array<i64: 32, 32>}, {pipeline_mode = #tpu.pipeline_mode<synchronous>, transform_indices = @transform_4, window_bounds = array<i64: 32, 64>}, {pipeline_mode = #tpu.pipeline_mode<synchronous>, transform_indices = @transform_5, window_bounds = array<i64: 32, 32>}, {pipeline_mode = #tpu.pipeline_mode<synchronous>, transform_indices = @transform_6, window_bounds = array<i64: 1, 32>}, {pipeline_mode = #tpu.pipeline_mode<synchronous>, transform_indices = @transform_7, window_bounds = array<i64: 32, 32>}, {pipeline_mode = #tpu.pipeline_mode<synchronous>, transform_indices = @transform_8, window_bounds = array<i64: 1, 32>}, {pipeline_mode = #tpu.pipeline_mode<synchronous>, transform_indices = @transform_9, window_bounds = array<i64: 1, 32>}, {pipeline_mode = #tpu.pipeline_mode<synchronous>, transform_indices = @transform_10, window_bounds = array<i64: 32, 64>}, {pipeline_mode = #tpu.pipeline_mode<synchronous>, transform_indices = @transform_11, window_bounds = array<i64: 1, 64>}, {pipeline_mode = #tpu.pipeline_mode<synchronous>, transform_indices = @transform_12, window_bounds = array<i64: 64, 32>}, {pipeline_mode = #tpu.pipeline_mode<synchronous>, transform_indices = @transform_13, window_bounds = array<i64: 1, 32>}, {pipeline_mode = #tpu.pipeline_mode<synchronous>, transform_indices = @transform_14, window_bounds = array<i64: 1, 32>}, {pipeline_mode = #tpu.pipeline_mode<synchronous>, transform_indices = @transform_15, window_bounds = array<i64: 1, 32>}, {transform_indices = @transform_16, window_bounds = array<i64: 22, 32>}]} {
    %c0 = arith.constant 0 : index
    %c0_0 = arith.constant 0 : index
    %0 = vector.load %arg1[%c0, %c0_0] : memref<22x32xf32, #tpu.memory_space<vmem>>, vector<22x32xf32>
    %c0_1 = arith.constant 0 : index
    %c0_2 = arith.constant 0 : index
    %1 = vector.load %arg2[%c0_1, %c0_2] : memref<26x32xf32, #tpu.memory_space<vmem>>, vector<26x32xf32>
    %c0_3 = arith.constant 0 : index
    %c0_4 = arith.constant 0 : index
    %2 = vector.load %arg3[%c0_3, %c0_4] : memref<2x32xf32, #tpu.memory_space<vmem>>, vector<2x32xf32>
    %c0_5 = arith.constant 0 : index
    %c0_6 = arith.constant 0 : index
    %3 = vector.load %arg4[%c0_5, %c0_6] : memref<32x32xf32, #tpu.memory_space<vmem>>, vector<32x32xf32>
    %cst = arith.constant dense<0.000000e+00> : vector<22x32xf32>
    %4 = tpu.matmul %0, %3, %cst {dimension_numbers = #tpu.dot_dimension_numbers<[1], [0], [0], [1], [0, 0, 1, 1], [], []>} : vector<22x32xf32>, vector<32x32xf32>, vector<22x32xf32> -> vector<22x32xf32>
    %c0_7 = arith.constant 0 : index
    %c0_8 = arith.constant 0 : index
    %5 = vector.load %arg5[%c0_7, %c0_8] : memref<32x64xf32, #tpu.memory_space<vmem>>, vector<32x64xf32>
    %cst_9 = arith.constant dense<0.000000e+00> : vector<26x64xf32>
    %6 = tpu.matmul %1, %5, %cst_9 {dimension_numbers = #tpu.dot_dimension_numbers<[1], [0], [0], [1], [0, 0, 1, 1], [], []>} : vector<26x32xf32>, vector<32x64xf32>, vector<26x64xf32> -> vector<26x64xf32>
    %c0_10 = arith.constant 0 : index
    %c0_11 = arith.constant 0 : index
    %7 = vector.load %arg8[%c0_10, %c0_11] : memref<32x32xf32, #tpu.memory_space<vmem>>, vector<32x32xf32>
    %cst_12 = arith.constant dense<0.000000e+00> : vector<2x32xf32>
    %8 = tpu.matmul %2, %7, %cst_12 {dimension_numbers = #tpu.dot_dimension_numbers<[1], [0], [0], [1], [0, 0, 1, 1], [], []>} : vector<2x32xf32>, vector<32x32xf32>, vector<2x32xf32> -> vector<2x32xf32>
    %9 = tpu.iota {dimensions = array<i32: 0>} : vector<11x1xi32>
    %c3_i32 = arith.constant 3 : i32
    %10 = vector.broadcast %c3_i32 : i32 to vector<11x1xi32>
    %11 = arith.cmpi sge, %9, %10 : vector<11x1xi32>
    %c10_i32 = arith.constant 10 : i32
    %12 = vector.broadcast %c10_i32 : i32 to vector<11x1xi32>
    %13 = arith.cmpi slt, %9, %12 : vector<11x1xi32>
    %14 = arith.andi %11, %13 : vector<11x1xi1>
    %15 = arith.extui %14 : vector<11x1xi1> to vector<11x1xi32>
    %16 = arith.sitofp %15 : vector<11x1xi32> to vector<11x1xf32>
    %c0_13 = arith.constant 0 : index
    %c0_14 = arith.constant 0 : index
    %17 = vector.load %arg6[%c0_13, %c0_14] : memref<32x32xf32, #tpu.memory_space<vmem>>, vector<32x32xf32>
    %c0_15 = arith.constant 0 : index
    %c0_16 = arith.constant 0 : index
    %18 = vector.load %arg7[%c0_15, %c0_16] : memref<1x32xf32, #tpu.memory_space<vmem>>, vector<1x32xf32>
    %c0_17 = arith.constant 0 : index
    %c0_18 = arith.constant 0 : index
    %19 = vector.load %arg9[%c0_17, %c0_18] : memref<1x32xf32, #tpu.memory_space<vmem>>, vector<1x32xf32>
    %c0_19 = arith.constant 0 : index
    %c0_20 = arith.constant 0 : index
    %20 = vector.load %arg10[%c0_19, %c0_20] : memref<1x32xf32, #tpu.memory_space<vmem>>, vector<1x32xf32>
    %c0_21 = arith.constant 0 : index
    %c0_22 = arith.constant 0 : index
    %21 = vector.load %arg15[%c0_21, %c0_22] : memref<1x32xf32, #tpu.memory_space<vmem>>, vector<1x32xf32>
    %c0_23 = arith.constant 0 : index
    %c0_24 = arith.constant 0 : index
    %22 = vector.load %arg16[%c0_23, %c0_24] : memref<1x32xf32, #tpu.memory_space<vmem>>, vector<1x32xf32>
    %23 = vector.extract_strided_slice %4 {offsets = [0, 0], sizes = [11, 32], strides = [1, 1]} : vector<22x32xf32> to vector<11x32xf32>
    %24 = vector.extract_strided_slice %6 {offsets = [0, 0], sizes = [13, 32], strides = [1, 1]} : vector<26x64xf32> to vector<13x32xf32>
    %25 = vector.extract_strided_slice %6 {offsets = [0, 32], sizes = [13, 32], strides = [1, 1]} : vector<26x64xf32> to vector<13x32xf32>
    %26 = vector.extract_strided_slice %8 {offsets = [0, 0], sizes = [1, 32], strides = [1, 1]} : vector<2x32xf32> to vector<1x32xf32>
    %27 = vector.broadcast %16 : vector<11x1xf32> to vector<11x32xf32>
    %28 = vector.broadcast %26 : vector<1x32xf32> to vector<11x32xf32>
    %29 = arith.mulf %27, %28 : vector<11x32xf32>
    %30 = vector.broadcast %18 : vector<1x32xf32> to vector<11x32xf32>
    %31 = arith.addf %30, %29 : vector<11x32xf32>
    %32 = vector.extract_strided_slice %23 {offsets = [0, 0], sizes = [11, 8], strides = [1, 1]} : vector<11x32xf32> to vector<11x8xf32>
    %33 = vector.extract_strided_slice %24 {offsets = [0, 0], sizes = [13, 8], strides = [1, 1]} : vector<13x32xf32> to vector<13x8xf32>
    %34 = tpu.transpose %33, [1, 0] : vector<13x8xf32> -> vector<8x13xf32>
    %cst_25 = arith.constant dense<0.000000e+00> : vector<11x13xf32>
    %35 = tpu.matmul %32, %34, %cst_25 {dimension_numbers = #tpu.dot_dimension_numbers<[1], [0], [0], [1], [0, 0, 1, 1], [], []>} : vector<11x8xf32>, vector<8x13xf32>, vector<11x13xf32> -> vector<11x13xf32>
    %cst_26 = arith.constant 0.353553385 : f32
    %36 = vector.broadcast %cst_26 : f32 to vector<11x13xf32>
    %37 = arith.mulf %35, %36 : vector<11x13xf32>
    %cst_27 = arith.constant dense<0xFF800000> : vector<11xf32>
    %38 = vector.multi_reduction <maximumf>, %37, %cst_27 [1] : vector<11x13xf32> to vector<11xf32>
    %39 = vector.shape_cast %38 : vector<11xf32> to vector<11x1xf32>
    %40 = vector.broadcast %39 : vector<11x1xf32> to vector<11x13xf32>
    %41 = arith.subf %37, %40 : vector<11x13xf32>
    %42 = math.exp %41 : vector<11x13xf32>
    %cst_28 = arith.constant dense<0.000000e+00> : vector<11xf32>
    %43 = vector.multi_reduction <add>, %42, %cst_28 [1] : vector<11x13xf32> to vector<11xf32>
    %44 = vector.shape_cast %43 : vector<11xf32> to vector<11x1xf32>
    %45 = tpu.reciprocal %44 {approx = true} : vector<11x1xf32> -> vector<11x1xf32>
    %46 = vector.broadcast %45 : vector<11x1xf32> to vector<11x13xf32>
    %47 = arith.mulf %42, %46 : vector<11x13xf32>
    %48 = vector.extract_strided_slice %25 {offsets = [0, 0], sizes = [13, 8], strides = [1, 1]} : vector<13x32xf32> to vector<13x8xf32>
    %cst_29 = arith.constant dense<0.000000e+00> : vector<11x8xf32>
    %49 = tpu.matmul %47, %48, %cst_29 {dimension_numbers = #tpu.dot_dimension_numbers<[1], [0], [0], [1], [0, 0, 1, 1], [], []>} : vector<11x13xf32>, vector<13x8xf32>, vector<11x8xf32> -> vector<11x8xf32>
    %50 = vector.extract_strided_slice %17 {offsets = [0, 0], sizes = [8, 32], strides = [1, 1]} : vector<32x32xf32> to vector<8x32xf32>
    %cst_30 = arith.constant dense<0.000000e+00> : vector<11x32xf32>
    %51 = tpu.matmul %49, %50, %cst_30 {dimension_numbers = #tpu.dot_dimension_numbers<[1], [0], [0], [1], [0, 0, 1, 1], [], []>} : vector<11x8xf32>, vector<8x32xf32>, vector<11x32xf32> -> vector<11x32xf32>
    %52 = arith.addf %31, %51 : vector<11x32xf32>
    %53 = vector.extract_strided_slice %23 {offsets = [0, 8], sizes = [11, 8], strides = [1, 1]} : vector<11x32xf32> to vector<11x8xf32>
    %54 = vector.extract_strided_slice %24 {offsets = [0, 8], sizes = [13, 8], strides = [1, 1]} : vector<13x32xf32> to vector<13x8xf32>
    %55 = tpu.transpose %54, [1, 0] : vector<13x8xf32> -> vector<8x13xf32>
    %cst_31 = arith.constant dense<0.000000e+00> : vector<11x13xf32>
    %56 = tpu.matmul %53, %55, %cst_31 {dimension_numbers = #tpu.dot_dimension_numbers<[1], [0], [0], [1], [0, 0, 1, 1], [], []>} : vector<11x8xf32>, vector<8x13xf32>, vector<11x13xf32> -> vector<11x13xf32>
    %cst_32 = arith.constant 0.353553385 : f32
    %57 = vector.broadcast %cst_32 : f32 to vector<11x13xf32>
    %58 = arith.mulf %56, %57 : vector<11x13xf32>
    %cst_33 = arith.constant dense<0xFF800000> : vector<11xf32>
    %59 = vector.multi_reduction <maximumf>, %58, %cst_33 [1] : vector<11x13xf32> to vector<11xf32>
    %60 = vector.shape_cast %59 : vector<11xf32> to vector<11x1xf32>
    %61 = vector.broadcast %60 : vector<11x1xf32> to vector<11x13xf32>
    %62 = arith.subf %58, %61 : vector<11x13xf32>
    %63 = math.exp %62 : vector<11x13xf32>
    %cst_34 = arith.constant dense<0.000000e+00> : vector<11xf32>
    %64 = vector.multi_reduction <add>, %63, %cst_34 [1] : vector<11x13xf32> to vector<11xf32>
    %65 = vector.shape_cast %64 : vector<11xf32> to vector<11x1xf32>
    %66 = tpu.reciprocal %65 {approx = true} : vector<11x1xf32> -> vector<11x1xf32>
    %67 = vector.broadcast %66 : vector<11x1xf32> to vector<11x13xf32>
    %68 = arith.mulf %63, %67 : vector<11x13xf32>
    %69 = vector.extract_strided_slice %25 {offsets = [0, 8], sizes = [13, 8], strides = [1, 1]} : vector<13x32xf32> to vector<13x8xf32>
    %cst_35 = arith.constant dense<0.000000e+00> : vector<11x8xf32>
    %70 = tpu.matmul %68, %69, %cst_35 {dimension_numbers = #tpu.dot_dimension_numbers<[1], [0], [0], [1], [0, 0, 1, 1], [], []>} : vector<11x13xf32>, vector<13x8xf32>, vector<11x8xf32> -> vector<11x8xf32>
    %71 = vector.extract_strided_slice %17 {offsets = [8, 0], sizes = [8, 32], strides = [1, 1]} : vector<32x32xf32> to vector<8x32xf32>
    %cst_36 = arith.constant dense<0.000000e+00> : vector<11x32xf32>
    %72 = tpu.matmul %70, %71, %cst_36 {dimension_numbers = #tpu.dot_dimension_numbers<[1], [0], [0], [1], [0, 0, 1, 1], [], []>} : vector<11x8xf32>, vector<8x32xf32>, vector<11x32xf32> -> vector<11x32xf32>
    %73 = arith.addf %52, %72 : vector<11x32xf32>
    %74 = vector.extract_strided_slice %23 {offsets = [0, 16], sizes = [11, 8], strides = [1, 1]} : vector<11x32xf32> to vector<11x8xf32>
    %75 = vector.extract_strided_slice %24 {offsets = [0, 16], sizes = [13, 8], strides = [1, 1]} : vector<13x32xf32> to vector<13x8xf32>
    %76 = tpu.transpose %75, [1, 0] : vector<13x8xf32> -> vector<8x13xf32>
    %cst_37 = arith.constant dense<0.000000e+00> : vector<11x13xf32>
    %77 = tpu.matmul %74, %76, %cst_37 {dimension_numbers = #tpu.dot_dimension_numbers<[1], [0], [0], [1], [0, 0, 1, 1], [], []>} : vector<11x8xf32>, vector<8x13xf32>, vector<11x13xf32> -> vector<11x13xf32>
    %cst_38 = arith.constant 0.353553385 : f32
    %78 = vector.broadcast %cst_38 : f32 to vector<11x13xf32>
    %79 = arith.mulf %77, %78 : vector<11x13xf32>
    %cst_39 = arith.constant dense<0xFF800000> : vector<11xf32>
    %80 = vector.multi_reduction <maximumf>, %79, %cst_39 [1] : vector<11x13xf32> to vector<11xf32>
    %81 = vector.shape_cast %80 : vector<11xf32> to vector<11x1xf32>
    %82 = vector.broadcast %81 : vector<11x1xf32> to vector<11x13xf32>
    %83 = arith.subf %79, %82 : vector<11x13xf32>
    %84 = math.exp %83 : vector<11x13xf32>
    %cst_40 = arith.constant dense<0.000000e+00> : vector<11xf32>
    %85 = vector.multi_reduction <add>, %84, %cst_40 [1] : vector<11x13xf32> to vector<11xf32>
    %86 = vector.shape_cast %85 : vector<11xf32> to vector<11x1xf32>
    %87 = tpu.reciprocal %86 {approx = true} : vector<11x1xf32> -> vector<11x1xf32>
    %88 = vector.broadcast %87 : vector<11x1xf32> to vector<11x13xf32>
    %89 = arith.mulf %84, %88 : vector<11x13xf32>
    %90 = vector.extract_strided_slice %25 {offsets = [0, 16], sizes = [13, 8], strides = [1, 1]} : vector<13x32xf32> to vector<13x8xf32>
    %cst_41 = arith.constant dense<0.000000e+00> : vector<11x8xf32>
    %91 = tpu.matmul %89, %90, %cst_41 {dimension_numbers = #tpu.dot_dimension_numbers<[1], [0], [0], [1], [0, 0, 1, 1], [], []>} : vector<11x13xf32>, vector<13x8xf32>, vector<11x8xf32> -> vector<11x8xf32>
    %92 = vector.extract_strided_slice %17 {offsets = [16, 0], sizes = [8, 32], strides = [1, 1]} : vector<32x32xf32> to vector<8x32xf32>
    %cst_42 = arith.constant dense<0.000000e+00> : vector<11x32xf32>
    %93 = tpu.matmul %91, %92, %cst_42 {dimension_numbers = #tpu.dot_dimension_numbers<[1], [0], [0], [1], [0, 0, 1, 1], [], []>} : vector<11x8xf32>, vector<8x32xf32>, vector<11x32xf32> -> vector<11x32xf32>
    %94 = arith.addf %73, %93 : vector<11x32xf32>
    %95 = vector.extract_strided_slice %23 {offsets = [0, 24], sizes = [11, 8], strides = [1, 1]} : vector<11x32xf32> to vector<11x8xf32>
    %96 = vector.extract_strided_slice %24 {offsets = [0, 24], sizes = [13, 8], strides = [1, 1]} : vector<13x32xf32> to vector<13x8xf32>
    %97 = tpu.transpose %96, [1, 0] : vector<13x8xf32> -> vector<8x13xf32>
    %cst_43 = arith.constant dense<0.000000e+00> : vector<11x13xf32>
    %98 = tpu.matmul %95, %97, %cst_43 {dimension_numbers = #tpu.dot_dimension_numbers<[1], [0], [0], [1], [0, 0, 1, 1], [], []>} : vector<11x8xf32>, vector<8x13xf32>, vector<11x13xf32> -> vector<11x13xf32>
    %cst_44 = arith.constant 0.353553385 : f32
    %99 = vector.broadcast %cst_44 : f32 to vector<11x13xf32>
    %100 = arith.mulf %98, %99 : vector<11x13xf32>
    %cst_45 = arith.constant dense<0xFF800000> : vector<11xf32>
    %101 = vector.multi_reduction <maximumf>, %100, %cst_45 [1] : vector<11x13xf32> to vector<11xf32>
    %102 = vector.shape_cast %101 : vector<11xf32> to vector<11x1xf32>
    %103 = vector.broadcast %102 : vector<11x1xf32> to vector<11x13xf32>
    %104 = arith.subf %100, %103 : vector<11x13xf32>
    %105 = math.exp %104 : vector<11x13xf32>
    %cst_46 = arith.constant dense<0.000000e+00> : vector<11xf32>
    %106 = vector.multi_reduction <add>, %105, %cst_46 [1] : vector<11x13xf32> to vector<11xf32>
    %107 = vector.shape_cast %106 : vector<11xf32> to vector<11x1xf32>
    %108 = tpu.reciprocal %107 {approx = true} : vector<11x1xf32> -> vector<11x1xf32>
    %109 = vector.broadcast %108 : vector<11x1xf32> to vector<11x13xf32>
    %110 = arith.mulf %105, %109 : vector<11x13xf32>
    %111 = vector.extract_strided_slice %25 {offsets = [0, 24], sizes = [13, 8], strides = [1, 1]} : vector<13x32xf32> to vector<13x8xf32>
    %cst_47 = arith.constant dense<0.000000e+00> : vector<11x8xf32>
    %112 = tpu.matmul %110, %111, %cst_47 {dimension_numbers = #tpu.dot_dimension_numbers<[1], [0], [0], [1], [0, 0, 1, 1], [], []>} : vector<11x13xf32>, vector<13x8xf32>, vector<11x8xf32> -> vector<11x8xf32>
    %113 = vector.extract_strided_slice %17 {offsets = [24, 0], sizes = [8, 32], strides = [1, 1]} : vector<32x32xf32> to vector<8x32xf32>
    %cst_48 = arith.constant dense<0.000000e+00> : vector<11x32xf32>
    %114 = tpu.matmul %112, %113, %cst_48 {dimension_numbers = #tpu.dot_dimension_numbers<[1], [0], [0], [1], [0, 0, 1, 1], [], []>} : vector<11x8xf32>, vector<8x32xf32>, vector<11x32xf32> -> vector<11x32xf32>
    %115 = arith.addf %94, %114 : vector<11x32xf32>
    %116 = vector.extract_strided_slice %0 {offsets = [0, 0], sizes = [11, 32], strides = [1, 1]} : vector<22x32xf32> to vector<11x32xf32>
    %117 = arith.addf %116, %115 : vector<11x32xf32>
    %cst_49 = arith.constant dense<0.000000e+00> : vector<32xf32>
    %118 = vector.multi_reduction <add>, %117, %cst_49 [0] : vector<11x32xf32> to vector<32xf32>
    %119 = vector.shape_cast %118 : vector<32xf32> to vector<1x32xf32>
    %cst_50 = arith.constant 1.100000e+01 : f32
    %120 = vector.broadcast %cst_50 : f32 to vector<1x32xf32>
    %121 = arith.divf %119, %120 : vector<1x32xf32>
    %122 = vector.broadcast %121 : vector<1x32xf32> to vector<11x32xf32>
    %123 = arith.subf %117, %122 : vector<11x32xf32>
    %124 = arith.mulf %123, %123 : vector<11x32xf32>
    %cst_51 = arith.constant dense<0.000000e+00> : vector<32xf32>
    %125 = vector.multi_reduction <add>, %124, %cst_51 [0] : vector<11x32xf32> to vector<32xf32>
    %126 = vector.shape_cast %125 : vector<32xf32> to vector<1x32xf32>
    %cst_52 = arith.constant 1.100000e+01 : f32
    %127 = vector.broadcast %cst_52 : f32 to vector<1x32xf32>
    %128 = arith.divf %126, %127 : vector<1x32xf32>
    %129 = vector.broadcast %121 : vector<1x32xf32> to vector<11x32xf32>
    %130 = arith.subf %117, %129 : vector<11x32xf32>
    %cst_53 = arith.constant 9.99999974E-6 : f32
    %131 = vector.broadcast %cst_53 : f32 to vector<1x32xf32>
    %132 = arith.addf %128, %131 : vector<1x32xf32>
    %133 = math.rsqrt %132 : vector<1x32xf32>
    %134 = vector.broadcast %133 : vector<1x32xf32> to vector<11x32xf32>
    %135 = arith.mulf %130, %134 : vector<11x32xf32>
    %136 = vector.broadcast %19 : vector<1x32xf32> to vector<11x32xf32>
    %137 = arith.mulf %135, %136 : vector<11x32xf32>
    %138 = vector.broadcast %20 : vector<1x32xf32> to vector<11x32xf32>
    %139 = arith.addf %137, %138 : vector<11x32xf32>
    %c0_54 = arith.constant 0 : index
    %c0_55 = arith.constant 0 : index
    %140 = vector.load %arg18[%c0_54, %c0_55] : memref<22x32xf32, #tpu.memory_space<vmem>>, vector<11x32xf32>
    tpu.vector_store %arg18[%c0_54, %c0_55], %139 {strides = array<i32>} : memref<22x32xf32, #tpu.memory_space<vmem>>, vector<11x32xf32>,
    %141 = vector.extract_strided_slice %4 {offsets = [11, 0], sizes = [11, 32], strides = [1, 1]} : vector<22x32xf32> to vector<11x32xf32>
    %142 = vector.extract_strided_slice %6 {offsets = [13, 0], sizes = [13, 32], strides = [1, 1]} : vector<26x64xf32> to vector<13x32xf32>
    %143 = vector.extract_strided_slice %6 {offsets = [13, 32], sizes = [13, 32], strides = [1, 1]} : vector<26x64xf32> to vector<13x32xf32>
    %144 = vector.extract_strided_slice %8 {offsets = [1, 0], sizes = [1, 32], strides = [1, 1]} : vector<2x32xf32> to vector<1x32xf32>
    %145 = vector.broadcast %16 : vector<11x1xf32> to vector<11x32xf32>
    %146 = vector.broadcast %144 : vector<1x32xf32> to vector<11x32xf32>
    %147 = arith.mulf %145, %146 : vector<11x32xf32>
    %148 = vector.broadcast %18 : vector<1x32xf32> to vector<11x32xf32>
    %149 = arith.addf %148, %147 : vector<11x32xf32>
    %150 = vector.extract_strided_slice %141 {offsets = [0, 0], sizes = [11, 8], strides = [1, 1]} : vector<11x32xf32> to vector<11x8xf32>
    %151 = vector.extract_strided_slice %142 {offsets = [0, 0], sizes = [13, 8], strides = [1, 1]} : vector<13x32xf32> to vector<13x8xf32>
    %152 = tpu.transpose %151, [1, 0] : vector<13x8xf32> -> vector<8x13xf32>
    %cst_56 = arith.constant dense<0.000000e+00> : vector<11x13xf32>
    %153 = tpu.matmul %150, %152, %cst_56 {dimension_numbers = #tpu.dot_dimension_numbers<[1], [0], [0], [1], [0, 0, 1, 1], [], []>} : vector<11x8xf32>, vector<8x13xf32>, vector<11x13xf32> -> vector<11x13xf32>
    %cst_57 = arith.constant 0.353553385 : f32
    %154 = vector.broadcast %cst_57 : f32 to vector<11x13xf32>
    %155 = arith.mulf %153, %154 : vector<11x13xf32>
    %cst_58 = arith.constant dense<0xFF800000> : vector<11xf32>
    %156 = vector.multi_reduction <maximumf>, %155, %cst_58 [1] : vector<11x13xf32> to vector<11xf32>
    %157 = vector.shape_cast %156 : vector<11xf32> to vector<11x1xf32>
    %158 = vector.broadcast %157 : vector<11x1xf32> to vector<11x13xf32>
    %159 = arith.subf %155, %158 : vector<11x13xf32>
    %160 = math.exp %159 : vector<11x13xf32>
    %cst_59 = arith.constant dense<0.000000e+00> : vector<11xf32>
    %161 = vector.multi_reduction <add>, %160, %cst_59 [1] : vector<11x13xf32> to vector<11xf32>
    %162 = vector.shape_cast %161 : vector<11xf32> to vector<11x1xf32>
    %163 = tpu.reciprocal %162 {approx = true} : vector<11x1xf32> -> vector<11x1xf32>
    %164 = vector.broadcast %163 : vector<11x1xf32> to vector<11x13xf32>
    %165 = arith.mulf %160, %164 : vector<11x13xf32>
    %166 = vector.extract_strided_slice %143 {offsets = [0, 0], sizes = [13, 8], strides = [1, 1]} : vector<13x32xf32> to vector<13x8xf32>
    %cst_60 = arith.constant dense<0.000000e+00> : vector<11x8xf32>
    %167 = tpu.matmul %165, %166, %cst_60 {dimension_numbers = #tpu.dot_dimension_numbers<[1], [0], [0], [1], [0, 0, 1, 1], [], []>} : vector<11x13xf32>, vector<13x8xf32>, vector<11x8xf32> -> vector<11x8xf32>
    %168 = vector.extract_strided_slice %17 {offsets = [0, 0], sizes = [8, 32], strides = [1, 1]} : vector<32x32xf32> to vector<8x32xf32>
    %cst_61 = arith.constant dense<0.000000e+00> : vector<11x32xf32>
    %169 = tpu.matmul %167, %168, %cst_61 {dimension_numbers = #tpu.dot_dimension_numbers<[1], [0], [0], [1], [0, 0, 1, 1], [], []>} : vector<11x8xf32>, vector<8x32xf32>, vector<11x32xf32> -> vector<11x32xf32>
    %170 = arith.addf %149, %169 : vector<11x32xf32>
    %171 = vector.extract_strided_slice %141 {offsets = [0, 8], sizes = [11, 8], strides = [1, 1]} : vector<11x32xf32> to vector<11x8xf32>
    %172 = vector.extract_strided_slice %142 {offsets = [0, 8], sizes = [13, 8], strides = [1, 1]} : vector<13x32xf32> to vector<13x8xf32>
    %173 = tpu.transpose %172, [1, 0] : vector<13x8xf32> -> vector<8x13xf32>
    %cst_62 = arith.constant dense<0.000000e+00> : vector<11x13xf32>
    %174 = tpu.matmul %171, %173, %cst_62 {dimension_numbers = #tpu.dot_dimension_numbers<[1], [0], [0], [1], [0, 0, 1, 1], [], []>} : vector<11x8xf32>, vector<8x13xf32>, vector<11x13xf32> -> vector<11x13xf32>
    %cst_63 = arith.constant 0.353553385 : f32
    %175 = vector.broadcast %cst_63 : f32 to vector<11x13xf32>
    %176 = arith.mulf %174, %175 : vector<11x13xf32>
    %cst_64 = arith.constant dense<0xFF800000> : vector<11xf32>
    %177 = vector.multi_reduction <maximumf>, %176, %cst_64 [1] : vector<11x13xf32> to vector<11xf32>
    %178 = vector.shape_cast %177 : vector<11xf32> to vector<11x1xf32>
    %179 = vector.broadcast %178 : vector<11x1xf32> to vector<11x13xf32>
    %180 = arith.subf %176, %179 : vector<11x13xf32>
    %181 = math.exp %180 : vector<11x13xf32>
    %cst_65 = arith.constant dense<0.000000e+00> : vector<11xf32>
    %182 = vector.multi_reduction <add>, %181, %cst_65 [1] : vector<11x13xf32> to vector<11xf32>
    %183 = vector.shape_cast %182 : vector<11xf32> to vector<11x1xf32>
    %184 = tpu.reciprocal %183 {approx = true} : vector<11x1xf32> -> vector<11x1xf32>
    %185 = vector.broadcast %184 : vector<11x1xf32> to vector<11x13xf32>
    %186 = arith.mulf %181, %185 : vector<11x13xf32>
    %187 = vector.extract_strided_slice %143 {offsets = [0, 8], sizes = [13, 8], strides = [1, 1]} : vector<13x32xf32> to vector<13x8xf32>
    %cst_66 = arith.constant dense<0.000000e+00> : vector<11x8xf32>
    %188 = tpu.matmul %186, %187, %cst_66 {dimension_numbers = #tpu.dot_dimension_numbers<[1], [0], [0], [1], [0, 0, 1, 1], [], []>} : vector<11x13xf32>, vector<13x8xf32>, vector<11x8xf32> -> vector<11x8xf32>
    %189 = vector.extract_strided_slice %17 {offsets = [8, 0], sizes = [8, 32], strides = [1, 1]} : vector<32x32xf32> to vector<8x32xf32>
    %cst_67 = arith.constant dense<0.000000e+00> : vector<11x32xf32>
    %190 = tpu.matmul %188, %189, %cst_67 {dimension_numbers = #tpu.dot_dimension_numbers<[1], [0], [0], [1], [0, 0, 1, 1], [], []>} : vector<11x8xf32>, vector<8x32xf32>, vector<11x32xf32> -> vector<11x32xf32>
    %191 = arith.addf %170, %190 : vector<11x32xf32>
    %192 = vector.extract_strided_slice %141 {offsets = [0, 16], sizes = [11, 8], strides = [1, 1]} : vector<11x32xf32> to vector<11x8xf32>
    %193 = vector.extract_strided_slice %142 {offsets = [0, 16], sizes = [13, 8], strides = [1, 1]} : vector<13x32xf32> to vector<13x8xf32>
    %194 = tpu.transpose %193, [1, 0] : vector<13x8xf32> -> vector<8x13xf32>
    %cst_68 = arith.constant dense<0.000000e+00> : vector<11x13xf32>
    %195 = tpu.matmul %192, %194, %cst_68 {dimension_numbers = #tpu.dot_dimension_numbers<[1], [0], [0], [1], [0, 0, 1, 1], [], []>} : vector<11x8xf32>, vector<8x13xf32>, vector<11x13xf32> -> vector<11x13xf32>
    %cst_69 = arith.constant 0.353553385 : f32
    %196 = vector.broadcast %cst_69 : f32 to vector<11x13xf32>
    %197 = arith.mulf %195, %196 : vector<11x13xf32>
    %cst_70 = arith.constant dense<0xFF800000> : vector<11xf32>
    %198 = vector.multi_reduction <maximumf>, %197, %cst_70 [1] : vector<11x13xf32> to vector<11xf32>
    %199 = vector.shape_cast %198 : vector<11xf32> to vector<11x1xf32>
    %200 = vector.broadcast %199 : vector<11x1xf32> to vector<11x13xf32>
    %201 = arith.subf %197, %200 : vector<11x13xf32>
    %202 = math.exp %201 : vector<11x13xf32>
    %cst_71 = arith.constant dense<0.000000e+00> : vector<11xf32>
    %203 = vector.multi_reduction <add>, %202, %cst_71 [1] : vector<11x13xf32> to vector<11xf32>
    %204 = vector.shape_cast %203 : vector<11xf32> to vector<11x1xf32>
    %205 = tpu.reciprocal %204 {approx = true} : vector<11x1xf32> -> vector<11x1xf32>
    %206 = vector.broadcast %205 : vector<11x1xf32> to vector<11x13xf32>
    %207 = arith.mulf %202, %206 : vector<11x13xf32>
    %208 = vector.extract_strided_slice %143 {offsets = [0, 16], sizes = [13, 8], strides = [1, 1]} : vector<13x32xf32> to vector<13x8xf32>
    %cst_72 = arith.constant dense<0.000000e+00> : vector<11x8xf32>
    %209 = tpu.matmul %207, %208, %cst_72 {dimension_numbers = #tpu.dot_dimension_numbers<[1], [0], [0], [1], [0, 0, 1, 1], [], []>} : vector<11x13xf32>, vector<13x8xf32>, vector<11x8xf32> -> vector<11x8xf32>
    %210 = vector.extract_strided_slice %17 {offsets = [16, 0], sizes = [8, 32], strides = [1, 1]} : vector<32x32xf32> to vector<8x32xf32>
    %cst_73 = arith.constant dense<0.000000e+00> : vector<11x32xf32>
    %211 = tpu.matmul %209, %210, %cst_73 {dimension_numbers = #tpu.dot_dimension_numbers<[1], [0], [0], [1], [0, 0, 1, 1], [], []>} : vector<11x8xf32>, vector<8x32xf32>, vector<11x32xf32> -> vector<11x32xf32>
    %212 = arith.addf %191, %211 : vector<11x32xf32>
    %213 = vector.extract_strided_slice %141 {offsets = [0, 24], sizes = [11, 8], strides = [1, 1]} : vector<11x32xf32> to vector<11x8xf32>
    %214 = vector.extract_strided_slice %142 {offsets = [0, 24], sizes = [13, 8], strides = [1, 1]} : vector<13x32xf32> to vector<13x8xf32>
    %215 = tpu.transpose %214, [1, 0] : vector<13x8xf32> -> vector<8x13xf32>
    %cst_74 = arith.constant dense<0.000000e+00> : vector<11x13xf32>
    %216 = tpu.matmul %213, %215, %cst_74 {dimension_numbers = #tpu.dot_dimension_numbers<[1], [0], [0], [1], [0, 0, 1, 1], [], []>} : vector<11x8xf32>, vector<8x13xf32>, vector<11x13xf32> -> vector<11x13xf32>
    %cst_75 = arith.constant 0.353553385 : f32
    %217 = vector.broadcast %cst_75 : f32 to vector<11x13xf32>
    %218 = arith.mulf %216, %217 : vector<11x13xf32>
    %cst_76 = arith.constant dense<0xFF800000> : vector<11xf32>
    %219 = vector.multi_reduction <maximumf>, %218, %cst_76 [1] : vector<11x13xf32> to vector<11xf32>
    %220 = vector.shape_cast %219 : vector<11xf32> to vector<11x1xf32>
    %221 = vector.broadcast %220 : vector<11x1xf32> to vector<11x13xf32>
    %222 = arith.subf %218, %221 : vector<11x13xf32>
    %223 = math.exp %222 : vector<11x13xf32>
    %cst_77 = arith.constant dense<0.000000e+00> : vector<11xf32>
    %224 = vector.multi_reduction <add>, %223, %cst_77 [1] : vector<11x13xf32> to vector<11xf32>
    %225 = vector.shape_cast %224 : vector<11xf32> to vector<11x1xf32>
    %226 = tpu.reciprocal %225 {approx = true} : vector<11x1xf32> -> vector<11x1xf32>
    %227 = vector.broadcast %226 : vector<11x1xf32> to vector<11x13xf32>
    %228 = arith.mulf %223, %227 : vector<11x13xf32>
    %229 = vector.extract_strided_slice %143 {offsets = [0, 24], sizes = [13, 8], strides = [1, 1]} : vector<13x32xf32> to vector<13x8xf32>
    %cst_78 = arith.constant dense<0.000000e+00> : vector<11x8xf32>
    %230 = tpu.matmul %228, %229, %cst_78 {dimension_numbers = #tpu.dot_dimension_numbers<[1], [0], [0], [1], [0, 0, 1, 1], [], []>} : vector<11x13xf32>, vector<13x8xf32>, vector<11x8xf32> -> vector<11x8xf32>
    %231 = vector.extract_strided_slice %17 {offsets = [24, 0], sizes = [8, 32], strides = [1, 1]} : vector<32x32xf32> to vector<8x32xf32>
    %cst_79 = arith.constant dense<0.000000e+00> : vector<11x32xf32>
    %232 = tpu.matmul %230, %231, %cst_79 {dimension_numbers = #tpu.dot_dimension_numbers<[1], [0], [0], [1], [0, 0, 1, 1], [], []>} : vector<11x8xf32>, vector<8x32xf32>, vector<11x32xf32> -> vector<11x32xf32>
    %233 = arith.addf %212, %232 : vector<11x32xf32>
    %234 = vector.extract_strided_slice %0 {offsets = [11, 0], sizes = [11, 32], strides = [1, 1]} : vector<22x32xf32> to vector<11x32xf32>
    %235 = arith.addf %234, %233 : vector<11x32xf32>
    %cst_80 = arith.constant dense<0.000000e+00> : vector<32xf32>
    %236 = vector.multi_reduction <add>, %235, %cst_80 [0] : vector<11x32xf32> to vector<32xf32>
    %237 = vector.shape_cast %236 : vector<32xf32> to vector<1x32xf32>
    %cst_81 = arith.constant 1.100000e+01 : f32
    %238 = vector.broadcast %cst_81 : f32 to vector<1x32xf32>
    %239 = arith.divf %237, %238 : vector<1x32xf32>
    %240 = vector.broadcast %239 : vector<1x32xf32> to vector<11x32xf32>
    %241 = arith.subf %235, %240 : vector<11x32xf32>
    %242 = arith.mulf %241, %241 : vector<11x32xf32>
    %cst_82 = arith.constant dense<0.000000e+00> : vector<32xf32>
    %243 = vector.multi_reduction <add>, %242, %cst_82 [0] : vector<11x32xf32> to vector<32xf32>
    %244 = vector.shape_cast %243 : vector<32xf32> to vector<1x32xf32>
    %cst_83 = arith.constant 1.100000e+01 : f32
    %245 = vector.broadcast %cst_83 : f32 to vector<1x32xf32>
    %246 = arith.divf %244, %245 : vector<1x32xf32>
    %247 = vector.broadcast %239 : vector<1x32xf32> to vector<11x32xf32>
    %248 = arith.subf %235, %247 : vector<11x32xf32>
    %cst_84 = arith.constant 9.99999974E-6 : f32
    %249 = vector.broadcast %cst_84 : f32 to vector<1x32xf32>
    %250 = arith.addf %246, %249 : vector<1x32xf32>
    %251 = math.rsqrt %250 : vector<1x32xf32>
    %252 = vector.broadcast %251 : vector<1x32xf32> to vector<11x32xf32>
    %253 = arith.mulf %248, %252 : vector<11x32xf32>
    %254 = vector.broadcast %19 : vector<1x32xf32> to vector<11x32xf32>
    %255 = arith.mulf %253, %254 : vector<11x32xf32>
    %256 = vector.broadcast %20 : vector<1x32xf32> to vector<11x32xf32>
    %257 = arith.addf %255, %256 : vector<11x32xf32>
    %c11 = arith.constant 11 : index
    %c0_85 = arith.constant 0 : index
    %258 = vector.load %arg18[%c11, %c0_85] : memref<22x32xf32, #tpu.memory_space<vmem>>, vector<11x32xf32>
    tpu.vector_store %arg18[%c11, %c0_85], %257 {strides = array<i32>} : memref<22x32xf32, #tpu.memory_space<vmem>>, vector<11x32xf32>,
    %c0_86 = arith.constant 0 : index
    %c0_87 = arith.constant 0 : index
    %259 = vector.load %arg18[%c0_86, %c0_87] : memref<22x32xf32, #tpu.memory_space<vmem>>, vector<22x32xf32>
    %c0_88 = arith.constant 0 : index
    %c0_89 = arith.constant 0 : index
    %260 = vector.load %arg11[%c0_88, %c0_89] : memref<32x64xf32, #tpu.memory_space<vmem>>, vector<32x64xf32>
    %cst_90 = arith.constant dense<0.000000e+00> : vector<22x64xf32>
    %261 = tpu.matmul %259, %260, %cst_90 {dimension_numbers = #tpu.dot_dimension_numbers<[1], [0], [0], [1], [0, 0, 1, 1], [], []>} : vector<22x32xf32>, vector<32x64xf32>, vector<22x64xf32> -> vector<22x64xf32>
    %c0_91 = arith.constant 0 : index
    %c0_92 = arith.constant 0 : index
    %262 = vector.load %arg12[%c0_91, %c0_92] : memref<1x64xf32, #tpu.memory_space<vmem>>, vector<1x64xf32>
    %263 = vector.broadcast %262 : vector<1x64xf32> to vector<22x64xf32>
    %264 = arith.addf %261, %263 : vector<22x64xf32>
    %cst_93 = arith.constant 5.000000e-01 : f32
    %265 = vector.broadcast %cst_93 : f32 to vector<22x64xf32>
    %266 = arith.mulf %265, %264 : vector<22x64xf32>
    %cst_94 = arith.constant 4.471500e-02 : f32
    %267 = vector.broadcast %cst_94 : f32 to vector<22x64xf32>
    %268 = arith.mulf %267, %264 : vector<22x64xf32>
    %269 = arith.mulf %268, %264 : vector<22x64xf32>
    %270 = arith.mulf %269, %264 : vector<22x64xf32>
    %271 = arith.addf %264, %270 : vector<22x64xf32>
    %cst_95 = arith.constant 0.797884583 : f32
    %272 = vector.broadcast %cst_95 : f32 to vector<22x64xf32>
    %273 = arith.mulf %272, %271 : vector<22x64xf32>
    %274 = math.tanh %273 : vector<22x64xf32>
    %cst_96 = arith.constant 1.000000e+00 : f32
    %275 = vector.broadcast %cst_96 : f32 to vector<22x64xf32>
    %276 = arith.addf %275, %274 : vector<22x64xf32>
    %277 = arith.mulf %266, %276 : vector<22x64xf32>
    %c0_97 = arith.constant 0 : index
    %c0_98 = arith.constant 0 : index
    %278 = vector.load %arg13[%c0_97, %c0_98] : memref<64x32xf32, #tpu.memory_space<vmem>>, vector<64x32xf32>
    %cst_99 = arith.constant dense<0.000000e+00> : vector<22x32xf32>
    %279 = tpu.matmul %277, %278, %cst_99 {dimension_numbers = #tpu.dot_dimension_numbers<[1], [0], [0], [1], [0, 0, 1, 1], [], []>} : vector<22x64xf32>, vector<64x32xf32>, vector<22x32xf32> -> vector<22x32xf32>
    %c0_100 = arith.constant 0 : index
    %c0_101 = arith.constant 0 : index
    %280 = vector.load %arg14[%c0_100, %c0_101] : memref<1x32xf32, #tpu.memory_space<vmem>>, vector<1x32xf32>
    %281 = vector.broadcast %280 : vector<1x32xf32> to vector<22x32xf32>
    %282 = arith.addf %279, %281 : vector<22x32xf32>
    %283 = vector.extract_strided_slice %259 {offsets = [0, 0], sizes = [11, 32], strides = [1, 1]} : vector<22x32xf32> to vector<11x32xf32>
    %284 = vector.extract_strided_slice %282 {offsets = [0, 0], sizes = [11, 32], strides = [1, 1]} : vector<22x32xf32> to vector<11x32xf32>
    %285 = arith.addf %283, %284 : vector<11x32xf32>
    %cst_102 = arith.constant dense<0.000000e+00> : vector<32xf32>
    %286 = vector.multi_reduction <add>, %285, %cst_102 [0] : vector<11x32xf32> to vector<32xf32>
    %287 = vector.shape_cast %286 : vector<32xf32> to vector<1x32xf32>
    %cst_103 = arith.constant 1.100000e+01 : f32
    %288 = vector.broadcast %cst_103 : f32 to vector<1x32xf32>
    %289 = arith.divf %287, %288 : vector<1x32xf32>
    %290 = vector.broadcast %289 : vector<1x32xf32> to vector<11x32xf32>
    %291 = arith.subf %285, %290 : vector<11x32xf32>
    %292 = arith.mulf %291, %291 : vector<11x32xf32>
    %cst_104 = arith.constant dense<0.000000e+00> : vector<32xf32>
    %293 = vector.multi_reduction <add>, %292, %cst_104 [0] : vector<11x32xf32> to vector<32xf32>
    %294 = vector.shape_cast %293 : vector<32xf32> to vector<1x32xf32>
    %cst_105 = arith.constant 1.100000e+01 : f32
    %295 = vector.broadcast %cst_105 : f32 to vector<1x32xf32>
    %296 = arith.divf %294, %295 : vector<1x32xf32>
    %297 = vector.broadcast %289 : vector<1x32xf32> to vector<11x32xf32>
    %298 = arith.subf %285, %297 : vector<11x32xf32>
    %cst_106 = arith.constant 9.99999974E-6 : f32
    %299 = vector.broadcast %cst_106 : f32 to vector<1x32xf32>
    %300 = arith.addf %296, %299 : vector<1x32xf32>
    %301 = math.rsqrt %300 : vector<1x32xf32>
    %302 = vector.broadcast %301 : vector<1x32xf32> to vector<11x32xf32>
    %303 = arith.mulf %298, %302 : vector<11x32xf32>
    %304 = vector.broadcast %21 : vector<1x32xf32> to vector<11x32xf32>
    %305 = arith.mulf %303, %304 : vector<11x32xf32>
    %306 = vector.broadcast %22 : vector<1x32xf32> to vector<11x32xf32>
    %307 = arith.addf %305, %306 : vector<11x32xf32>
    %c0_107 = arith.constant 0 : index
    %c0_108 = arith.constant 0 : index
    %308 = vector.load %arg17[%c0_107, %c0_108] : memref<22x32xf32, #tpu.memory_space<vmem>>, vector<11x32xf32>
    tpu.vector_store %arg17[%c0_107, %c0_108], %307 {strides = array<i32>} : memref<22x32xf32, #tpu.memory_space<vmem>>, vector<11x32xf32>,
    %309 = vector.extract_strided_slice %259 {offsets = [11, 0], sizes = [11, 32], strides = [1, 1]} : vector<22x32xf32> to vector<11x32xf32>
    %310 = vector.extract_strided_slice %282 {offsets = [11, 0], sizes = [11, 32], strides = [1, 1]} : vector<22x32xf32> to vector<11x32xf32>
    %311 = arith.addf %309, %310 : vector<11x32xf32>
    %cst_109 = arith.constant dense<0.000000e+00> : vector<32xf32>
    %312 = vector.multi_reduction <add>, %311, %cst_109 [0] : vector<11x32xf32> to vector<32xf32>
    %313 = vector.shape_cast %312 : vector<32xf32> to vector<1x32xf32>
    %cst_110 = arith.constant 1.100000e+01 : f32
    %314 = vector.broadcast %cst_110 : f32 to vector<1x32xf32>
    %315 = arith.divf %313, %314 : vector<1x32xf32>
    %316 = vector.broadcast %315 : vector<1x32xf32> to vector<11x32xf32>
    %317 = arith.subf %311, %316 : vector<11x32xf32>
    %318 = arith.mulf %317, %317 : vector<11x32xf32>
    %cst_111 = arith.constant dense<0.000000e+00> : vector<32xf32>
    %319 = vector.multi_reduction <add>, %318, %cst_111 [0] : vector<11x32xf32> to vector<32xf32>
    %320 = vector.shape_cast %319 : vector<32xf32> to vector<1x32xf32>
    %cst_112 = arith.constant 1.100000e+01 : f32
    %321 = vector.broadcast %cst_112 : f32 to vector<1x32xf32>
    %322 = arith.divf %320, %321 : vector<1x32xf32>
    %323 = vector.broadcast %315 : vector<1x32xf32> to vector<11x32xf32>
    %324 = arith.subf %311, %323 : vector<11x32xf32>
    %cst_113 = arith.constant 9.99999974E-6 : f32
    %325 = vector.broadcast %cst_113 : f32 to vector<1x32xf32>
    %326 = arith.addf %322, %325 : vector<1x32xf32>
    %327 = math.rsqrt %326 : vector<1x32xf32>
    %328 = vector.broadcast %327 : vector<1x32xf32> to vector<11x32xf32>
    %329 = arith.mulf %324, %328 : vector<11x32xf32>
    %330 = vector.broadcast %21 : vector<1x32xf32> to vector<11x32xf32>
    %331 = arith.mulf %329, %330 : vector<11x32xf32>
    %332 = vector.broadcast %22 : vector<1x32xf32> to vector<11x32xf32>
    %333 = arith.addf %331, %332 : vector<11x32xf32>
    %c11_114 = arith.constant 11 : index
    %c0_115 = arith.constant 0 : index
    %334 = vector.load %arg17[%c11_114, %c0_115] : memref<22x32xf32, #tpu.memory_space<vmem>>, vector<11x32xf32>
    tpu.vector_store %arg17[%c11_114, %c0_115], %333 {strides = array<i32>} : memref<22x32xf32, #tpu.memory_space<vmem>>, vector<11x32xf32>,
    return
  }
  func.func @transform_0(%arg0: i32) -> (i32, i32) {
    %c0_i32 = arith.constant 0 : i32
    %c0_i32_0 = arith.constant 0 : i32
    return %arg0, %c0_i32 : i32, i32
  }
  func.func @transform_1(%arg0: i32) -> (i32, i32) {
    %c0_i32 = arith.constant 0 : i32
    %c0_i32_0 = arith.constant 0 : i32
    return %arg0, %c0_i32 : i32, i32
  }
  func.func @transform_2(%arg0: i32) -> (i32, i32) {
    %c0_i32 = arith.constant 0 : i32
    %c0_i32_0 = arith.constant 0 : i32
    return %arg0, %c0_i32 : i32, i32
  }
  func.func @transform_3(%arg0: i32) -> (i32, i32) {
    %c0_i32 = arith.constant 0 : i32
    %c0_i32_0 = arith.constant 0 : i32
    %c0_i32_1 = arith.constant 0 : i32
    return %c0_i32, %c0_i32_0 : i32, i32
  }
  func.func @transform_4(%arg0: i32) -> (i32, i32) {
    %c0_i32 = arith.constant 0 : i32
    %c0_i32_0 = arith.constant 0 : i32
    %c0_i32_1 = arith.constant 0 : i32
    return %c0_i32, %c0_i32_0 : i32, i32
  }
  func.func @transform_5(%arg0: i32) -> (i32, i32) {
    %c0_i32 = arith.constant 0 : i32
    %c0_i32_0 = arith.constant 0 : i32
    %c0_i32_1 = arith.constant 0 : i32
    return %c0_i32, %c0_i32_0 : i32, i32
  }
  func.func @transform_6(%arg0: i32) -> (i32, i32) {
    %c0_i32 = arith.constant 0 : i32
    %c0_i32_0 = arith.constant 0 : i32
    %c0_i32_1 = arith.constant 0 : i32
    return %c0_i32, %c0_i32_0 : i32, i32
  }
  func.func @transform_7(%arg0: i32) -> (i32, i32) {
    %c0_i32 = arith.constant 0 : i32
    %c0_i32_0 = arith.constant 0 : i32
    %c0_i32_1 = arith.constant 0 : i32
    return %c0_i32, %c0_i32_0 : i32, i32
  }
  func.func @transform_8(%arg0: i32) -> (i32, i32) {
    %c0_i32 = arith.constant 0 : i32
    %c0_i32_0 = arith.constant 0 : i32
    %c0_i32_1 = arith.constant 0 : i32
    return %c0_i32, %c0_i32_0 : i32, i32
  }
  func.func @transform_9(%arg0: i32) -> (i32, i32) {
    %c0_i32 = arith.constant 0 : i32
    %c0_i32_0 = arith.constant 0 : i32
    %c0_i32_1 = arith.constant 0 : i32
    return %c0_i32, %c0_i32_0 : i32, i32
  }
  func.func @transform_10(%arg0: i32) -> (i32, i32) {
    %c0_i32 = arith.constant 0 : i32
    %c0_i32_0 = arith.constant 0 : i32
    %c0_i32_1 = arith.constant 0 : i32
    return %c0_i32, %c0_i32_0 : i32, i32
  }
  func.func @transform_11(%arg0: i32) -> (i32, i32) {
    %c0_i32 = arith.constant 0 : i32
    %c0_i32_0 = arith.constant 0 : i32
    %c0_i32_1 = arith.constant 0 : i32
    return %c0_i32, %c0_i32_0 : i32, i32
  }
  func.func @transform_12(%arg0: i32) -> (i32, i32) {
    %c0_i32 = arith.constant 0 : i32
    %c0_i32_0 = arith.constant 0 : i32
    %c0_i32_1 = arith.constant 0 : i32
    return %c0_i32, %c0_i32_0 : i32, i32
  }
  func.func @transform_13(%arg0: i32) -> (i32, i32) {
    %c0_i32 = arith.constant 0 : i32
    %c0_i32_0 = arith.constant 0 : i32
    %c0_i32_1 = arith.constant 0 : i32
    return %c0_i32, %c0_i32_0 : i32, i32
  }
  func.func @transform_14(%arg0: i32) -> (i32, i32) {
    %c0_i32 = arith.constant 0 : i32
    %c0_i32_0 = arith.constant 0 : i32
    %c0_i32_1 = arith.constant 0 : i32
    return %c0_i32, %c0_i32_0 : i32, i32
  }
  func.func @transform_15(%arg0: i32) -> (i32, i32) {
    %c0_i32 = arith.constant 0 : i32
    %c0_i32_0 = arith.constant 0 : i32
    %c0_i32_1 = arith.constant 0 : i32
    return %c0_i32, %c0_i32_0 : i32, i32
  }
  func.func @transform_16(%arg0: i32) -> (i32, i32) {
    %c0_i32 = arith.constant 0 : i32
    %c0_i32_0 = arith.constant 0 : i32
    return %arg0, %c0_i32 : i32, i32
  }
}

</mosaic_0001>

<llo_original>
// kernel: tpu_custom_call.1
$region0: #{tpu_custom_call.1}
  #allocation0 [shape = 'u32[]', space=smem, size = 0x4, offset = 0x4, fixed_abs, tag = 'smem constant byte address 0x4 - core index']
  #allocation1 [shape = 'u32[144,128]{1,0:T(1,128)}', space=vmem, size = 0x12000, scoped, tag = 'internal scratch']
  #allocation2 [shape = 'f32[22,32]{1,0:T(8,128)}', space=vmem, size = 0x3000, scoped, tag = 'scratch operand']
  %s0 = inlined_call_operand.hbm [shape: f32[22,32], index: 0, kind: input, shape index: {}]
  %s1 = inlined_call_operand.vmem [shape: f32[26,32], index: 1, kind: input, shape index: {}]
  %s2 = inlined_call_operand.vmem [shape: f32[2,32], index: 2, kind: input, shape index: {}]
  %s3 = inlined_call_operand.vmem [shape: f32[32,32], index: 3, kind: input, shape index: {}]
  %s4 = inlined_call_operand.vmem [shape: f32[32,64], index: 4, kind: input, shape index: {}]
  %s5 = inlined_call_operand.hbm [shape: f32[32,32], index: 5, kind: input, shape index: {}]
  %s6 = inlined_call_operand.vmem [shape: f32[1,32], index: 6, kind: input, shape index: {}]
  %s7 = inlined_call_operand.hbm [shape: f32[32,32], index: 7, kind: input, shape index: {}]
  %s8 = inlined_call_operand.vmem [shape: f32[1,32], index: 8, kind: input, shape index: {}]
  %s9 = inlined_call_operand.vmem [shape: f32[1,32], index: 9, kind: input, shape index: {}]
  %s10 = inlined_call_operand.hbm [shape: f32[32,64], index: 10, kind: input, shape index: {}]
  %s11 = inlined_call_operand.vmem [shape: f32[1,64], index: 11, kind: input, shape index: {}]
  %s12 = inlined_call_operand.vmem [shape: f32[64,32], index: 12, kind: input, shape index: {}]
  %s13 = inlined_call_operand.vmem [shape: f32[1,32], index: 13, kind: input, shape index: {}]
  %s14 = inlined_call_operand.vmem [shape: f32[1,32], index: 14, kind: input, shape index: {}]
  %s15 = inlined_call_operand.vmem [shape: f32[1,32], index: 15, kind: input, shape index: {}]
  %s16 = inlined_call_operand.hbm [shape: f32[22,32], index: 16, kind: output, shape index: {}]
  %s17 = sld [smem:[#allocation0]]
  $region90: #{tpu_custom_call.1} parent=0
    _
  %s19 = ssub.s32 1, %s17
  %s20 = scalar_select 0, %s19, %s17
  $region1: #{tpu_custom_call.1} parent=0
    #allocation3 [shape = 'u8[12288]{0}', space=vmem, size = 0x3000, scoped, tag = 'input window, operand 0, single buffered']
    #allocation4 [shape = 's32[1]{0}', space=sflag, size = 0x4, scoped, tag = 'scoped memory for tpu_custom_call.1']
    #allocation5 [shape = 's32[1]{0}', space=sflag, size = 0x4, scoped, tag = 'scoped memory for tpu_custom_call.1']
    #allocation6 [shape = 'u8[16384]{0}', space=vmem, size = 0x4000, scoped, tag = 'input window, operand 5, single buffered']
    #allocation7 [shape = 's32[1]{0}', space=sflag, size = 0x4, scoped, tag = 'scoped memory for tpu_custom_call.1']
    #allocation8 [shape = 'u8[16384]{0}', space=vmem, size = 0x4000, scoped, tag = 'input window, operand 7, single buffered']
    #allocation9 [shape = 'u8[16384]{0}', space=vmem, size = 0x4000, scoped, tag = 'input window, operand 10, single buffered']
    #allocation10 [shape = 's32[1]{0}', space=sflag, size = 0x4, scoped, tag = 'scoped memory for tpu_custom_call.1']
    #allocation11 [shape = 'u8[12288]{0}', space=vmem, size = 0x3000, scoped, tag = 'output window, operand 0, single buffered']
    %21 = vsyncpa [#allocation4], 0
    %22 = vsyncpa [#allocation7], 0
    %23 = vsyncpa [#allocation10], 0
    %24 = vsyncpa [#allocation5], 0
    // Predicated region
    $region2: #{tpu_custom_call.1} parent=1 // pred_check
      _
    $region3: #{tpu_custom_call.1} parent=1 // pred_check_branch
      %26 = sbr.rel (0) target = $region5
    $region4: #{tpu_custom_call.1} parent=1 // pred_region
      %s28 = ssub.s32 384, 384
      %29 = vsyncadd [#allocation4], %s28
      %s30 = sshll.u32 [#allocation3], 4
      %s31 = int_to_ptr.vmem [resolvable:$true] %s30
      %36 = dma.hbm_to_vmem [thread:$0]  %s0, 384, %s31, [#allocation4], 128, 128, 8
    $region5: #{tpu_custom_call.1} parent=1 // pred_fallthru
      _
    // Predicated region
    $region6: #{tpu_custom_call.1} parent=1 // pred_check
      _
    $region7: #{tpu_custom_call.1} parent=1 // pred_check_branch
      %38 = sbr.rel (0) target = $region9
    $region8: #{tpu_custom_call.1} parent=1 // pred_region
      _
    $region9: #{tpu_custom_call.1} parent=1 // pred_fallthru
      _
    // Predicated region
    $region10: #{tpu_custom_call.1} parent=1 // pred_check
      _
    $region11: #{tpu_custom_call.1} parent=1 // pred_check_branch
      %40 = sbr.rel (0) target = $region13
    $region12: #{tpu_custom_call.1} parent=1 // pred_region
      _
    $region13: #{tpu_custom_call.1} parent=1 // pred_fallthru
      _
    // Predicated region
    $region14: #{tpu_custom_call.1} parent=1 // pred_check
      _
    $region15: #{tpu_custom_call.1} parent=1 // pred_check_branch
      %42 = sbr.rel (0) target = $region17
    $region16: #{tpu_custom_call.1} parent=1 // pred_region
      _
    $region17: #{tpu_custom_call.1} parent=1 // pred_fallthru
      _
    // Predicated region
    $region18: #{tpu_custom_call.1} parent=1 // pred_check
      _
    $region19: #{tpu_custom_call.1} parent=1 // pred_check_branch
      %44 = sbr.rel (0) target = $region21
    $region20: #{tpu_custom_call.1} parent=1 // pred_region
      _
    $region21: #{tpu_custom_call.1} parent=1 // pred_fallthru
      _
    // Predicated region
    $region22: #{tpu_custom_call.1} parent=1 // pred_check
      _
    $region23: #{tpu_custom_call.1} parent=1 // pred_check_branch
      %46 = sbr.rel (0) target = $region25
    $region24: #{tpu_custom_call.1} parent=1 // pred_region
      %s48 = ssub.s32 512, 512
      %49 = vsyncadd [#allocation7], %s48
      %s50 = sshll.u32 [#allocation6], 4
      %s51 = int_to_ptr.vmem [resolvable:$true] %s50
      %56 = dma.hbm_to_vmem [thread:$0]  %s5, 512, %s51, [#allocation7], 128, 128, 8
    $region25: #{tpu_custom_call.1} parent=1 // pred_fallthru
      _
    // Predicated region
    $region26: #{tpu_custom_call.1} parent=1 // pred_check
      _
    $region27: #{tpu_custom_call.1} parent=1 // pred_check_branch
      %58 = sbr.rel (0) target = $region29
    $region28: #{tpu_custom_call.1} parent=1 // pred_region
      _
    $region29: #{tpu_custom_call.1} parent=1 // pred_fallthru
      _
    // Predicated region
    $region30: #{tpu_custom_call.1} parent=1 // pred_check
      _
    $region31: #{tpu_custom_call.1} parent=1 // pred_check_branch
      %60 = sbr.rel (0) target = $region33
    $region32: #{tpu_custom_call.1} parent=1 // pred_region
      %s62 = ssub.s32 512, 512
      %63 = vsyncadd [#allocation7], %s62
      %s64 = sshll.u32 [#allocation8], 4
      %s65 = int_to_ptr.vmem [resolvable:$true] %s64
      %70 = dma.hbm_to_vmem [thread:$0]  %s7, 512, %s65, [#allocation7], 128, 128, 8
    $region33: #{tpu_custom_call.1} parent=1 // pred_fallthru
      _
    // Predicated region
    $region34: #{tpu_custom_call.1} parent=1 // pred_check
      _
    $region35: #{tpu_custom_call.1} parent=1 // pred_check_branch
      %72 = sbr.rel (0) target = $region37
    $region36: #{tpu_custom_call.1} parent=1 // pred_region
      _
    $region37: #{tpu_custom_call.1} parent=1 // pred_fallthru
      _
    // Predicated region
    $region38: #{tpu_custom_call.1} parent=1 // pred_check
      _
    $region39: #{tpu_custom_call.1} parent=1 // pred_check_branch
      %74 = sbr.rel (0) target = $region41
    $region40: #{tpu_custom_call.1} parent=1 // pred_region
      _
    $region41: #{tpu_custom_call.1} parent=1 // pred_fallthru
      _
    // Predicated region
    $region42: #{tpu_custom_call.1} parent=1 // pred_check
      _
    $region43: #{tpu_custom_call.1} parent=1 // pred_check_branch
      %76 = sbr.rel (0) target = $region45
    $region44: #{tpu_custom_call.1} parent=1 // pred_region
      %s78 = ssub.s32 512, 512
      %79 = vsyncadd [#allocation10], %s78
      %s80 = sshll.u32 [#allocation9], 4
      %s81 = int_to_ptr.vmem [resolvable:$true] %s80
      %86 = dma.hbm_to_vmem [thread:$0]  %s10, 512, %s81, [#allocation10], 128, 128, 8
    $region45: #{tpu_custom_call.1} parent=1 // pred_fallthru
      _
    // Predicated region
    $region46: #{tpu_custom_call.1} parent=1 // pred_check
      _
    $region47: #{tpu_custom_call.1} parent=1 // pred_check_branch
      %88 = sbr.rel (0) target = $region49
    $region48: #{tpu_custom_call.1} parent=1 // pred_region
      _
    $region49: #{tpu_custom_call.1} parent=1 // pred_fallthru
      _
    // Predicated region
    $region50: #{tpu_custom_call.1} parent=1 // pred_check
      _
    $region51: #{tpu_custom_call.1} parent=1 // pred_check_branch
      %90 = sbr.rel (0) target = $region53
    $region52: #{tpu_custom_call.1} parent=1 // pred_region
      _
    $region53: #{tpu_custom_call.1} parent=1 // pred_fallthru
      _
    // Predicated region
    $region54: #{tpu_custom_call.1} parent=1 // pred_check
      _
    $region55: #{tpu_custom_call.1} parent=1 // pred_check_branch
      %92 = sbr.rel (0) target = $region57
    $region56: #{tpu_custom_call.1} parent=1 // pred_region
      _
    $region57: #{tpu_custom_call.1} parent=1 // pred_fallthru
      _
    // Predicated region
    $region58: #{tpu_custom_call.1} parent=1 // pred_check
      _
    $region59: #{tpu_custom_call.1} parent=1 // pred_check_branch
      %94 = sbr.rel (0) target = $region61
    $region60: #{tpu_custom_call.1} parent=1 // pred_region
      _
    $region61: #{tpu_custom_call.1} parent=1 // pred_fallthru
      _
    // Predicated region
    $region62: #{tpu_custom_call.1} parent=1 // pred_check
      _
    $region63: #{tpu_custom_call.1} parent=1 // pred_check_branch
      %96 = sbr.rel (0) target = $region65
    $region64: #{tpu_custom_call.1} parent=1 // pred_region
      _
    $region65: #{tpu_custom_call.1} parent=1 // pred_fallthru
      _
    // Predicated region
    $region66: #{tpu_custom_call.1} parent=1 // pred_check
      _
    $region67: #{tpu_custom_call.1} parent=1 // pred_check_branch
      %98 = sbr.rel (0) target = $region69
    $region68: #{tpu_custom_call.1} parent=1 // pred_region
      %99 = dma.done [#allocation4], 384
    $region69: #{tpu_custom_call.1} parent=1 // pred_fallthru
      _
    // Predicated region
    $region70: #{tpu_custom_call.1} parent=1 // pred_check
      _
    $region71: #{tpu_custom_call.1} parent=1 // pred_check_branch
      %101 = sbr.rel (0) target = $region73
    $region72: #{tpu_custom_call.1} parent=1 // pred_region
      %102 = dma.done [#allocation7], 512
    $region73: #{tpu_custom_call.1} parent=1 // pred_fallthru
      _
    // Predicated region
    $region74: #{tpu_custom_call.1} parent=1 // pred_check
      _
    $region75: #{tpu_custom_call.1} parent=1 // pred_check_branch
      %104 = sbr.rel (0) target = $region77
    $region76: #{tpu_custom_call.1} parent=1 // pred_region
      %105 = dma.done [#allocation7], 512
    $region77: #{tpu_custom_call.1} parent=1 // pred_fallthru
      _
    // Predicated region
    $region78: #{tpu_custom_call.1} parent=1 // pred_check
      _
    $region79: #{tpu_custom_call.1} parent=1 // pred_check_branch
      %107 = sbr.rel (0) target = $region81
    $region80: #{tpu_custom_call.1} parent=1 // pred_region
      %108 = dma.done [#allocation10], 512
    $region81: #{tpu_custom_call.1} parent=1 // pred_fallthru
      _
    %v109 = vld [vmem:[#allocation3] sm:$0xff]
    %v110 = vld [vmem:[#allocation3 + $0x8] sm:$0xff]
    %v111 = vld [vmem:[#allocation3 + $0x10] sm:$0x3f]
    %v112 = vld [vmem:[%s1] sm:$0xff]
    %v113 = vld [vmem:[%s1 + $0x8] sm:$0xff]
    %v114 = vld [vmem:[%s1 + $0x10] sm:$0xff]
    %v115 = vld [vmem:[%s1 + $0x18] sm:$0x3]
    %v116 = vld [vmem:[%s2] sm:$0x3]
    %v117 = vld [vmem:[%s3] sm:$0xff]
    %v118 = vld [vmem:[%s3 + $0x8] sm:$0xff]
    %v119 = vld [vmem:[%s3 + $0x10] sm:$0xff]
    %v120 = vld [vmem:[%s3 + $0x18] sm:$0xff]
    %vm121 = vcmask 261120
    %v123 = vsel %vm121, %v109, 0
    %v126 = vsel %vm121, %v110, 0
    %v129 = vsel %vm121, %v111, 0
    %131 = vmatprep.subr.mxu0 0.0
    %132 = vmatpush1.msra.mxu0 0.0
    %133 = vmatprep.subr.mxu0 0.0
    %134 = vmatpush1.msra.mxu0 0.0
    %135 = vmatprep.subr.mxu0 0.0
    %136 = vmatpush1.msra.mxu0 0.0
    %137 = vmatprep.subr.mxu0 0.0
    %138 = vmatpush1.msra.mxu0 0.0
    %139 = vmatprep.subr.mxu0 0.0
    %140 = vmatpush1.msra.mxu0 0.0
    %141 = vmatprep.subr.mxu0 0.0
    %142 = vmatpush1.msra.mxu0 0.0
    %143 = vmatprep.subr.mxu0 0.0
    %144 = vmatpush1.msra.mxu0 0.0
    %145 = vmatprep.subr.mxu0 0.0
    %146 = vmatpush1.msra.mxu0 0.0
    %147 = vmatprep.subr.mxu0 0.0
    %148 = vmatpush1.msra.mxu0 0.0
    %149 = vmatprep.subr.mxu0 0.0
    %150 = vmatpush1.msra.mxu0 0.0
    %151 = vmatprep.subr.mxu0 0.0
    %152 = vmatpush1.msra.mxu0 0.0
    %153 = vmatprep.subr.mxu0 0.0
    %154 = vmatpush1.msra.mxu0 0.0
    %155 = vmatprep.subr.mxu0 0.0
    %156 = vmatpush1.msra.mxu0 %v120
    %157 = vmatprep.subr.mxu0 0.0
    %158 = vmatpush1.msra.mxu0 %v119
    %159 = vmatprep.subr.mxu0 0.0
    %160 = vmatpush1.msra.mxu0 %v118
    %161 = vmatprep.subr.mxu0 0.0
    %162 = vmatpush1.msra.mxu0 %v117
    %163 = vmatprep.subr.mxu0 0.0
    %164 = vmatpush2.msra.mxu0 0.0
    %165 = vmatprep.subr.mxu0 0.0
    %166 = vmatpush2.msra.mxu0 0.0
    %167 = vmatprep.subr.mxu0 0.0
    %168 = vmatpush2.msra.mxu0 0.0
    %169 = vmatprep.subr.mxu0 0.0
    %170 = vmatpush2.msra.mxu0 0.0
    %171 = vmatprep.subr.mxu0 0.0
    %172 = vmatpush2.msra.mxu0 0.0
    %173 = vmatprep.subr.mxu0 0.0
    %174 = vmatpush2.msra.mxu0 0.0
    %175 = vmatprep.subr.mxu0 0.0
    %176 = vmatpush2.msra.mxu0 0.0
    %177 = vmatprep.subr.mxu0 0.0
    %178 = vmatpush2.msra.mxu0 0.0
    %179 = vmatprep.subr.mxu0 0.0
    %180 = vmatpush2.msra.mxu0 0.0
    %181 = vmatprep.subr.mxu0 0.0
    %182 = vmatpush2.msra.mxu0 0.0
    %183 = vmatprep.subr.mxu0 0.0
    %184 = vmatpush2.msra.mxu0 0.0
    %185 = vmatprep.subr.mxu0 0.0
    %186 = vmatpush2.msra.mxu0 0.0
    %187 = vmatprep.subr.mxu0 0.0
    %188 = vmatpush2.msra.mxu0 0.0
    %189 = vmatprep.subr.mxu0 0.0
    %190 = vmatpush2.msra.mxu0 0.0
    %191 = vmatprep.subr.mxu0 0.0
    %192 = vmatpush2.msra.mxu0 0.0
    %193 = vmatprep.subr.mxu0 0.0
    %194 = vmatpush2.msra.mxu0 0.0
    %195 = vmatprep.mubr.f32.mxu0 0.0
    %196 = vmatmul.mubr.f32.gmra.mxu0 %v123
    %v197 = vpop.f32.mrf.mxu0
    %v198 = vadd.f32 0.0, %v197
    %v199 = vpop.f32.mrf.mxu0
    %200 = vmatprep.mubr.f32.mxu0 0.0
    %201 = vmatmul.mubr.f32.gmra.mxu0 %v126
    %v202 = vpop.f32.mrf.mxu0
    %v203 = vadd.f32 0.0, %v202
    %v204 = vpop.f32.mrf.mxu0
    %205 = vmatprep.mubr.f32.mxu0 0.0
    %206 = vmatmul.mubr.f32.gmra.mxu0 %v129
    %v207 = vpop.f32.mrf.mxu0
    %v208 = vadd.f32 0.0, %v207
    %v209 = vpop.f32.mrf.mxu0
    %210 = vdwg.mxu0
    %v211 = vld [vmem:[%s4] sm:$0xff]
    %v212 = vld [vmem:[%s4 + $0x8] sm:$0xff]
    %v213 = vld [vmem:[%s4 + $0x10] sm:$0xff]
    %v214 = vld [vmem:[%s4 + $0x18] sm:$0xff]
    %v216 = vsel %vm121, %v112, 0
    %v219 = vsel %vm121, %v113, 0
    %v222 = vsel %vm121, %v114, 0
    %v225 = vsel %vm121, %v115, 0
    %227 = vmatprep.subr.mxu0 0.0
    %228 = vmatpush1.msra.mxu0 0.0
    %229 = vmatprep.subr.mxu0 0.0
    %230 = vmatpush1.msra.mxu0 0.0
    %231 = vmatprep.subr.mxu0 0.0
    %232 = vmatpush1.msra.mxu0 0.0
    %233 = vmatprep.subr.mxu0 0.0
    %234 = vmatpush1.msra.mxu0 0.0
    %235 = vmatprep.subr.mxu0 0.0
    %236 = vmatpush1.msra.mxu0 0.0
    %237 = vmatprep.subr.mxu0 0.0
    %238 = vmatpush1.msra.mxu0 0.0
    %239 = vmatprep.subr.mxu0 0.0
    %240 = vmatpush1.msra.mxu0 0.0
    %241 = vmatprep.subr.mxu0 0.0
    %242 = vmatpush1.msra.mxu0 0.0
    %243 = vmatprep.subr.mxu0 0.0
    %244 = vmatpush1.msra.mxu0 0.0
    %245 = vmatprep.subr.mxu0 0.0
    %246 = vmatpush1.msra.mxu0 0.0
    %247 = vmatprep.subr.mxu0 0.0
    %248 = vmatpush1.msra.mxu0 0.0
    %249 = vmatprep.subr.mxu0 0.0
    %250 = vmatpush1.msra.mxu0 0.0
    %251 = vmatprep.subr.mxu0 0.0
    %252 = vmatpush1.msra.mxu0 %v214
    %253 = vmatprep.subr.mxu0 0.0
    %254 = vmatpush1.msra.mxu0 %v213
    %255 = vmatprep.subr.mxu0 0.0
    %256 = vmatpush1.msra.mxu0 %v212
    %257 = vmatprep.subr.mxu0 0.0
    %258 = vmatpush1.msra.mxu0 %v211
    %259 = vmatprep.subr.mxu0 0.0
    %260 = vmatpush2.msra.mxu0 0.0
    %261 = vmatprep.subr.mxu0 0.0
    %262 = vmatpush2.msra.mxu0 0.0
    %263 = vmatprep.subr.mxu0 0.0
    %264 = vmatpush2.msra.mxu0 0.0
    %265 = vmatprep.subr.mxu0 0.0
    %266 = vmatpush2.msra.mxu0 0.0
    %267 = vmatprep.subr.mxu0 0.0
    %268 = vmatpush2.msra.mxu0 0.0
    %269 = vmatprep.subr.mxu0 0.0
    %270 = vmatpush2.msra.mxu0 0.0
    %271 = vmatprep.subr.mxu0 0.0
    %272 = vmatpush2.msra.mxu0 0.0
    %273 = vmatprep.subr.mxu0 0.0
    %274 = vmatpush2.msra.mxu0 0.0
    %275 = vmatprep.subr.mxu0 0.0
    %276 = vmatpush2.msra.mxu0 0.0
    %277 = vmatprep.subr.mxu0 0.0
    %278 = vmatpush2.msra.mxu0 0.0
    %279 = vmatprep.subr.mxu0 0.0
    %280 = vmatpush2.msra.mxu0 0.0
    %281 = vmatprep.subr.mxu0 0.0
    %282 = vmatpush2.msra.mxu0 0.0
    %283 = vmatprep.subr.mxu0 0.0
    %284 = vmatpush2.msra.mxu0 0.0
    %285 = vmatprep.subr.mxu0 0.0
    %286 = vmatpush2.msra.mxu0 0.0
    %287 = vmatprep.subr.mxu0 0.0
    %288 = vmatpush2.msra.mxu0 0.0
    %289 = vmatprep.subr.mxu0 0.0
    %290 = vmatpush2.msra.mxu0 0.0
    %291 = vmatprep.mubr.f32.mxu0 0.0
    %292 = vmatmul.mubr.f32.gmra.mxu0 %v216
    %v293 = vpop.f32.mrf.mxu0
    %v294 = vadd.f32 0.0, %v293
    %v295 = vpop.f32.mrf.mxu0
    %296 = vmatprep.mubr.f32.mxu0 0.0
    %297 = vmatmul.mubr.f32.gmra.mxu0 %v219
    %v298 = vpop.f32.mrf.mxu0
    %v299 = vadd.f32 0.0, %v298
    %v300 = vpop.f32.mrf.mxu0
    %301 = vmatprep.mubr.f32.mxu0 0.0
    %302 = vmatmul.mubr.f32.gmra.mxu0 %v222
    %v303 = vpop.f32.mrf.mxu0
    %v304 = vadd.f32 0.0, %v303
    %v305 = vpop.f32.mrf.mxu0
    %306 = vmatprep.mubr.f32.mxu0 0.0
    %307 = vmatmul.mubr.f32.gmra.mxu0 %v225
    %v308 = vpop.f32.mrf.mxu0
    %v309 = vadd.f32 0.0, %v308
    %v310 = vpop.f32.mrf.mxu0
    %311 = vdwg.mxu0
    %v312 = vld [vmem:[#allocation8] sm:$0xff]
    %v313 = vld [vmem:[#allocation8 + $0x8] sm:$0xff]
    %v314 = vld [vmem:[#allocation8 + $0x10] sm:$0xff]
    %v315 = vld [vmem:[#allocation8 + $0x18] sm:$0xff]
    %v317 = vsel %vm121, %v116, 0
    %319 = vmatprep.subr.mxu0 0.0
    %320 = vmatpush1.msra.mxu0 0.0
    %321 = vmatprep.subr.mxu0 0.0
    %322 = vmatpush1.msra.mxu0 0.0
    %323 = vmatprep.subr.mxu0 0.0
    %324 = vmatpush1.msra.mxu0 0.0
    %325 = vmatprep.subr.mxu0 0.0
    %326 = vmatpush1.msra.mxu0 0.0
    %327 = vmatprep.subr.mxu0 0.0
    %328 = vmatpush1.msra.mxu0 0.0
    %329 = vmatprep.subr.mxu0 0.0
    %330 = vmatpush1.msra.mxu0 0.0
    %331 = vmatprep.subr.mxu0 0.0
    %332 = vmatpush1.msra.mxu0 0.0
    %333 = vmatprep.subr.mxu0 0.0
    %334 = vmatpush1.msra.mxu0 0.0
    %335 = vmatprep.subr.mxu0 0.0
    %336 = vmatpush1.msra.mxu0 0.0
    %337 = vmatprep.subr.mxu0 0.0
    %338 = vmatpush1.msra.mxu0 0.0
    %339 = vmatprep.subr.mxu0 0.0
    %340 = vmatpush1.msra.mxu0 0.0
    %341 = vmatprep.subr.mxu0 0.0
    %342 = vmatpush1.msra.mxu0 0.0
    %343 = vmatprep.subr.mxu0 0.0
    %344 = vmatpush1.msra.mxu0 %v315
    %345 = vmatprep.subr.mxu0 0.0
    %346 = vmatpush1.msra.mxu0 %v314
    %347 = vmatprep.subr.mxu0 0.0
    %348 = vmatpush1.msra.mxu0 %v313
    %349 = vmatprep.subr.mxu0 0.0
    %350 = vmatpush1.msra.mxu0 %v312
    %351 = vmatprep.subr.mxu0 0.0
    %352 = vmatpush2.msra.mxu0 0.0
    %353 = vmatprep.subr.mxu0 0.0
    %354 = vmatpush2.msra.mxu0 0.0
    %355 = vmatprep.subr.mxu0 0.0
    %356 = vmatpush2.msra.mxu0 0.0
    %357 = vmatprep.subr.mxu0 0.0
    %358 = vmatpush2.msra.mxu0 0.0
    %359 = vmatprep.subr.mxu0 0.0
    %360 = vmatpush2.msra.mxu0 0.0
    %361 = vmatprep.subr.mxu0 0.0
    %362 = vmatpush2.msra.mxu0 0.0
    %363 = vmatprep.subr.mxu0 0.0
    %364 = vmatpush2.msra.mxu0 0.0
    %365 = vmatprep.subr.mxu0 0.0
    %366 = vmatpush2.msra.mxu0 0.0
    %367 = vmatprep.subr.mxu0 0.0
    %368 = vmatpush2.msra.mxu0 0.0
    %369 = vmatprep.subr.mxu0 0.0
    %370 = vmatpush2.msra.mxu0 0.0
    %371 = vmatprep.subr.mxu0 0.0
    %372 = vmatpush2.msra.mxu0 0.0
    %373 = vmatprep.subr.mxu0 0.0
    %374 = vmatpush2.msra.mxu0 0.0
    %375 = vmatprep.subr.mxu0 0.0
    %376 = vmatpush2.msra.mxu0 0.0
    %377 = vmatprep.subr.mxu0 0.0
    %378 = vmatpush2.msra.mxu0 0.0
    %379 = vmatprep.subr.mxu0 0.0
    %380 = vmatpush2.msra.mxu0 0.0
    %381 = vmatprep.subr.mxu0 0.0
    %382 = vmatpush2.msra.mxu0 0.0
    %383 = vmatprep.mubr.f32.mxu0 0.0
    %384 = vmatmul.mubr.f32.gmra.mxu0 %v317
    %v385 = vpop.f32.mrf.mxu0
    %v386 = vadd.f32 0.0, %v385
    %v387 = vpop.f32.mrf.mxu0
    %388 = vdwg.mxu0
    %v389 = vlaneseq
    %v390 = vshrl.u32 %v389, 7
    %v391 = vadd.s32 %v390, 8
    %vm392 = vcmp.ge.s32.totalorder %v390, 3
    %vm393 = vcmp.ge.s32.totalorder %v391, 3
    %vm394 = vcmp.lt.s32.totalorder %v390, 10
    %vm395 = vcmp.lt.s32.totalorder %v391, 10
    %vm396 = vmand %vm392, %vm394
    %vm397 = vmand %vm393, %vm395
    %v398 = vsel %vm396, 1, 0
    %v399 = vsel %vm397, 1, 0
    %v400 = vcvt.s32.f32 %v398
    %v401 = vcvt.s32.f32 %v399
    %v402 = vld [vmem:[#allocation6] sm:$0xff]
    %v403 = vld [vmem:[#allocation6 + $0x8] sm:$0xff]
    %v404 = vld [vmem:[#allocation6 + $0x10] sm:$0xff]
    %v405 = vld [vmem:[#allocation6 + $0x18] sm:$0xff]
    %v406 = vld [vmem:[%s6] sm:$0x1]
    %v407 = vld [vmem:[%s8] sm:$0x1]
    %v408 = vld [vmem:[%s9] sm:$0x1]
    %v409 = vld [vmem:[%s14] sm:$0x1]
    %v410 = vld [vmem:[%s15] sm:$0x1]
    %v411 = vlaneseq
    %v412 = vshrl.u32 %v411, 7
    %v413 = vsub.s32 0, %v412
    %v414 = vrot.slane %v386, %v413
    %v415 = vmul.f32 %v400, %v414
    %v416 = vmul.f32 %v401, %v414
    %v418 = vlaneseq
    %v419 = vshrl.u32 %v418, 7
    %v420 = vsub.s32 0, %v419
    %v421 = vrot.slane %v406, %v420
    %v423 = vadd.f32 %v421, %v415
    %v424 = vadd.f32 %v421, %v416
    %vm425 = vcmask 64512
    %v427 = vsel %vm425, %v198, 0
    %v430 = vsel %vm425, %v203, 0
    %v433 = vsel %vm425, %v294, 0
    %v436 = vsel %vm425, %v299, 0
    %438 = vmatprep.subr.mxu0 0.0
    %439 = vmatpush1.xpose.msra.mxu0 0.0
    %440 = vmatprep.subr.mxu0 0.0
    %441 = vmatpush1.xpose.msra.mxu0 0.0
    %442 = vmatprep.subr.mxu0 0.0
    %443 = vmatpush1.xpose.msra.mxu0 0.0
    %444 = vmatprep.subr.mxu0 0.0
    %445 = vmatpush1.xpose.msra.mxu0 0.0
    %446 = vmatprep.subr.mxu0 0.0
    %447 = vmatpush1.xpose.msra.mxu0 0.0
    %448 = vmatprep.subr.mxu0 0.0
    %449 = vmatpush1.xpose.msra.mxu0 0.0
    %450 = vmatprep.subr.mxu0 0.0
    %451 = vmatpush1.xpose.msra.mxu0 0.0
    %452 = vmatprep.subr.mxu0 0.0
    %453 = vmatpush1.xpose.msra.mxu0 0.0
    %454 = vmatprep.subr.mxu0 0.0
    %455 = vmatpush1.xpose.msra.mxu0 0.0
    %456 = vmatprep.subr.mxu0 0.0
    %457 = vmatpush1.xpose.msra.mxu0 0.0
    %458 = vmatprep.subr.mxu0 0.0
    %459 = vmatpush1.xpose.msra.mxu0 0.0
    %460 = vmatprep.subr.mxu0 0.0
    %461 = vmatpush1.xpose.msra.mxu0 0.0
    %462 = vmatprep.subr.mxu0 0.0
    %463 = vmatpush1.xpose.msra.mxu0 0.0
    %464 = vmatprep.subr.mxu0 0.0
    %465 = vmatpush1.xpose.msra.mxu0 0.0
    %466 = vmatprep.subr.mxu0 0.0
    %467 = vmatpush1.xpose.msra.mxu0 %v436
    %468 = vmatprep.subr.mxu0 0.0
    %469 = vmatpush1.xpose.msra.mxu0 %v433
    %470 = vmatprep.subr.mxu0 0.0
    %471 = vmatpush2.xpose.msra.mxu0 0.0
    %472 = vmatprep.subr.mxu0 0.0
    %473 = vmatpush2.xpose.msra.mxu0 0.0
    %474 = vmatprep.subr.mxu0 0.0
    %475 = vmatpush2.xpose.msra.mxu0 0.0
    %476 = vmatprep.subr.mxu0 0.0
    %477 = vmatpush2.xpose.msra.mxu0 0.0
    %478 = vmatprep.subr.mxu0 0.0
    %479 = vmatpush2.xpose.msra.mxu0 0.0
    %480 = vmatprep.subr.mxu0 0.0
    %481 = vmatpush2.xpose.msra.mxu0 0.0
    %482 = vmatprep.subr.mxu0 0.0
    %483 = vmatpush2.xpose.msra.mxu0 0.0
    %484 = vmatprep.subr.mxu0 0.0
    %485 = vmatpush2.xpose.msra.mxu0 0.0
    %486 = vmatprep.subr.mxu0 0.0
    %487 = vmatpush2.xpose.msra.mxu0 0.0
    %488 = vmatprep.subr.mxu0 0.0
    %489 = vmatpush2.xpose.msra.mxu0 0.0
    %490 = vmatprep.subr.mxu0 0.0
    %491 = vmatpush2.xpose.msra.mxu0 0.0
    %492 = vmatprep.subr.mxu0 0.0
    %493 = vmatpush2.xpose.msra.mxu0 0.0
    %494 = vmatprep.subr.mxu0 0.0
    %495 = vmatpush2.xpose.msra.mxu0 0.0
    %496 = vmatprep.subr.mxu0 0.0
    %497 = vmatpush2.xpose.msra.mxu0 0.0
    %498 = vmatprep.subr.mxu0 0.0
    %499 = vmatpush2.xpose.msra.mxu0 0.0
    %500 = vmatprep.subr.mxu0 0.0
    %501 = vmatpush2.xpose.msra.mxu0 0.0
    %502 = vmatprep.mubr.f32.mxu0 0.0
    %503 = vmatmul.mubr.f32.gmra.mxu0 %v427
    %v504 = vpop.f32.mrf.mxu0
    %v505 = vadd.f32 0.0, %v504
    %v506 = vpop.f32.mrf.mxu0
    %507 = vmatprep.mubr.f32.mxu0 0.0
    %508 = vmatmul.mubr.f32.gmra.mxu0 %v430
    %v509 = vpop.f32.mrf.mxu0
    %v510 = vadd.f32 0.0, %v509
    %v511 = vpop.f32.mrf.mxu0
    %512 = vdwg.mxu0
    %v513 = vmul.f32 %v505, 0.35355338
    %v514 = vmul.f32 %v510, 0.35355338
    %vm515 = vcmask 105472
    %v516 = vsel %vm515, %v513, -inf
    %517 = vmax.xlane.f32.xlu0 %v516
    %v518 = vpop.xlane.xlu0 %517
    %vm519 = vcmask 100352
    %v520 = vsel %vm519, %v514, -inf
    %521 = vmax.xlane.f32.xlu0 %v520
    %v522 = vpop.xlane.xlu0 %521
    %v523 = vsub.f32 %v513, %v518
    %v524 = vsub.f32 %v514, %v522
    %v525 = vmul.f32 %v523, 1.442695
    %v526 = vpow.pop %v525
    %v527 = vmul.f32 %v524, 1.442695
    %v528 = vpow.pop %v527
    %v529 = vsel %vm515, %v526, 0.0
    %530 = vadd.xlane.f32.xlu0 %v529
    %v531 = vpop.xlane.xlu0 %530
    %v532 = vsel %vm519, %v528, 0.0
    %533 = vadd.xlane.f32.xlu0 %v532
    %v534 = vpop.xlane.xlu0 %533
    %v535 = vrcp.pop %v531
    %v536 = vrcp.pop %v534
    %v537 = vmul.f32 %v526, %v535
    %v538 = vmul.f32 %v528, %v536
    %539 = vrot.lane.b32.xlu0 %v294, 96
    %v540 = vpop.permute.xlu0 %539
    %541 = vrot.lane.b32.xlu0 %v299, 96
    %v542 = vpop.permute.xlu0 %541
    %v545 = vsel %vm515, %v537, 0
    %v548 = vsel %vm515, %v538, 0
    %vm550 = vcmask 1044480
    %v551 = vsel %vm550, %v542, 0
    %553 = vmatprep.subr.mxu0 0.0
    %554 = vmatpush1.msra.mxu0 0.0
    %555 = vmatprep.subr.mxu0 0.0
    %556 = vmatpush1.msra.mxu0 0.0
    %557 = vmatprep.subr.mxu0 0.0
    %558 = vmatpush1.msra.mxu0 0.0
    %559 = vmatprep.subr.mxu0 0.0
    %560 = vmatpush1.msra.mxu0 0.0
    %561 = vmatprep.subr.mxu0 0.0
    %562 = vmatpush1.msra.mxu0 0.0
    %563 = vmatprep.subr.mxu0 0.0
    %564 = vmatpush1.msra.mxu0 0.0
    %565 = vmatprep.subr.mxu0 0.0
    %566 = vmatpush1.msra.mxu0 0.0
    %567 = vmatprep.subr.mxu0 0.0
    %568 = vmatpush1.msra.mxu0 0.0
    %569 = vmatprep.subr.mxu0 0.0
    %570 = vmatpush1.msra.mxu0 0.0
    %571 = vmatprep.subr.mxu0 0.0
    %572 = vmatpush1.msra.mxu0 0.0
    %573 = vmatprep.subr.mxu0 0.0
    %574 = vmatpush1.msra.mxu0 0.0
    %575 = vmatprep.subr.mxu0 0.0
    %576 = vmatpush1.msra.mxu0 0.0
    %577 = vmatprep.subr.mxu0 0.0
    %578 = vmatpush1.msra.mxu0 0.0
    %579 = vmatprep.subr.mxu0 0.0
    %580 = vmatpush1.msra.mxu0 0.0
    %581 = vmatprep.subr.mxu0 0.0
    %582 = vmatpush1.msra.mxu0 %v551
    %583 = vmatprep.subr.mxu0 0.0
    %584 = vmatpush1.msra.mxu0 %v540
    %585 = vmatprep.subr.mxu0 0.0
    %586 = vmatpush2.msra.mxu0 0.0
    %587 = vmatprep.subr.mxu0 0.0
    %588 = vmatpush2.msra.mxu0 0.0
    %589 = vmatprep.subr.mxu0 0.0
    %590 = vmatpush2.msra.mxu0 0.0
    %591 = vmatprep.subr.mxu0 0.0
    %592 = vmatpush2.msra.mxu0 0.0
    %593 = vmatprep.subr.mxu0 0.0
    %594 = vmatpush2.msra.mxu0 0.0
    %595 = vmatprep.subr.mxu0 0.0
    %596 = vmatpush2.msra.mxu0 0.0
    %597 = vmatprep.subr.mxu0 0.0
    %598 = vmatpush2.msra.mxu0 0.0
    %599 = vmatprep.subr.mxu0 0.0
    %600 = vmatpush2.msra.mxu0 0.0
    %601 = vmatprep.subr.mxu0 0.0
    %602 = vmatpush2.msra.mxu0 0.0
    %603 = vmatprep.subr.mxu0 0.0
    %604 = vmatpush2.msra.mxu0 0.0
    %605 = vmatprep.subr.mxu0 0.0
    %606 = vmatpush2.msra.mxu0 0.0
    %607 = vmatprep.subr.mxu0 0.0
    %608 = vmatpush2.msra.mxu0 0.0
    %609 = vmatprep.subr.mxu0 0.0
    %610 = vmatpush2.msra.mxu0 0.0
    %611 = vmatprep.subr.mxu0 0.0
    %612 = vmatpush2.msra.mxu0 0.0
    %613 = vmatprep.subr.mxu0 0.0
    %614 = vmatpush2.msra.mxu0 0.0
    %615 = vmatprep.subr.mxu0 0.0
    %616 = vmatpush2.msra.mxu0 0.0
    %617 = vmatprep.mubr.f32.mxu0 0.0
    %618 = vmatmul.mubr.f32.gmra.mxu0 %v545
    %v619 = vpop.f32.mrf.mxu0
    %v620 = vadd.f32 0.0, %v619
    %v621 = vpop.f32.mrf.mxu0
    %622 = vmatprep.mubr.f32.mxu0 0.0
    %623 = vmatmul.mubr.f32.gmra.mxu0 %v548
    %v624 = vpop.f32.mrf.mxu0
    %v625 = vadd.f32 0.0, %v624
    %v626 = vpop.f32.mrf.mxu0
    %627 = vdwg.mxu0
    %v629 = vsel %vm425, %v620, 0
    %v632 = vsel %vm425, %v625, 0
    %634 = vmatprep.subr.mxu0 0.0
    %635 = vmatpush1.msra.mxu0 0.0
    %636 = vmatprep.subr.mxu0 0.0
    %637 = vmatpush1.msra.mxu0 0.0
    %638 = vmatprep.subr.mxu0 0.0
    %639 = vmatpush1.msra.mxu0 0.0
    %640 = vmatprep.subr.mxu0 0.0
    %641 = vmatpush1.msra.mxu0 0.0
    %642 = vmatprep.subr.mxu0 0.0
    %643 = vmatpush1.msra.mxu0 0.0
    %644 = vmatprep.subr.mxu0 0.0
    %645 = vmatpush1.msra.mxu0 0.0
    %646 = vmatprep.subr.mxu0 0.0
    %647 = vmatpush1.msra.mxu0 0.0
    %648 = vmatprep.subr.mxu0 0.0
    %649 = vmatpush1.msra.mxu0 0.0
    %650 = vmatprep.subr.mxu0 0.0
    %651 = vmatpush1.msra.mxu0 0.0
    %652 = vmatprep.subr.mxu0 0.0
    %653 = vmatpush1.msra.mxu0 0.0
    %654 = vmatprep.subr.mxu0 0.0
    %655 = vmatpush1.msra.mxu0 0.0
    %656 = vmatprep.subr.mxu0 0.0
    %657 = vmatpush1.msra.mxu0 0.0
    %658 = vmatprep.subr.mxu0 0.0
    %659 = vmatpush1.msra.mxu0 0.0
    %660 = vmatprep.subr.mxu0 0.0
    %661 = vmatpush1.msra.mxu0 0.0
    %662 = vmatprep.subr.mxu0 0.0
    %663 = vmatpush1.msra.mxu0 0.0
    %664 = vmatprep.subr.mxu0 0.0
    %665 = vmatpush1.msra.mxu0 %v402
    %666 = vmatprep.subr.mxu0 0.0
    %667 = vmatpush2.msra.mxu0 0.0
    %668 = vmatprep.subr.mxu0 0.0
    %669 = vmatpush2.msra.mxu0 0.0
    %670 = vmatprep.subr.mxu0 0.0
    %671 = vmatpush2.msra.mxu0 0.0
    %672 = vmatprep.subr.mxu0 0.0
    %673 = vmatpush2.msra.mxu0 0.0
    %674 = vmatprep.subr.mxu0 0.0
    %675 = vmatpush2.msra.mxu0 0.0
    %676 = vmatprep.subr.mxu0 0.0
    %677 = vmatpush2.msra.mxu0 0.0
    %678 = vmatprep.subr.mxu0 0.0
    %679 = vmatpush2.msra.mxu0 0.0
    %680 = vmatprep.subr.mxu0 0.0
    %681 = vmatpush2.msra.mxu0 0.0
    %682 = vmatprep.subr.mxu0 0.0
    %683 = vmatpush2.msra.mxu0 0.0
    %684 = vmatprep.subr.mxu0 0.0
    %685 = vmatpush2.msra.mxu0 0.0
    %686 = vmatprep.subr.mxu0 0.0
    %687 = vmatpush2.msra.mxu0 0.0
    %688 = vmatprep.subr.mxu0 0.0
    %689 = vmatpush2.msra.mxu0 0.0
    %690 = vmatprep.subr.mxu0 0.0
    %691 = vmatpush2.msra.mxu0 0.0
    %692 = vmatprep.subr.mxu0 0.0
    %693 = vmatpush2.msra.mxu0 0.0
    %694 = vmatprep.subr.mxu0 0.0
    %695 = vmatpush2.msra.mxu0 0.0
    %696 = vmatprep.subr.mxu0 0.0
    %697 = vmatpush2.msra.mxu0 0.0
    %698 = vmatprep.mubr.f32.mxu0 0.0
    %699 = vmatmul.mubr.f32.gmra.mxu0 %v629
    %v700 = vpop.f32.mrf.mxu0
    %v701 = vadd.f32 0.0, %v700
    %v702 = vpop.f32.mrf.mxu0
    %703 = vmatprep.mubr.f32.mxu0 0.0
    %704 = vmatmul.mubr.f32.gmra.mxu0 %v632
    %v705 = vpop.f32.mrf.mxu0
    %v706 = vadd.f32 0.0, %v705
    %v707 = vpop.f32.mrf.mxu0
    %708 = vdwg.mxu0
    %v709 = vadd.f32 %v423, %v701
    %v710 = vadd.f32 %v424, %v706
    %711 = vrot.lane.b32.xlu0 %v198, 120
    %v712 = vpop.permute.xlu0 %711
    %713 = vrot.lane.b32.xlu0 %v203, 120
    %v714 = vpop.permute.xlu0 %713
    %715 = vrot.lane.b32.xlu0 %v294, 120
    %v716 = vpop.permute.xlu0 %715
    %717 = vrot.lane.b32.xlu0 %v299, 120
    %v718 = vpop.permute.xlu0 %717
    %v719 = vsel %vm425, %v712, 0
    %v721 = vsel %vm425, %v714, 0
    %v723 = vsel %vm425, %v716, 0
    %v725 = vsel %vm425, %v718, 0
    %727 = vmatprep.subr.mxu0 0.0
    %728 = vmatpush1.xpose.msra.mxu0 0.0
    %729 = vmatprep.subr.mxu0 0.0
    %730 = vmatpush1.xpose.msra.mxu0 0.0
    %731 = vmatprep.subr.mxu0 0.0
    %732 = vmatpush1.xpose.msra.mxu0 0.0
    %733 = vmatprep.subr.mxu0 0.0
    %734 = vmatpush1.xpose.msra.mxu0 0.0
    %735 = vmatprep.subr.mxu0 0.0
    %736 = vmatpush1.xpose.msra.mxu0 0.0
    %737 = vmatprep.subr.mxu0 0.0
    %738 = vmatpush1.xpose.msra.mxu0 0.0
    %739 = vmatprep.subr.mxu0 0.0
    %740 = vmatpush1.xpose.msra.mxu0 0.0
    %741 = vmatprep.subr.mxu0 0.0
    %742 = vmatpush1.xpose.msra.mxu0 0.0
    %743 = vmatprep.subr.mxu0 0.0
    %744 = vmatpush1.xpose.msra.mxu0 0.0
    %745 = vmatprep.subr.mxu0 0.0
    %746 = vmatpush1.xpose.msra.mxu0 0.0
    %747 = vmatprep.subr.mxu0 0.0
    %748 = vmatpush1.xpose.msra.mxu0 0.0
    %749 = vmatprep.subr.mxu0 0.0
    %750 = vmatpush1.xpose.msra.mxu0 0.0
    %751 = vmatprep.subr.mxu0 0.0
    %752 = vmatpush1.xpose.msra.mxu0 0.0
    %753 = vmatprep.subr.mxu0 0.0
    %754 = vmatpush1.xpose.msra.mxu0 0.0
    %755 = vmatprep.subr.mxu0 0.0
    %756 = vmatpush1.xpose.msra.mxu0 %v725
    %757 = vmatprep.subr.mxu0 0.0
    %758 = vmatpush1.xpose.msra.mxu0 %v723
    %759 = vmatprep.subr.mxu0 0.0
    %760 = vmatpush2.xpose.msra.mxu0 0.0
    %761 = vmatprep.subr.mxu0 0.0
    %762 = vmatpush2.xpose.msra.mxu0 0.0
    %763 = vmatprep.subr.mxu0 0.0
    %764 = vmatpush2.xpose.msra.mxu0 0.0
    %765 = vmatprep.subr.mxu0 0.0
    %766 = vmatpush2.xpose.msra.mxu0 0.0
    %767 = vmatprep.subr.mxu0 0.0
    %768 = vmatpush2.xpose.msra.mxu0 0.0
    %769 = vmatprep.subr.mxu0 0.0
    %770 = vmatpush2.xpose.msra.mxu0 0.0
    %771 = vmatprep.subr.mxu0 0.0
    %772 = vmatpush2.xpose.msra.mxu0 0.0
    %773 = vmatprep.subr.mxu0 0.0
    %774 = vmatpush2.xpose.msra.mxu0 0.0
    %775 = vmatprep.subr.mxu0 0.0
    %776 = vmatpush2.xpose.msra.mxu0 0.0
    %777 = vmatprep.subr.mxu0 0.0
    %778 = vmatpush2.xpose.msra.mxu0 0.0
    %779 = vmatprep.subr.mxu0 0.0
    %780 = vmatpush2.xpose.msra.mxu0 0.0
    %781 = vmatprep.subr.mxu0 0.0
    %782 = vmatpush2.xpose.msra.mxu0 0.0
    %783 = vmatprep.subr.mxu0 0.0
    %784 = vmatpush2.xpose.msra.mxu0 0.0
    %785 = vmatprep.subr.mxu0 0.0
    %786 = vmatpush2.xpose.msra.mxu0 0.0
    %787 = vmatprep.subr.mxu0 0.0
    %788 = vmatpush2.xpose.msra.mxu0 0.0
    %789 = vmatprep.subr.mxu0 0.0
    %790 = vmatpush2.xpose.msra.mxu0 0.0
    %791 = vmatprep.mubr.f32.mxu0 0.0
    %792 = vmatmul.mubr.f32.gmra.mxu0 %v719
    %v793 = vpop.f32.mrf.mxu0
    %v794 = vadd.f32 0.0, %v793
    %v795 = vpop.f32.mrf.mxu0
    %796 = vmatprep.mubr.f32.mxu0 0.0
    %797 = vmatmul.mubr.f32.gmra.mxu0 %v721
    %v798 = vpop.f32.mrf.mxu0
    %v799 = vadd.f32 0.0, %v798
    %v800 = vpop.f32.mrf.mxu0
    %801 = vdwg.mxu0
    %v802 = vmul.f32 %v794, 0.35355338
    %v803 = vmul.f32 %v799, 0.35355338
    %v804 = vsel %vm515, %v802, -inf
    %805 = vmax.xlane.f32.xlu0 %v804
    %v806 = vpop.xlane.xlu0 %805
    %v807 = vsel %vm519, %v803, -inf
    %808 = vmax.xlane.f32.xlu0 %v807
    %v809 = vpop.xlane.xlu0 %808
    %v810 = vsub.f32 %v802, %v806
    %v811 = vsub.f32 %v803, %v809
    %v812 = vmul.f32 %v810, 1.442695
    %v813 = vpow.pop %v812
    %v814 = vmul.f32 %v811, 1.442695
    %v815 = vpow.pop %v814
    %v816 = vsel %vm515, %v813, 0.0
    %817 = vadd.xlane.f32.xlu0 %v816
    %v818 = vpop.xlane.xlu0 %817
    %v819 = vsel %vm519, %v815, 0.0
    %820 = vadd.xlane.f32.xlu0 %v819
    %v821 = vpop.xlane.xlu0 %820
    %v822 = vrcp.pop %v818
    %v823 = vrcp.pop %v821
    %v824 = vmul.f32 %v813, %v822
    %v825 = vmul.f32 %v815, %v823
    %826 = vrot.lane.b32.xlu0 %v294, 88
    %v827 = vpop.permute.xlu0 %826
    %828 = vrot.lane.b32.xlu0 %v299, 88
    %v829 = vpop.permute.xlu0 %828
    %v832 = vsel %vm515, %v824, 0
    %v835 = vsel %vm515, %v825, 0
    %v837 = vsel %vm550, %v829, 0
    %839 = vmatprep.subr.mxu0 0.0
    %840 = vmatpush1.msra.mxu0 0.0
    %841 = vmatprep.subr.mxu0 0.0
    %842 = vmatpush1.msra.mxu0 0.0
    %843 = vmatprep.subr.mxu0 0.0
    %844 = vmatpush1.msra.mxu0 0.0
    %845 = vmatprep.subr.mxu0 0.0
    %846 = vmatpush1.msra.mxu0 0.0
    %847 = vmatprep.subr.mxu0 0.0
    %848 = vmatpush1.msra.mxu0 0.0
    %849 = vmatprep.subr.mxu0 0.0
    %850 = vmatpush1.msra.mxu0 0.0
    %851 = vmatprep.subr.mxu0 0.0
    %852 = vmatpush1.msra.mxu0 0.0
    %853 = vmatprep.subr.mxu0 0.0
    %854 = vmatpush1.msra.mxu0 0.0
    %855 = vmatprep.subr.mxu0 0.0
    %856 = vmatpush1.msra.mxu0 0.0
    %857 = vmatprep.subr.mxu0 0.0
    %858 = vmatpush1.msra.mxu0 0.0
    %859 = vmatprep.subr.mxu0 0.0
    %860 = vmatpush1.msra.mxu0 0.0
    %861 = vmatprep.subr.mxu0 0.0
    %862 = vmatpush1.msra.mxu0 0.0
    %863 = vmatprep.subr.mxu0 0.0
    %864 = vmatpush1.msra.mxu0 0.0
    %865 = vmatprep.subr.mxu0 0.0
    %866 = vmatpush1.msra.mxu0 0.0
    %867 = vmatprep.subr.mxu0 0.0
    %868 = vmatpush1.msra.mxu0 %v837
    %869 = vmatprep.subr.mxu0 0.0
    %870 = vmatpush1.msra.mxu0 %v827
    %871 = vmatprep.subr.mxu0 0.0
    %872 = vmatpush2.msra.mxu0 0.0
    %873 = vmatprep.subr.mxu0 0.0
    %874 = vmatpush2.msra.mxu0 0.0
    %875 = vmatprep.subr.mxu0 0.0
    %876 = vmatpush2.msra.mxu0 0.0
    %877 = vmatprep.subr.mxu0 0.0
    %878 = vmatpush2.msra.mxu0 0.0
    %879 = vmatprep.subr.mxu0 0.0
    %880 = vmatpush2.msra.mxu0 0.0
    %881 = vmatprep.subr.mxu0 0.0
    %882 = vmatpush2.msra.mxu0 0.0
    %883 = vmatprep.subr.mxu0 0.0
    %884 = vmatpush2.msra.mxu0 0.0
    %885 = vmatprep.subr.mxu0 0.0
    %886 = vmatpush2.msra.mxu0 0.0
    %887 = vmatprep.subr.mxu0 0.0
    %888 = vmatpush2.msra.mxu0 0.0
    %889 = vmatprep.subr.mxu0 0.0
    %890 = vmatpush2.msra.mxu0 0.0
    %891 = vmatprep.subr.mxu0 0.0
    %892 = vmatpush2.msra.mxu0 0.0
    %893 = vmatprep.subr.mxu0 0.0
    %894 = vmatpush2.msra.mxu0 0.0
    %895 = vmatprep.subr.mxu0 0.0
    %896 = vmatpush2.msra.mxu0 0.0
    %897 = vmatprep.subr.mxu0 0.0
    %898 = vmatpush2.msra.mxu0 0.0
    %899 = vmatprep.subr.mxu0 0.0
    %900 = vmatpush2.msra.mxu0 0.0
    %901 = vmatprep.subr.mxu0 0.0
    %902 = vmatpush2.msra.mxu0 0.0
    %903 = vmatprep.mubr.f32.mxu0 0.0
    %904 = vmatmul.mubr.f32.gmra.mxu0 %v832
    %v905 = vpop.f32.mrf.mxu0
    %v906 = vadd.f32 0.0, %v905
    %v907 = vpop.f32.mrf.mxu0
    %908 = vmatprep.mubr.f32.mxu0 0.0
    %909 = vmatmul.mubr.f32.gmra.mxu0 %v835
    %v910 = vpop.f32.mrf.mxu0
    %v911 = vadd.f32 0.0, %v910
    %v912 = vpop.f32.mrf.mxu0
    %913 = vdwg.mxu0
    %v915 = vsel %vm425, %v906, 0
    %v918 = vsel %vm425, %v911, 0
    %920 = vmatprep.subr.mxu0 0.0
    %921 = vmatpush1.msra.mxu0 0.0
    %922 = vmatprep.subr.mxu0 0.0
    %923 = vmatpush1.msra.mxu0 0.0
    %924 = vmatprep.subr.mxu0 0.0
    %925 = vmatpush1.msra.mxu0 0.0
    %926 = vmatprep.subr.mxu0 0.0
    %927 = vmatpush1.msra.mxu0 0.0
    %928 = vmatprep.subr.mxu0 0.0
    %929 = vmatpush1.msra.mxu0 0.0
    %930 = vmatprep.subr.mxu0 0.0
    %931 = vmatpush1.msra.mxu0 0.0
    %932 = vmatprep.subr.mxu0 0.0
    %933 = vmatpush1.msra.mxu0 0.0
    %934 = vmatprep.subr.mxu0 0.0
    %935 = vmatpush1.msra.mxu0 0.0
    %936 = vmatprep.subr.mxu0 0.0
    %937 = vmatpush1.msra.mxu0 0.0
    %938 = vmatprep.subr.mxu0 0.0
    %939 = vmatpush1.msra.mxu0 0.0
    %940 = vmatprep.subr.mxu0 0.0
    %941 = vmatpush1.msra.mxu0 0.0
    %942 = vmatprep.subr.mxu0 0.0
    %943 = vmatpush1.msra.mxu0 0.0
    %944 = vmatprep.subr.mxu0 0.0
    %945 = vmatpush1.msra.mxu0 0.0
    %946 = vmatprep.subr.mxu0 0.0
    %947 = vmatpush1.msra.mxu0 0.0
    %948 = vmatprep.subr.mxu0 0.0
    %949 = vmatpush1.msra.mxu0 0.0
    %950 = vmatprep.subr.mxu0 0.0
    %951 = vmatpush1.msra.mxu0 %v403
    %952 = vmatprep.subr.mxu0 0.0
    %953 = vmatpush2.msra.mxu0 0.0
    %954 = vmatprep.subr.mxu0 0.0
    %955 = vmatpush2.msra.mxu0 0.0
    %956 = vmatprep.subr.mxu0 0.0
    %957 = vmatpush2.msra.mxu0 0.0
    %958 = vmatprep.subr.mxu0 0.0
    %959 = vmatpush2.msra.mxu0 0.0
    %960 = vmatprep.subr.mxu0 0.0
    %961 = vmatpush2.msra.mxu0 0.0
    %962 = vmatprep.subr.mxu0 0.0
    %963 = vmatpush2.msra.mxu0 0.0
    %964 = vmatprep.subr.mxu0 0.0
    %965 = vmatpush2.msra.mxu0 0.0
    %966 = vmatprep.subr.mxu0 0.0
    %967 = vmatpush2.msra.mxu0 0.0
    %968 = vmatprep.subr.mxu0 0.0
    %969 = vmatpush2.msra.mxu0 0.0
    %970 = vmatprep.subr.mxu0 0.0
    %971 = vmatpush2.msra.mxu0 0.0
    %972 = vmatprep.subr.mxu0 0.0
    %973 = vmatpush2.msra.mxu0 0.0
    %974 = vmatprep.subr.mxu0 0.0
    %975 = vmatpush2.msra.mxu0 0.0
    %976 = vmatprep.subr.mxu0 0.0
    %977 = vmatpush2.msra.mxu0 0.0
    %978 = vmatprep.subr.mxu0 0.0
    %979 = vmatpush2.msra.mxu0 0.0
    %980 = vmatprep.subr.mxu0 0.0
    %981 = vmatpush2.msra.mxu0 0.0
    %982 = vmatprep.subr.mxu0 0.0
    %983 = vmatpush2.msra.mxu0 0.0
    %984 = vmatprep.mubr.f32.mxu0 0.0
    %985 = vmatmul.mubr.f32.gmra.mxu0 %v915
    %v986 = vpop.f32.mrf.mxu0
    %v987 = vadd.f32 0.0, %v986
    %v988 = vpop.f32.mrf.mxu0
    %989 = vmatprep.mubr.f32.mxu0 0.0
    %990 = vmatmul.mubr.f32.gmra.mxu0 %v918
    %v991 = vpop.f32.mrf.mxu0
    %v992 = vadd.f32 0.0, %v991
    %v993 = vpop.f32.mrf.mxu0
    %994 = vdwg.mxu0
    %v995 = vadd.f32 %v709, %v987
    %v996 = vadd.f32 %v710, %v992
    %997 = vrot.lane.b32.xlu0 %v198, 112
    %v998 = vpop.permute.xlu0 %997
    %999 = vrot.lane.b32.xlu0 %v203, 112
    %v1000 = vpop.permute.xlu0 %999
    %1001 = vrot.lane.b32.xlu0 %v294, 112
    %v1002 = vpop.permute.xlu0 %1001
    %1003 = vrot.lane.b32.xlu0 %v299, 112
    %v1004 = vpop.permute.xlu0 %1003
    %v1005 = vsel %vm425, %v998, 0
    %v1007 = vsel %vm425, %v1000, 0
    %v1009 = vsel %vm425, %v1002, 0
    %v1011 = vsel %vm425, %v1004, 0
    %1013 = vmatprep.subr.mxu0 0.0
    %1014 = vmatpush1.xpose.msra.mxu0 0.0
    %1015 = vmatprep.subr.mxu0 0.0
    %1016 = vmatpush1.xpose.msra.mxu0 0.0
    %1017 = vmatprep.subr.mxu0 0.0
    %1018 = vmatpush1.xpose.msra.mxu0 0.0
    %1019 = vmatprep.subr.mxu0 0.0
    %1020 = vmatpush1.xpose.msra.mxu0 0.0
    %1021 = vmatprep.subr.mxu0 0.0
    %1022 = vmatpush1.xpose.msra.mxu0 0.0
    %1023 = vmatprep.subr.mxu0 0.0
    %1024 = vmatpush1.xpose.msra.mxu0 0.0
    %1025 = vmatprep.subr.mxu0 0.0
    %1026 = vmatpush1.xpose.msra.mxu0 0.0
    %1027 = vmatprep.subr.mxu0 0.0
    %1028 = vmatpush1.xpose.msra.mxu0 0.0
    %1029 = vmatprep.subr.mxu0 0.0
    %1030 = vmatpush1.xpose.msra.mxu0 0.0
    %1031 = vmatprep.subr.mxu0 0.0
    %1032 = vmatpush1.xpose.msra.mxu0 0.0
    %1033 = vmatprep.subr.mxu0 0.0
    %1034 = vmatpush1.xpose.msra.mxu0 0.0
    %1035 = vmatprep.subr.mxu0 0.0
    %1036 = vmatpush1.xpose.msra.mxu0 0.0
    %1037 = vmatprep.subr.mxu0 0.0
    %1038 = vmatpush1.xpose.msra.mxu0 0.0
    %1039 = vmatprep.subr.mxu0 0.0
    %1040 = vmatpush1.xpose.msra.mxu0 0.0
    %1041 = vmatprep.subr.mxu0 0.0
    %1042 = vmatpush1.xpose.msra.mxu0 %v1011
    %1043 = vmatprep.subr.mxu0 0.0
    %1044 = vmatpush1.xpose.msra.mxu0 %v1009
    %1045 = vmatprep.subr.mxu0 0.0
    %1046 = vmatpush2.xpose.msra.mxu0 0.0
    %1047 = vmatprep.subr.mxu0 0.0
    %1048 = vmatpush2.xpose.msra.mxu0 0.0
    %1049 = vmatprep.subr.mxu0 0.0
    %1050 = vmatpush2.xpose.msra.mxu0 0.0
    %1051 = vmatprep.subr.mxu0 0.0
    %1052 = vmatpush2.xpose.msra.mxu0 0.0
    %1053 = vmatprep.subr.mxu0 0.0
    %1054 = vmatpush2.xpose.msra.mxu0 0.0
    %1055 = vmatprep.subr.mxu0 0.0
    %1056 = vmatpush2.xpose.msra.mxu0 0.0
    %1057 = vmatprep.subr.mxu0 0.0
    %1058 = vmatpush2.xpose.msra.mxu0 0.0
    %1059 = vmatprep.subr.mxu0 0.0
    %1060 = vmatpush2.xpose.msra.mxu0 0.0
    %1061 = vmatprep.subr.mxu0 0.0
    %1062 = vmatpush2.xpose.msra.mxu0 0.0
    %1063 = vmatprep.subr.mxu0 0.0
    %1064 = vmatpush2.xpose.msra.mxu0 0.0
    %1065 = vmatprep.subr.mxu0 0.0
    %1066 = vmatpush2.xpose.msra.mxu0 0.0
    %1067 = vmatprep.subr.mxu0 0.0
    %1068 = vmatpush2.xpose.msra.mxu0 0.0
    %1069 = vmatprep.subr.mxu0 0.0
    %1070 = vmatpush2.xpose.msra.mxu0 0.0
    %1071 = vmatprep.subr.mxu0 0.0
    %1072 = vmatpush2.xpose.msra.mxu0 0.0
    %1073 = vmatprep.subr.mxu0 0.0
    %1074 = vmatpush2.xpose.msra.mxu0 0.0
    %1075 = vmatprep.subr.mxu0 0.0
    %1076 = vmatpush2.xpose.msra.mxu0 0.0
    %1077 = vmatprep.mubr.f32.mxu0 0.0
    %1078 = vmatmul.mubr.f32.gmra.mxu0 %v1005
    %v1079 = vpop.f32.mrf.mxu0
    %v1080 = vadd.f32 0.0, %v1079
    %v1081 = vpop.f32.mrf.mxu0
    %1082 = vmatprep.mubr.f32.mxu0 0.0
    %1083 = vmatmul.mubr.f32.gmra.mxu0 %v1007
    %v1084 = vpop.f32.mrf.mxu0
    %v1085 = vadd.f32 0.0, %v1084
    %v1086 = vpop.f32.mrf.mxu0
    %1087 = vdwg.mxu0
    %v1088 = vmul.f32 %v1080, 0.35355338
    %v1089 = vmul.f32 %v1085, 0.35355338
    %v1090 = vsel %vm515, %v1088, -inf
    %1091 = vmax.xlane.f32.xlu0 %v1090
    %v1092 = vpop.xlane.xlu0 %1091
    %v1093 = vsel %vm519, %v1089, -inf
    %1094 = vmax.xlane.f32.xlu0 %v1093
    %v1095 = vpop.xlane.xlu0 %1094
    %v1096 = vsub.f32 %v1088, %v1092
    %v1097 = vsub.f32 %v1089, %v1095
    %v1098 = vmul.f32 %v1096, 1.442695
    %v1099 = vpow.pop %v1098
    %v1100 = vmul.f32 %v1097, 1.442695
    %v1101 = vpow.pop %v1100
    %v1102 = vsel %vm515, %v1099, 0.0
    %1103 = vadd.xlane.f32.xlu0 %v1102
    %v1104 = vpop.xlane.xlu0 %1103
    %v1105 = vsel %vm519, %v1101, 0.0
    %1106 = vadd.xlane.f32.xlu0 %v1105
    %v1107 = vpop.xlane.xlu0 %1106
    %v1108 = vrcp.pop %v1104
    %v1109 = vrcp.pop %v1107
    %v1110 = vmul.f32 %v1099, %v1108
    %v1111 = vmul.f32 %v1101, %v1109
    %1112 = vrot.lane.b32.xlu0 %v294, 80
    %v1113 = vpop.permute.xlu0 %1112
    %1114 = vrot.lane.b32.xlu0 %v299, 80
    %v1115 = vpop.permute.xlu0 %1114
    %v1118 = vsel %vm515, %v1110, 0
    %v1121 = vsel %vm515, %v1111, 0
    %v1123 = vsel %vm550, %v1115, 0
    %1125 = vmatprep.subr.mxu0 0.0
    %1126 = vmatpush1.msra.mxu0 0.0
    %1127 = vmatprep.subr.mxu0 0.0
    %1128 = vmatpush1.msra.mxu0 0.0
    %1129 = vmatprep.subr.mxu0 0.0
    %1130 = vmatpush1.msra.mxu0 0.0
    %1131 = vmatprep.subr.mxu0 0.0
    %1132 = vmatpush1.msra.mxu0 0.0
    %1133 = vmatprep.subr.mxu0 0.0
    %1134 = vmatpush1.msra.mxu0 0.0
    %1135 = vmatprep.subr.mxu0 0.0
    %1136 = vmatpush1.msra.mxu0 0.0
    %1137 = vmatprep.subr.mxu0 0.0
    %1138 = vmatpush1.msra.mxu0 0.0
    %1139 = vmatprep.subr.mxu0 0.0
    %1140 = vmatpush1.msra.mxu0 0.0
    %1141 = vmatprep.subr.mxu0 0.0
    %1142 = vmatpush1.msra.mxu0 0.0
    %1143 = vmatprep.subr.mxu0 0.0
    %1144 = vmatpush1.msra.mxu0 0.0
    %1145 = vmatprep.subr.mxu0 0.0
    %1146 = vmatpush1.msra.mxu0 0.0
    %1147 = vmatprep.subr.mxu0 0.0
    %1148 = vmatpush1.msra.mxu0 0.0
    %1149 = vmatprep.subr.mxu0 0.0
    %1150 = vmatpush1.msra.mxu0 0.0
    %1151 = vmatprep.subr.mxu0 0.0
    %1152 = vmatpush1.msra.mxu0 0.0
    %1153 = vmatprep.subr.mxu0 0.0
    %1154 = vmatpush1.msra.mxu0 %v1123
    %1155 = vmatprep.subr.mxu0 0.0
    %1156 = vmatpush1.msra.mxu0 %v1113
    %1157 = vmatprep.subr.mxu0 0.0
    %1158 = vmatpush2.msra.mxu0 0.0
    %1159 = vmatprep.subr.mxu0 0.0
    %1160 = vmatpush2.msra.mxu0 0.0
    %1161 = vmatprep.subr.mxu0 0.0
    %1162 = vmatpush2.msra.mxu0 0.0
    %1163 = vmatprep.subr.mxu0 0.0
    %1164 = vmatpush2.msra.mxu0 0.0
    %1165 = vmatprep.subr.mxu0 0.0
    %1166 = vmatpush2.msra.mxu0 0.0
    %1167 = vmatprep.subr.mxu0 0.0
    %1168 = vmatpush2.msra.mxu0 0.0
    %1169 = vmatprep.subr.mxu0 0.0
    %1170 = vmatpush2.msra.mxu0 0.0
    %1171 = vmatprep.subr.mxu0 0.0
    %1172 = vmatpush2.msra.mxu0 0.0
    %1173 = vmatprep.subr.mxu0 0.0
    %1174 = vmatpush2.msra.mxu0 0.0
    %1175 = vmatprep.subr.mxu0 0.0
    %1176 = vmatpush2.msra.mxu0 0.0
    %1177 = vmatprep.subr.mxu0 0.0
    %1178 = vmatpush2.msra.mxu0 0.0
    %1179 = vmatprep.subr.mxu0 0.0
    %1180 = vmatpush2.msra.mxu0 0.0
    %1181 = vmatprep.subr.mxu0 0.0
    %1182 = vmatpush2.msra.mxu0 0.0
    %1183 = vmatprep.subr.mxu0 0.0
    %1184 = vmatpush2.msra.mxu0 0.0
    %1185 = vmatprep.subr.mxu0 0.0
    %1186 = vmatpush2.msra.mxu0 0.0
    %1187 = vmatprep.subr.mxu0 0.0
    %1188 = vmatpush2.msra.mxu0 0.0
    %1189 = vmatprep.mubr.f32.mxu0 0.0
    %1190 = vmatmul.mubr.f32.gmra.mxu0 %v1118
    %v1191 = vpop.f32.mrf.mxu0
    %v1192 = vadd.f32 0.0, %v1191
    %v1193 = vpop.f32.mrf.mxu0
    %1194 = vmatprep.mubr.f32.mxu0 0.0
    %1195 = vmatmul.mubr.f32.gmra.mxu0 %v1121
    %v1196 = vpop.f32.mrf.mxu0
    %v1197 = vadd.f32 0.0, %v1196
    %v1198 = vpop.f32.mrf.mxu0
    %1199 = vdwg.mxu0
    %v1201 = vsel %vm425, %v1192, 0
    %v1204 = vsel %vm425, %v1197, 0
    %1206 = vmatprep.subr.mxu0 0.0
    %1207 = vmatpush1.msra.mxu0 0.0
    %1208 = vmatprep.subr.mxu0 0.0
    %1209 = vmatpush1.msra.mxu0 0.0
    %1210 = vmatprep.subr.mxu0 0.0
    %1211 = vmatpush1.msra.mxu0 0.0
    %1212 = vmatprep.subr.mxu0 0.0
    %1213 = vmatpush1.msra.mxu0 0.0
    %1214 = vmatprep.subr.mxu0 0.0
    %1215 = vmatpush1.msra.mxu0 0.0
    %1216 = vmatprep.subr.mxu0 0.0
    %1217 = vmatpush1.msra.mxu0 0.0
    %1218 = vmatprep.subr.mxu0 0.0
    %1219 = vmatpush1.msra.mxu0 0.0
    %1220 = vmatprep.subr.mxu0 0.0
    %1221 = vmatpush1.msra.mxu0 0.0
    %1222 = vmatprep.subr.mxu0 0.0
    %1223 = vmatpush1.msra.mxu0 0.0
    %1224 = vmatprep.subr.mxu0 0.0
    %1225 = vmatpush1.msra.mxu0 0.0
    %1226 = vmatprep.subr.mxu0 0.0
    %1227 = vmatpush1.msra.mxu0 0.0
    %1228 = vmatprep.subr.mxu0 0.0
    %1229 = vmatpush1.msra.mxu0 0.0
    %1230 = vmatprep.subr.mxu0 0.0
    %1231 = vmatpush1.msra.mxu0 0.0
    %1232 = vmatprep.subr.mxu0 0.0
    %1233 = vmatpush1.msra.mxu0 0.0
    %1234 = vmatprep.subr.mxu0 0.0
    %1235 = vmatpush1.msra.mxu0 0.0
    %1236 = vmatprep.subr.mxu0 0.0
    %1237 = vmatpush1.msra.mxu0 %v404
    %1238 = vmatprep.subr.mxu0 0.0
    %1239 = vmatpush2.msra.mxu0 0.0
    %1240 = vmatprep.subr.mxu0 0.0
    %1241 = vmatpush2.msra.mxu0 0.0
    %1242 = vmatprep.subr.mxu0 0.0
    %1243 = vmatpush2.msra.mxu0 0.0
    %1244 = vmatprep.subr.mxu0 0.0
    %1245 = vmatpush2.msra.mxu0 0.0
    %1246 = vmatprep.subr.mxu0 0.0
    %1247 = vmatpush2.msra.mxu0 0.0
    %1248 = vmatprep.subr.mxu0 0.0
    %1249 = vmatpush2.msra.mxu0 0.0
    %1250 = vmatprep.subr.mxu0 0.0
    %1251 = vmatpush2.msra.mxu0 0.0
    %1252 = vmatprep.subr.mxu0 0.0
    %1253 = vmatpush2.msra.mxu0 0.0
    %1254 = vmatprep.subr.mxu0 0.0
    %1255 = vmatpush2.msra.mxu0 0.0
    %1256 = vmatprep.subr.mxu0 0.0
    %1257 = vmatpush2.msra.mxu0 0.0
    %1258 = vmatprep.subr.mxu0 0.0
    %1259 = vmatpush2.msra.mxu0 0.0
    %1260 = vmatprep.subr.mxu0 0.0
    %1261 = vmatpush2.msra.mxu0 0.0
    %1262 = vmatprep.subr.mxu0 0.0
    %1263 = vmatpush2.msra.mxu0 0.0
    %1264 = vmatprep.subr.mxu0 0.0
    %1265 = vmatpush2.msra.mxu0 0.0
    %1266 = vmatprep.subr.mxu0 0.0
    %1267 = vmatpush2.msra.mxu0 0.0
    %1268 = vmatprep.subr.mxu0 0.0
    %1269 = vmatpush2.msra.mxu0 0.0
    %1270 = vmatprep.mubr.f32.mxu0 0.0
    %1271 = vmatmul.mubr.f32.gmra.mxu0 %v1201
    %v1272 = vpop.f32.mrf.mxu0
    %v1273 = vadd.f32 0.0, %v1272
    %v1274 = vpop.f32.mrf.mxu0
    %1275 = vmatprep.mubr.f32.mxu0 0.0
    %1276 = vmatmul.mubr.f32.gmra.mxu0 %v1204
    %v1277 = vpop.f32.mrf.mxu0
    %v1278 = vadd.f32 0.0, %v1277
    %v1279 = vpop.f32.mrf.mxu0
    %1280 = vdwg.mxu0
    %v1281 = vadd.f32 %v995, %v1273
    %v1282 = vadd.f32 %v996, %v1278
    %1283 = vrot.lane.b32.xlu0 %v198, 104
    %v1284 = vpop.permute.xlu0 %1283
    %1285 = vrot.lane.b32.xlu0 %v203, 104
    %v1286 = vpop.permute.xlu0 %1285
    %1287 = vrot.lane.b32.xlu0 %v294, 104
    %v1288 = vpop.permute.xlu0 %1287
    %1289 = vrot.lane.b32.xlu0 %v299, 104
    %v1290 = vpop.permute.xlu0 %1289
    %v1291 = vsel %vm425, %v1284, 0
    %v1293 = vsel %vm425, %v1286, 0
    %v1295 = vsel %vm425, %v1288, 0
    %v1297 = vsel %vm425, %v1290, 0
    %1299 = vmatprep.subr.mxu0 0.0
    %1300 = vmatpush1.xpose.msra.mxu0 0.0
    %1301 = vmatprep.subr.mxu0 0.0
    %1302 = vmatpush1.xpose.msra.mxu0 0.0
    %1303 = vmatprep.subr.mxu0 0.0
    %1304 = vmatpush1.xpose.msra.mxu0 0.0
    %1305 = vmatprep.subr.mxu0 0.0
    %1306 = vmatpush1.xpose.msra.mxu0 0.0
    %1307 = vmatprep.subr.mxu0 0.0
    %1308 = vmatpush1.xpose.msra.mxu0 0.0
    %1309 = vmatprep.subr.mxu0 0.0
    %1310 = vmatpush1.xpose.msra.mxu0 0.0
    %1311 = vmatprep.subr.mxu0 0.0
    %1312 = vmatpush1.xpose.msra.mxu0 0.0
    %1313 = vmatprep.subr.mxu0 0.0
    %1314 = vmatpush1.xpose.msra.mxu0 0.0
    %1315 = vmatprep.subr.mxu0 0.0
    %1316 = vmatpush1.xpose.msra.mxu0 0.0
    %1317 = vmatprep.subr.mxu0 0.0
    %1318 = vmatpush1.xpose.msra.mxu0 0.0
    %1319 = vmatprep.subr.mxu0 0.0
    %1320 = vmatpush1.xpose.msra.mxu0 0.0
    %1321 = vmatprep.subr.mxu0 0.0
    %1322 = vmatpush1.xpose.msra.mxu0 0.0
    %1323 = vmatprep.subr.mxu0 0.0
    %1324 = vmatpush1.xpose.msra.mxu0 0.0
    %1325 = vmatprep.subr.mxu0 0.0
    %1326 = vmatpush1.xpose.msra.mxu0 0.0
    %1327 = vmatprep.subr.mxu0 0.0
    %1328 = vmatpush1.xpose.msra.mxu0 %v1297
    %1329 = vmatprep.subr.mxu0 0.0
    %1330 = vmatpush1.xpose.msra.mxu0 %v1295
    %1331 = vmatprep.subr.mxu0 0.0
    %1332 = vmatpush2.xpose.msra.mxu0 0.0
    %1333 = vmatprep.subr.mxu0 0.0
    %1334 = vmatpush2.xpose.msra.mxu0 0.0
    %1335 = vmatprep.subr.mxu0 0.0
    %1336 = vmatpush2.xpose.msra.mxu0 0.0
    %1337 = vmatprep.subr.mxu0 0.0
    %1338 = vmatpush2.xpose.msra.mxu0 0.0
    %1339 = vmatprep.subr.mxu0 0.0
    %1340 = vmatpush2.xpose.msra.mxu0 0.0
    %1341 = vmatprep.subr.mxu0 0.0
    %1342 = vmatpush2.xpose.msra.mxu0 0.0
    %1343 = vmatprep.subr.mxu0 0.0
    %1344 = vmatpush2.xpose.msra.mxu0 0.0
    %1345 = vmatprep.subr.mxu0 0.0
    %1346 = vmatpush2.xpose.msra.mxu0 0.0
    %1347 = vmatprep.subr.mxu0 0.0
    %1348 = vmatpush2.xpose.msra.mxu0 0.0
    %1349 = vmatprep.subr.mxu0 0.0
    %1350 = vmatpush2.xpose.msra.mxu0 0.0
    %1351 = vmatprep.subr.mxu0 0.0
    %1352 = vmatpush2.xpose.msra.mxu0 0.0
    %1353 = vmatprep.subr.mxu0 0.0
    %1354 = vmatpush2.xpose.msra.mxu0 0.0
    %1355 = vmatprep.subr.mxu0 0.0
    %1356 = vmatpush2.xpose.msra.mxu0 0.0
    %1357 = vmatprep.subr.mxu0 0.0
    %1358 = vmatpush2.xpose.msra.mxu0 0.0
    %1359 = vmatprep.subr.mxu0 0.0
    %1360 = vmatpush2.xpose.msra.mxu0 0.0
    %1361 = vmatprep.subr.mxu0 0.0
    %1362 = vmatpush2.xpose.msra.mxu0 0.0
    %1363 = vmatprep.mubr.f32.mxu0 0.0
    %1364 = vmatmul.mubr.f32.gmra.mxu0 %v1291
    %v1365 = vpop.f32.mrf.mxu0
    %v1366 = vadd.f32 0.0, %v1365
    %v1367 = vpop.f32.mrf.mxu0
    %1368 = vmatprep.mubr.f32.mxu0 0.0
    %1369 = vmatmul.mubr.f32.gmra.mxu0 %v1293
    %v1370 = vpop.f32.mrf.mxu0
    %v1371 = vadd.f32 0.0, %v1370
    %v1372 = vpop.f32.mrf.mxu0
    %1373 = vdwg.mxu0
    %v1374 = vmul.f32 %v1366, 0.35355338
    %v1375 = vmul.f32 %v1371, 0.35355338
    %v1376 = vsel %vm515, %v1374, -inf
    %1377 = vmax.xlane.f32.xlu0 %v1376
    %v1378 = vpop.xlane.xlu0 %1377
    %v1379 = vsel %vm519, %v1375, -inf
    %1380 = vmax.xlane.f32.xlu0 %v1379
    %v1381 = vpop.xlane.xlu0 %1380
    %v1382 = vsub.f32 %v1374, %v1378
    %v1383 = vsub.f32 %v1375, %v1381
    %v1384 = vmul.f32 %v1382, 1.442695
    %v1385 = vpow.pop %v1384
    %v1386 = vmul.f32 %v1383, 1.442695
    %v1387 = vpow.pop %v1386
    %v1388 = vsel %vm515, %v1385, 0.0
    %1389 = vadd.xlane.f32.xlu0 %v1388
    %v1390 = vpop.xlane.xlu0 %1389
    %v1391 = vsel %vm519, %v1387, 0.0
    %1392 = vadd.xlane.f32.xlu0 %v1391
    %v1393 = vpop.xlane.xlu0 %1392
    %v1394 = vrcp.pop %v1390
    %v1395 = vrcp.pop %v1393
    %v1396 = vmul.f32 %v1385, %v1394
    %v1397 = vmul.f32 %v1387, %v1395
    %1398 = vrot.lane.b32.xlu0 %v294, 72
    %v1399 = vpop.permute.xlu0 %1398
    %1400 = vrot.lane.b32.xlu0 %v299, 72
    %v1401 = vpop.permute.xlu0 %1400
    %v1404 = vsel %vm515, %v1396, 0
    %v1407 = vsel %vm515, %v1397, 0
    %v1409 = vsel %vm550, %v1401, 0
    %1411 = vmatprep.subr.mxu0 0.0
    %1412 = vmatpush1.msra.mxu0 0.0
    %1413 = vmatprep.subr.mxu0 0.0
    %1414 = vmatpush1.msra.mxu0 0.0
    %1415 = vmatprep.subr.mxu0 0.0
    %1416 = vmatpush1.msra.mxu0 0.0
    %1417 = vmatprep.subr.mxu0 0.0
    %1418 = vmatpush1.msra.mxu0 0.0
    %1419 = vmatprep.subr.mxu0 0.0
    %1420 = vmatpush1.msra.mxu0 0.0
    %1421 = vmatprep.subr.mxu0 0.0
    %1422 = vmatpush1.msra.mxu0 0.0
    %1423 = vmatprep.subr.mxu0 0.0
    %1424 = vmatpush1.msra.mxu0 0.0
    %1425 = vmatprep.subr.mxu0 0.0
    %1426 = vmatpush1.msra.mxu0 0.0
    %1427 = vmatprep.subr.mxu0 0.0
    %1428 = vmatpush1.msra.mxu0 0.0
    %1429 = vmatprep.subr.mxu0 0.0
    %1430 = vmatpush1.msra.mxu0 0.0
    %1431 = vmatprep.subr.mxu0 0.0
    %1432 = vmatpush1.msra.mxu0 0.0
    %1433 = vmatprep.subr.mxu0 0.0
    %1434 = vmatpush1.msra.mxu0 0.0
    %1435 = vmatprep.subr.mxu0 0.0
    %1436 = vmatpush1.msra.mxu0 0.0
    %1437 = vmatprep.subr.mxu0 0.0
    %1438 = vmatpush1.msra.mxu0 0.0
    %1439 = vmatprep.subr.mxu0 0.0
    %1440 = vmatpush1.msra.mxu0 %v1409
    %1441 = vmatprep.subr.mxu0 0.0
    %1442 = vmatpush1.msra.mxu0 %v1399
    %1443 = vmatprep.subr.mxu0 0.0
    %1444 = vmatpush2.msra.mxu0 0.0
    %1445 = vmatprep.subr.mxu0 0.0
    %1446 = vmatpush2.msra.mxu0 0.0
    %1447 = vmatprep.subr.mxu0 0.0
    %1448 = vmatpush2.msra.mxu0 0.0
    %1449 = vmatprep.subr.mxu0 0.0
    %1450 = vmatpush2.msra.mxu0 0.0
    %1451 = vmatprep.subr.mxu0 0.0
    %1452 = vmatpush2.msra.mxu0 0.0
    %1453 = vmatprep.subr.mxu0 0.0
    %1454 = vmatpush2.msra.mxu0 0.0
    %1455 = vmatprep.subr.mxu0 0.0
    %1456 = vmatpush2.msra.mxu0 0.0
    %1457 = vmatprep.subr.mxu0 0.0
    %1458 = vmatpush2.msra.mxu0 0.0
    %1459 = vmatprep.subr.mxu0 0.0
    %1460 = vmatpush2.msra.mxu0 0.0
    %1461 = vmatprep.subr.mxu0 0.0
    %1462 = vmatpush2.msra.mxu0 0.0
    %1463 = vmatprep.subr.mxu0 0.0
    %1464 = vmatpush2.msra.mxu0 0.0
    %1465 = vmatprep.subr.mxu0 0.0
    %1466 = vmatpush2.msra.mxu0 0.0
    %1467 = vmatprep.subr.mxu0 0.0
    %1468 = vmatpush2.msra.mxu0 0.0
    %1469 = vmatprep.subr.mxu0 0.0
    %1470 = vmatpush2.msra.mxu0 0.0
    %1471 = vmatprep.subr.mxu0 0.0
    %1472 = vmatpush2.msra.mxu0 0.0
    %1473 = vmatprep.subr.mxu0 0.0
    %1474 = vmatpush2.msra.mxu0 0.0
    %1475 = vmatprep.mubr.f32.mxu0 0.0
    %1476 = vmatmul.mubr.f32.gmra.mxu0 %v1404
    %v1477 = vpop.f32.mrf.mxu0
    %v1478 = vadd.f32 0.0, %v1477
    %v1479 = vpop.f32.mrf.mxu0
    %1480 = vmatprep.mubr.f32.mxu0 0.0
    %1481 = vmatmul.mubr.f32.gmra.mxu0 %v1407
    %v1482 = vpop.f32.mrf.mxu0
    %v1483 = vadd.f32 0.0, %v1482
    %v1484 = vpop.f32.mrf.mxu0
    %1485 = vdwg.mxu0
    %v1487 = vsel %vm425, %v1478, 0
    %v1490 = vsel %vm425, %v1483, 0
    %1492 = vmatprep.subr.mxu0 0.0
    %1493 = vmatpush1.msra.mxu0 0.0
    %1494 = vmatprep.subr.mxu0 0.0
    %1495 = vmatpush1.msra.mxu0 0.0
    %1496 = vmatprep.subr.mxu0 0.0
    %1497 = vmatpush1.msra.mxu0 0.0
    %1498 = vmatprep.subr.mxu0 0.0
    %1499 = vmatpush1.msra.mxu0 0.0
    %1500 = vmatprep.subr.mxu0 0.0
    %1501 = vmatpush1.msra.mxu0 0.0
    %1502 = vmatprep.subr.mxu0 0.0
    %1503 = vmatpush1.msra.mxu0 0.0
    %1504 = vmatprep.subr.mxu0 0.0
    %1505 = vmatpush1.msra.mxu0 0.0
    %1506 = vmatprep.subr.mxu0 0.0
    %1507 = vmatpush1.msra.mxu0 0.0
    %1508 = vmatprep.subr.mxu0 0.0
    %1509 = vmatpush1.msra.mxu0 0.0
    %1510 = vmatprep.subr.mxu0 0.0
    %1511 = vmatpush1.msra.mxu0 0.0
    %1512 = vmatprep.subr.mxu0 0.0
    %1513 = vmatpush1.msra.mxu0 0.0
    %1514 = vmatprep.subr.mxu0 0.0
    %1515 = vmatpush1.msra.mxu0 0.0
    %1516 = vmatprep.subr.mxu0 0.0
    %1517 = vmatpush1.msra.mxu0 0.0
    %1518 = vmatprep.subr.mxu0 0.0
    %1519 = vmatpush1.msra.mxu0 0.0
    %1520 = vmatprep.subr.mxu0 0.0
    %1521 = vmatpush1.msra.mxu0 0.0
    %1522 = vmatprep.subr.mxu0 0.0
    %1523 = vmatpush1.msra.mxu0 %v405
    %1524 = vmatprep.subr.mxu0 0.0
    %1525 = vmatpush2.msra.mxu0 0.0
    %1526 = vmatprep.subr.mxu0 0.0
    %1527 = vmatpush2.msra.mxu0 0.0
    %1528 = vmatprep.subr.mxu0 0.0
    %1529 = vmatpush2.msra.mxu0 0.0
    %1530 = vmatprep.subr.mxu0 0.0
    %1531 = vmatpush2.msra.mxu0 0.0
    %1532 = vmatprep.subr.mxu0 0.0
    %1533 = vmatpush2.msra.mxu0 0.0
    %1534 = vmatprep.subr.mxu0 0.0
    %1535 = vmatpush2.msra.mxu0 0.0
    %1536 = vmatprep.subr.mxu0 0.0
    %1537 = vmatpush2.msra.mxu0 0.0
    %1538 = vmatprep.subr.mxu0 0.0
    %1539 = vmatpush2.msra.mxu0 0.0
    %1540 = vmatprep.subr.mxu0 0.0
    %1541 = vmatpush2.msra.mxu0 0.0
    %1542 = vmatprep.subr.mxu0 0.0
    %1543 = vmatpush2.msra.mxu0 0.0
    %1544 = vmatprep.subr.mxu0 0.0
    %1545 = vmatpush2.msra.mxu0 0.0
    %1546 = vmatprep.subr.mxu0 0.0
    %1547 = vmatpush2.msra.mxu0 0.0
    %1548 = vmatprep.subr.mxu0 0.0
    %1549 = vmatpush2.msra.mxu0 0.0
    %1550 = vmatprep.subr.mxu0 0.0
    %1551 = vmatpush2.msra.mxu0 0.0
    %1552 = vmatprep.subr.mxu0 0.0
    %1553 = vmatpush2.msra.mxu0 0.0
    %1554 = vmatprep.subr.mxu0 0.0
    %1555 = vmatpush2.msra.mxu0 0.0
    %1556 = vmatprep.mubr.f32.mxu0 0.0
    %1557 = vmatmul.mubr.f32.gmra.mxu0 %v1487
    %v1558 = vpop.f32.mrf.mxu0
    %v1559 = vadd.f32 0.0, %v1558
    %v1560 = vpop.f32.mrf.mxu0
    %1561 = vmatprep.mubr.f32.mxu0 0.0
    %1562 = vmatmul.mubr.f32.gmra.mxu0 %v1490
    %v1563 = vpop.f32.mrf.mxu0
    %v1564 = vadd.f32 0.0, %v1563
    %v1565 = vpop.f32.mrf.mxu0
    %1566 = vdwg.mxu0
    %v1567 = vadd.f32 %v1281, %v1559
    %v1568 = vadd.f32 %v1282, %v1564
    %v1569 = vadd.f32 %v109, %v1567
    %v1570 = vadd.f32 %v110, %v1568
    %v1571 = vsel %vm121, %v1569, 0.0
    %vm1572 = vcmask 256000
    %v1573 = vsel %vm1572, %v1570, 0.0
    %v1574 = vadd.f32 %v1571, %v1573
    %v1575 = vrot.slane %v1574, 4
    %v1576 = vadd.f32 %v1574, %v1575
    %v1577 = vrot.slane %v1576, 2
    %v1578 = vadd.f32 %v1576, %v1577
    %v1579 = vrot.slane %v1578, 1
    %v1580 = vadd.f32 %v1578, %v1579
    %v1581 = vrcp.pop 11.0
    %v1582 = vmul.f32 %v1580, %v1581
    %v1583 = vsub.f32 %v1569, %v1582
    %v1584 = vsub.f32 %v1570, %v1582
    %v1585 = vmul.f32 %v1583, %v1583
    %v1586 = vmul.f32 %v1584, %v1584
    %v1587 = vsel %vm121, %v1585, 0.0
    %v1588 = vsel %vm1572, %v1586, 0.0
    %v1589 = vadd.f32 %v1587, %v1588
    %v1590 = vrot.slane %v1589, 4
    %v1591 = vadd.f32 %v1589, %v1590
    %v1592 = vrot.slane %v1591, 2
    %v1593 = vadd.f32 %v1591, %v1592
    %v1594 = vrot.slane %v1593, 1
    %v1595 = vadd.f32 %v1593, %v1594
    %v1596 = vmul.f32 %v1595, %v1581
    %v1597 = vadd.f32 %v1596, 1e-05
    %v1598 = vrsqrt.pop %v1597
    %v1599 = vmul.f32 %v1583, %v1598
    %v1600 = vmul.f32 %v1584, %v1598
    %v1602 = vlaneseq
    %v1603 = vshrl.u32 %v1602, 7
    %v1604 = vsub.s32 0, %v1603
    %v1605 = vrot.slane %v407, %v1604
    %v1607 = vmul.f32 %v1599, %v1605
    %v1608 = vmul.f32 %v1600, %v1605
    %v1610 = vlaneseq
    %v1611 = vshrl.u32 %v1610, 7
    %v1612 = vsub.s32 0, %v1611
    %v1613 = vrot.slane %v408, %v1612
    %v1615 = vadd.f32 %v1607, %v1613
    %v1616 = vadd.f32 %v1608, %v1613
    %1617 = vst.msk [vmem:[#allocation2] sm:$0xff] %vm121, %v1615
    %1618 = vst.msk [vmem:[#allocation2 + $0x8] sm:$0x7] %vm1572, %v1616
    %v1619 = vlaneseq
    %v1620 = vshrl.u32 %v1619, 7
    %v1621 = vsub.s32 1, %v1620
    %v1622 = vrot.slane %v386, %v1621
    %v1623 = vmul.f32 %v400, %v1622
    %v1624 = vmul.f32 %v401, %v1622
    %v1625 = vadd.f32 %v421, %v1623
    %v1626 = vadd.f32 %v421, %v1624
    %v1628 = vrot.slane %v203, 3
    %v1629 = vrot.slane %v208, 3
    %v1630 = vsel %vm550, %v1628, %v1629
    %vm1633 = vcmask 1042432
    %v1634 = vrot.slane %v299, 5
    %v1635 = vrot.slane %v304, 5
    %v1636 = vsel %vm1633, %v1634, %v1635
    %v1637 = vrot.slane %v309, 5
    %v1638 = vsel %vm1633, %v1635, %v1637
    %v1639 = vsel %vm425, %v1630, 0
    %v1641 = vsel %vm425, %v1629, 0
    %v1643 = vsel %vm425, %v1636, 0
    %v1645 = vsel %vm425, %v1638, 0
    %1647 = vmatprep.subr.mxu0 0.0
    %1648 = vmatpush1.xpose.msra.mxu0 0.0
    %1649 = vmatprep.subr.mxu0 0.0
    %1650 = vmatpush1.xpose.msra.mxu0 0.0
    %1651 = vmatprep.subr.mxu0 0.0
    %1652 = vmatpush1.xpose.msra.mxu0 0.0
    %1653 = vmatprep.subr.mxu0 0.0
    %1654 = vmatpush1.xpose.msra.mxu0 0.0
    %1655 = vmatprep.subr.mxu0 0.0
    %1656 = vmatpush1.xpose.msra.mxu0 0.0
    %1657 = vmatprep.subr.mxu0 0.0
    %1658 = vmatpush1.xpose.msra.mxu0 0.0
    %1659 = vmatprep.subr.mxu0 0.0
    %1660 = vmatpush1.xpose.msra.mxu0 0.0
    %1661 = vmatprep.subr.mxu0 0.0
    %1662 = vmatpush1.xpose.msra.mxu0 0.0
    %1663 = vmatprep.subr.mxu0 0.0
    %1664 = vmatpush1.xpose.msra.mxu0 0.0
    %1665 = vmatprep.subr.mxu0 0.0
    %1666 = vmatpush1.xpose.msra.mxu0 0.0
    %1667 = vmatprep.subr.mxu0 0.0
    %1668 = vmatpush1.xpose.msra.mxu0 0.0
    %1669 = vmatprep.subr.mxu0 0.0
    %1670 = vmatpush1.xpose.msra.mxu0 0.0
    %1671 = vmatprep.subr.mxu0 0.0
    %1672 = vmatpush1.xpose.msra.mxu0 0.0
    %1673 = vmatprep.subr.mxu0 0.0
    %1674 = vmatpush1.xpose.msra.mxu0 0.0
    %1675 = vmatprep.subr.mxu0 0.0
    %1676 = vmatpush1.xpose.msra.mxu0 %v1645
    %1677 = vmatprep.subr.mxu0 0.0
    %1678 = vmatpush1.xpose.msra.mxu0 %v1643
    %1679 = vmatprep.subr.mxu0 0.0
    %1680 = vmatpush2.xpose.msra.mxu0 0.0
    %1681 = vmatprep.subr.mxu0 0.0
    %1682 = vmatpush2.xpose.msra.mxu0 0.0
    %1683 = vmatprep.subr.mxu0 0.0
    %1684 = vmatpush2.xpose.msra.mxu0 0.0
    %1685 = vmatprep.subr.mxu0 0.0
    %1686 = vmatpush2.xpose.msra.mxu0 0.0
    %1687 = vmatprep.subr.mxu0 0.0
    %1688 = vmatpush2.xpose.msra.mxu0 0.0
    %1689 = vmatprep.subr.mxu0 0.0
    %1690 = vmatpush2.xpose.msra.mxu0 0.0
    %1691 = vmatprep.subr.mxu0 0.0
    %1692 = vmatpush2.xpose.msra.mxu0 0.0
    %1693 = vmatprep.subr.mxu0 0.0
    %1694 = vmatpush2.xpose.msra.mxu0 0.0
    %1695 = vmatprep.subr.mxu0 0.0
    %1696 = vmatpush2.xpose.msra.mxu0 0.0
    %1697 = vmatprep.subr.mxu0 0.0
    %1698 = vmatpush2.xpose.msra.mxu0 0.0
    %1699 = vmatprep.subr.mxu0 0.0
    %1700 = vmatpush2.xpose.msra.mxu0 0.0
    %1701 = vmatprep.subr.mxu0 0.0
    %1702 = vmatpush2.xpose.msra.mxu0 0.0
    %1703 = vmatprep.subr.mxu0 0.0
    %1704 = vmatpush2.xpose.msra.mxu0 0.0
    %1705 = vmatprep.subr.mxu0 0.0
    %1706 = vmatpush2.xpose.msra.mxu0 0.0
    %1707 = vmatprep.subr.mxu0 0.0
    %1708 = vmatpush2.xpose.msra.mxu0 0.0
    %1709 = vmatprep.subr.mxu0 0.0
    %1710 = vmatpush2.xpose.msra.mxu0 0.0
    %1711 = vmatprep.mubr.f32.mxu0 0.0
    %1712 = vmatmul.mubr.f32.gmra.mxu0 %v1639
    %v1713 = vpop.f32.mrf.mxu0
    %v1714 = vadd.f32 0.0, %v1713
    %v1715 = vpop.f32.mrf.mxu0
    %1716 = vmatprep.mubr.f32.mxu0 0.0
    %1717 = vmatmul.mubr.f32.gmra.mxu0 %v1641
    %v1718 = vpop.f32.mrf.mxu0
    %v1719 = vadd.f32 0.0, %v1718
    %v1720 = vpop.f32.mrf.mxu0
    %1721 = vdwg.mxu0
    %v1722 = vmul.f32 %v1714, 0.35355338
    %v1723 = vmul.f32 %v1719, 0.35355338
    %v1724 = vsel %vm515, %v1722, -inf
    %1725 = vmax.xlane.f32.xlu0 %v1724
    %v1726 = vpop.xlane.xlu0 %1725
    %v1727 = vsel %vm519, %v1723, -inf
    %1728 = vmax.xlane.f32.xlu0 %v1727
    %v1729 = vpop.xlane.xlu0 %1728
    %v1730 = vsub.f32 %v1722, %v1726
    %v1731 = vsub.f32 %v1723, %v1729
    %v1732 = vmul.f32 %v1730, 1.442695
    %v1733 = vpow.pop %v1732
    %v1734 = vmul.f32 %v1731, 1.442695
    %v1735 = vpow.pop %v1734
    %v1736 = vsel %vm515, %v1733, 0.0
    %1737 = vadd.xlane.f32.xlu0 %v1736
    %v1738 = vpop.xlane.xlu0 %1737
    %v1739 = vsel %vm519, %v1735, 0.0
    %1740 = vadd.xlane.f32.xlu0 %v1739
    %v1741 = vpop.xlane.xlu0 %1740
    %v1742 = vrcp.pop %v1738
    %v1743 = vrcp.pop %v1741
    %v1744 = vmul.f32 %v1733, %v1742
    %v1745 = vmul.f32 %v1735, %v1743
    %1746 = vrot.lane.b32.xlu0 %v1636, 96
    %v1747 = vpop.permute.xlu0 %1746
    %1748 = vrot.lane.b32.xlu0 %v1638, 96
    %v1749 = vpop.permute.xlu0 %1748
    %v1752 = vsel %vm515, %v1744, 0
    %v1755 = vsel %vm515, %v1745, 0
    %v1757 = vsel %vm550, %v1749, 0
    %1759 = vmatprep.subr.mxu0 0.0
    %1760 = vmatpush1.msra.mxu0 0.0
    %1761 = vmatprep.subr.mxu0 0.0
    %1762 = vmatpush1.msra.mxu0 0.0
    %1763 = vmatprep.subr.mxu0 0.0
    %1764 = vmatpush1.msra.mxu0 0.0
    %1765 = vmatprep.subr.mxu0 0.0
    %1766 = vmatpush1.msra.mxu0 0.0
    %1767 = vmatprep.subr.mxu0 0.0
    %1768 = vmatpush1.msra.mxu0 0.0
    %1769 = vmatprep.subr.mxu0 0.0
    %1770 = vmatpush1.msra.mxu0 0.0
    %1771 = vmatprep.subr.mxu0 0.0
    %1772 = vmatpush1.msra.mxu0 0.0
    %1773 = vmatprep.subr.mxu0 0.0
    %1774 = vmatpush1.msra.mxu0 0.0
    %1775 = vmatprep.subr.mxu0 0.0
    %1776 = vmatpush1.msra.mxu0 0.0
    %1777 = vmatprep.subr.mxu0 0.0
    %1778 = vmatpush1.msra.mxu0 0.0
    %1779 = vmatprep.subr.mxu0 0.0
    %1780 = vmatpush1.msra.mxu0 0.0
    %1781 = vmatprep.subr.mxu0 0.0
    %1782 = vmatpush1.msra.mxu0 0.0
    %1783 = vmatprep.subr.mxu0 0.0
    %1784 = vmatpush1.msra.mxu0 0.0
    %1785 = vmatprep.subr.mxu0 0.0
    %1786 = vmatpush1.msra.mxu0 0.0
    %1787 = vmatprep.subr.mxu0 0.0
    %1788 = vmatpush1.msra.mxu0 %v1757
    %1789 = vmatprep.subr.mxu0 0.0
    %1790 = vmatpush1.msra.mxu0 %v1747
    %1791 = vmatprep.subr.mxu0 0.0
    %1792 = vmatpush2.msra.mxu0 0.0
    %1793 = vmatprep.subr.mxu0 0.0
    %1794 = vmatpush2.msra.mxu0 0.0
    %1795 = vmatprep.subr.mxu0 0.0
    %1796 = vmatpush2.msra.mxu0 0.0
    %1797 = vmatprep.subr.mxu0 0.0
    %1798 = vmatpush2.msra.mxu0 0.0
    %1799 = vmatprep.subr.mxu0 0.0
    %1800 = vmatpush2.msra.mxu0 0.0
    %1801 = vmatprep.subr.mxu0 0.0
    %1802 = vmatpush2.msra.mxu0 0.0
    %1803 = vmatprep.subr.mxu0 0.0
    %1804 = vmatpush2.msra.mxu0 0.0
    %1805 = vmatprep.subr.mxu0 0.0
    %1806 = vmatpush2.msra.mxu0 0.0
    %1807 = vmatprep.subr.mxu0 0.0
    %1808 = vmatpush2.msra.mxu0 0.0
    %1809 = vmatprep.subr.mxu0 0.0
    %1810 = vmatpush2.msra.mxu0 0.0
    %1811 = vmatprep.subr.mxu0 0.0
    %1812 = vmatpush2.msra.mxu0 0.0
    %1813 = vmatprep.subr.mxu0 0.0
    %1814 = vmatpush2.msra.mxu0 0.0
    %1815 = vmatprep.subr.mxu0 0.0
    %1816 = vmatpush2.msra.mxu0 0.0
    %1817 = vmatprep.subr.mxu0 0.0
    %1818 = vmatpush2.msra.mxu0 0.0
    %1819 = vmatprep.subr.mxu0 0.0
    %1820 = vmatpush2.msra.mxu0 0.0
    %1821 = vmatprep.subr.mxu0 0.0
    %1822 = vmatpush2.msra.mxu0 0.0
    %1823 = vmatprep.mubr.f32.mxu0 0.0
    %1824 = vmatmul.mubr.f32.gmra.mxu0 %v1752
    %v1825 = vpop.f32.mrf.mxu0
    %v1826 = vadd.f32 0.0, %v1825
    %v1827 = vpop.f32.mrf.mxu0
    %1828 = vmatprep.mubr.f32.mxu0 0.0
    %1829 = vmatmul.mubr.f32.gmra.mxu0 %v1755
    %v1830 = vpop.f32.mrf.mxu0
    %v1831 = vadd.f32 0.0, %v1830
    %v1832 = vpop.f32.mrf.mxu0
    %1833 = vdwg.mxu0
    %v1835 = vsel %vm425, %v1826, 0
    %v1838 = vsel %vm425, %v1831, 0
    %1840 = vmatprep.subr.mxu0 0.0
    %1841 = vmatpush1.msra.mxu0 0.0
    %1842 = vmatprep.subr.mxu0 0.0
    %1843 = vmatpush1.msra.mxu0 0.0
    %1844 = vmatprep.subr.mxu0 0.0
    %1845 = vmatpush1.msra.mxu0 0.0
    %1846 = vmatprep.subr.mxu0 0.0
    %1847 = vmatpush1.msra.mxu0 0.0
    %1848 = vmatprep.subr.mxu0 0.0
    %1849 = vmatpush1.msra.mxu0 0.0
    %1850 = vmatprep.subr.mxu0 0.0
    %1851 = vmatpush1.msra.mxu0 0.0
    %1852 = vmatprep.subr.mxu0 0.0
    %1853 = vmatpush1.msra.mxu0 0.0
    %1854 = vmatprep.subr.mxu0 0.0
    %1855 = vmatpush1.msra.mxu0 0.0
    %1856 = vmatprep.subr.mxu0 0.0
    %1857 = vmatpush1.msra.mxu0 0.0
    %1858 = vmatprep.subr.mxu0 0.0
    %1859 = vmatpush1.msra.mxu0 0.0
    %1860 = vmatprep.subr.mxu0 0.0
    %1861 = vmatpush1.msra.mxu0 0.0
    %1862 = vmatprep.subr.mxu0 0.0
    %1863 = vmatpush1.msra.mxu0 0.0
    %1864 = vmatprep.subr.mxu0 0.0
    %1865 = vmatpush1.msra.mxu0 0.0
    %1866 = vmatprep.subr.mxu0 0.0
    %1867 = vmatpush1.msra.mxu0 0.0
    %1868 = vmatprep.subr.mxu0 0.0
    %1869 = vmatpush1.msra.mxu0 0.0
    %1870 = vmatprep.subr.mxu0 0.0
    %1871 = vmatpush1.msra.mxu0 %v402
    %1872 = vmatprep.subr.mxu0 0.0
    %1873 = vmatpush2.msra.mxu0 0.0
    %1874 = vmatprep.subr.mxu0 0.0
    %1875 = vmatpush2.msra.mxu0 0.0
    %1876 = vmatprep.subr.mxu0 0.0
    %1877 = vmatpush2.msra.mxu0 0.0
    %1878 = vmatprep.subr.mxu0 0.0
    %1879 = vmatpush2.msra.mxu0 0.0
    %1880 = vmatprep.subr.mxu0 0.0
    %1881 = vmatpush2.msra.mxu0 0.0
    %1882 = vmatprep.subr.mxu0 0.0
    %1883 = vmatpush2.msra.mxu0 0.0
    %1884 = vmatprep.subr.mxu0 0.0
    %1885 = vmatpush2.msra.mxu0 0.0
    %1886 = vmatprep.subr.mxu0 0.0
    %1887 = vmatpush2.msra.mxu0 0.0
    %1888 = vmatprep.subr.mxu0 0.0
    %1889 = vmatpush2.msra.mxu0 0.0
    %1890 = vmatprep.subr.mxu0 0.0
    %1891 = vmatpush2.msra.mxu0 0.0
    %1892 = vmatprep.subr.mxu0 0.0
    %1893 = vmatpush2.msra.mxu0 0.0
    %1894 = vmatprep.subr.mxu0 0.0
    %1895 = vmatpush2.msra.mxu0 0.0
    %1896 = vmatprep.subr.mxu0 0.0
    %1897 = vmatpush2.msra.mxu0 0.0
    %1898 = vmatprep.subr.mxu0 0.0
    %1899 = vmatpush2.msra.mxu0 0.0
    %1900 = vmatprep.subr.mxu0 0.0
    %1901 = vmatpush2.msra.mxu0 0.0
    %1902 = vmatprep.subr.mxu0 0.0
    %1903 = vmatpush2.msra.mxu0 0.0
    %1904 = vmatprep.mubr.f32.mxu0 0.0
    %1905 = vmatmul.mubr.f32.gmra.mxu0 %v1835
    %v1906 = vpop.f32.mrf.mxu0
    %v1907 = vadd.f32 0.0, %v1906
    %v1908 = vpop.f32.mrf.mxu0
    %1909 = vmatprep.mubr.f32.mxu0 0.0
    %1910 = vmatmul.mubr.f32.gmra.mxu0 %v1838
    %v1911 = vpop.f32.mrf.mxu0
    %v1912 = vadd.f32 0.0, %v1911
    %v1913 = vpop.f32.mrf.mxu0
    %1914 = vdwg.mxu0
    %v1915 = vadd.f32 %v1625, %v1907
    %v1916 = vadd.f32 %v1626, %v1912
    %1917 = vrot.lane.b32.xlu0 %v1630, 120
    %v1918 = vpop.permute.xlu0 %1917
    %1919 = vrot.lane.b32.xlu0 %v1629, 120
    %v1920 = vpop.permute.xlu0 %1919
    %1921 = vrot.lane.b32.xlu0 %v1636, 120
    %v1922 = vpop.permute.xlu0 %1921
    %1923 = vrot.lane.b32.xlu0 %v1638, 120
    %v1924 = vpop.permute.xlu0 %1923
    %v1925 = vsel %vm425, %v1918, 0
    %v1927 = vsel %vm425, %v1920, 0
    %v1929 = vsel %vm425, %v1922, 0
    %v1931 = vsel %vm425, %v1924, 0
    %1933 = vmatprep.subr.mxu0 0.0
    %1934 = vmatpush1.xpose.msra.mxu0 0.0
    %1935 = vmatprep.subr.mxu0 0.0
    %1936 = vmatpush1.xpose.msra.mxu0 0.0
    %1937 = vmatprep.subr.mxu0 0.0
    %1938 = vmatpush1.xpose.msra.mxu0 0.0
    %1939 = vmatprep.subr.mxu0 0.0
    %1940 = vmatpush1.xpose.msra.mxu0 0.0
    %1941 = vmatprep.subr.mxu0 0.0
    %1942 = vmatpush1.xpose.msra.mxu0 0.0
    %1943 = vmatprep.subr.mxu0 0.0
    %1944 = vmatpush1.xpose.msra.mxu0 0.0
    %1945 = vmatprep.subr.mxu0 0.0
    %1946 = vmatpush1.xpose.msra.mxu0 0.0
    %1947 = vmatprep.subr.mxu0 0.0
    %1948 = vmatpush1.xpose.msra.mxu0 0.0
    %1949 = vmatprep.subr.mxu0 0.0
    %1950 = vmatpush1.xpose.msra.mxu0 0.0
    %1951 = vmatprep.subr.mxu0 0.0
    %1952 = vmatpush1.xpose.msra.mxu0 0.0
    %1953 = vmatprep.subr.mxu0 0.0
    %1954 = vmatpush1.xpose.msra.mxu0 0.0
    %1955 = vmatprep.subr.mxu0 0.0
    %1956 = vmatpush1.xpose.msra.mxu0 0.0
    %1957 = vmatprep.subr.mxu0 0.0
    %1958 = vmatpush1.xpose.msra.mxu0 0.0
    %1959 = vmatprep.subr.mxu0 0.0
    %1960 = vmatpush1.xpose.msra.mxu0 0.0
    %1961 = vmatprep.subr.mxu0 0.0
    %1962 = vmatpush1.xpose.msra.mxu0 %v1931
    %1963 = vmatprep.subr.mxu0 0.0
    %1964 = vmatpush1.xpose.msra.mxu0 %v1929
    %1965 = vmatprep.subr.mxu0 0.0
    %1966 = vmatpush2.xpose.msra.mxu0 0.0
    %1967 = vmatprep.subr.mxu0 0.0
    %1968 = vmatpush2.xpose.msra.mxu0 0.0
    %1969 = vmatprep.subr.mxu0 0.0
    %1970 = vmatpush2.xpose.msra.mxu0 0.0
    %1971 = vmatprep.subr.mxu0 0.0
    %1972 = vmatpush2.xpose.msra.mxu0 0.0
    %1973 = vmatprep.subr.mxu0 0.0
    %1974 = vmatpush2.xpose.msra.mxu0 0.0
    %1975 = vmatprep.subr.mxu0 0.0
    %1976 = vmatpush2.xpose.msra.mxu0 0.0
    %1977 = vmatprep.subr.mxu0 0.0
    %1978 = vmatpush2.xpose.msra.mxu0 0.0
    %1979 = vmatprep.subr.mxu0 0.0
    %1980 = vmatpush2.xpose.msra.mxu0 0.0
    %1981 = vmatprep.subr.mxu0 0.0
    %1982 = vmatpush2.xpose.msra.mxu0 0.0
    %1983 = vmatprep.subr.mxu0 0.0
    %1984 = vmatpush2.xpose.msra.mxu0 0.0
    %1985 = vmatprep.subr.mxu0 0.0
    %1986 = vmatpush2.xpose.msra.mxu0 0.0
    %1987 = vmatprep.subr.mxu0 0.0
    %1988 = vmatpush2.xpose.msra.mxu0 0.0
    %1989 = vmatprep.subr.mxu0 0.0
    %1990 = vmatpush2.xpose.msra.mxu0 0.0
    %1991 = vmatprep.subr.mxu0 0.0
    %1992 = vmatpush2.xpose.msra.mxu0 0.0
    %1993 = vmatprep.subr.mxu0 0.0
    %1994 = vmatpush2.xpose.msra.mxu0 0.0
    %1995 = vmatprep.subr.mxu0 0.0
    %1996 = vmatpush2.xpose.msra.mxu0 0.0
    %1997 = vmatprep.mubr.f32.mxu0 0.0
    %1998 = vmatmul.mubr.f32.gmra.mxu0 %v1925
    %v1999 = vpop.f32.mrf.mxu0
    %v2000 = vadd.f32 0.0, %v1999
    %v2001 = vpop.f32.mrf.mxu0
    %2002 = vmatprep.mubr.f32.mxu0 0.0
    %2003 = vmatmul.mubr.f32.gmra.mxu0 %v1927
    %v2004 = vpop.f32.mrf.mxu0
    %v2005 = vadd.f32 0.0, %v2004
    %v2006 = vpop.f32.mrf.mxu0
    %2007 = vdwg.mxu0
    %v2008 = vmul.f32 %v2000, 0.35355338
    %v2009 = vmul.f32 %v2005, 0.35355338
    %v2010 = vsel %vm515, %v2008, -inf
    %2011 = vmax.xlane.f32.xlu0 %v2010
    %v2012 = vpop.xlane.xlu0 %2011
    %v2013 = vsel %vm519, %v2009, -inf
    %2014 = vmax.xlane.f32.xlu0 %v2013
    %v2015 = vpop.xlane.xlu0 %2014
    %v2016 = vsub.f32 %v2008, %v2012
    %v2017 = vsub.f32 %v2009, %v2015
    %v2018 = vmul.f32 %v2016, 1.442695
    %v2019 = vpow.pop %v2018
    %v2020 = vmul.f32 %v2017, 1.442695
    %v2021 = vpow.pop %v2020
    %v2022 = vsel %vm515, %v2019, 0.0
    %2023 = vadd.xlane.f32.xlu0 %v2022
    %v2024 = vpop.xlane.xlu0 %2023
    %v2025 = vsel %vm519, %v2021, 0.0
    %2026 = vadd.xlane.f32.xlu0 %v2025
    %v2027 = vpop.xlane.xlu0 %2026
    %v2028 = vrcp.pop %v2024
    %v2029 = vrcp.pop %v2027
    %v2030 = vmul.f32 %v2019, %v2028
    %v2031 = vmul.f32 %v2021, %v2029
    %2032 = vrot.lane.b32.xlu0 %v1636, 88
    %v2033 = vpop.permute.xlu0 %2032
    %2034 = vrot.lane.b32.xlu0 %v1638, 88
    %v2035 = vpop.permute.xlu0 %2034
    %v2038 = vsel %vm515, %v2030, 0
    %v2041 = vsel %vm515, %v2031, 0
    %v2043 = vsel %vm550, %v2035, 0
    %2045 = vmatprep.subr.mxu0 0.0
    %2046 = vmatpush1.msra.mxu0 0.0
    %2047 = vmatprep.subr.mxu0 0.0
    %2048 = vmatpush1.msra.mxu0 0.0
    %2049 = vmatprep.subr.mxu0 0.0
    %2050 = vmatpush1.msra.mxu0 0.0
    %2051 = vmatprep.subr.mxu0 0.0
    %2052 = vmatpush1.msra.mxu0 0.0
    %2053 = vmatprep.subr.mxu0 0.0
    %2054 = vmatpush1.msra.mxu0 0.0
    %2055 = vmatprep.subr.mxu0 0.0
    %2056 = vmatpush1.msra.mxu0 0.0
    %2057 = vmatprep.subr.mxu0 0.0
    %2058 = vmatpush1.msra.mxu0 0.0
    %2059 = vmatprep.subr.mxu0 0.0
    %2060 = vmatpush1.msra.mxu0 0.0
    %2061 = vmatprep.subr.mxu0 0.0
    %2062 = vmatpush1.msra.mxu0 0.0
    %2063 = vmatprep.subr.mxu0 0.0
    %2064 = vmatpush1.msra.mxu0 0.0
    %2065 = vmatprep.subr.mxu0 0.0
    %2066 = vmatpush1.msra.mxu0 0.0
    %2067 = vmatprep.subr.mxu0 0.0
    %2068 = vmatpush1.msra.mxu0 0.0
    %2069 = vmatprep.subr.mxu0 0.0
    %2070 = vmatpush1.msra.mxu0 0.0
    %2071 = vmatprep.subr.mxu0 0.0
    %2072 = vmatpush1.msra.mxu0 0.0
    %2073 = vmatprep.subr.mxu0 0.0
    %2074 = vmatpush1.msra.mxu0 %v2043
    %2075 = vmatprep.subr.mxu0 0.0
    %2076 = vmatpush1.msra.mxu0 %v2033
    %2077 = vmatprep.subr.mxu0 0.0
    %2078 = vmatpush2.msra.mxu0 0.0
    %2079 = vmatprep.subr.mxu0 0.0
    %2080 = vmatpush2.msra.mxu0 0.0
    %2081 = vmatprep.subr.mxu0 0.0
    %2082 = vmatpush2.msra.mxu0 0.0
    %2083 = vmatprep.subr.mxu0 0.0
    %2084 = vmatpush2.msra.mxu0 0.0
    %2085 = vmatprep.subr.mxu0 0.0
    %2086 = vmatpush2.msra.mxu0 0.0
    %2087 = vmatprep.subr.mxu0 0.0
    %2088 = vmatpush2.msra.mxu0 0.0
    %2089 = vmatprep.subr.mxu0 0.0
    %2090 = vmatpush2.msra.mxu0 0.0
    %2091 = vmatprep.subr.mxu0 0.0
    %2092 = vmatpush2.msra.mxu0 0.0
    %2093 = vmatprep.subr.mxu0 0.0
    %2094 = vmatpush2.msra.mxu0 0.0
    %2095 = vmatprep.subr.mxu0 0.0
    %2096 = vmatpush2.msra.mxu0 0.0
    %2097 = vmatprep.subr.mxu0 0.0
    %2098 = vmatpush2.msra.mxu0 0.0
    %2099 = vmatprep.subr.mxu0 0.0
    %2100 = vmatpush2.msra.mxu0 0.0
    %2101 = vmatprep.subr.mxu0 0.0
    %2102 = vmatpush2.msra.mxu0 0.0
    %2103 = vmatprep.subr.mxu0 0.0
    %2104 = vmatpush2.msra.mxu0 0.0
    %2105 = vmatprep.subr.mxu0 0.0
    %2106 = vmatpush2.msra.mxu0 0.0
    %2107 = vmatprep.subr.mxu0 0.0
    %2108 = vmatpush2.msra.mxu0 0.0
    %2109 = vmatprep.mubr.f32.mxu0 0.0
    %2110 = vmatmul.mubr.f32.gmra.mxu0 %v2038
    %v2111 = vpop.f32.mrf.mxu0
    %v2112 = vadd.f32 0.0, %v2111
    %v2113 = vpop.f32.mrf.mxu0
    %2114 = vmatprep.mubr.f32.mxu0 0.0
    %2115 = vmatmul.mubr.f32.gmra.mxu0 %v2041
    %v2116 = vpop.f32.mrf.mxu0
    %v2117 = vadd.f32 0.0, %v2116
    %v2118 = vpop.f32.mrf.mxu0
    %2119 = vdwg.mxu0
    %v2121 = vsel %vm425, %v2112, 0
    %v2124 = vsel %vm425, %v2117, 0
    %2126 = vmatprep.subr.mxu0 0.0
    %2127 = vmatpush1.msra.mxu0 0.0
    %2128 = vmatprep.subr.mxu0 0.0
    %2129 = vmatpush1.msra.mxu0 0.0
    %2130 = vmatprep.subr.mxu0 0.0
    %2131 = vmatpush1.msra.mxu0 0.0
    %2132 = vmatprep.subr.mxu0 0.0
    %2133 = vmatpush1.msra.mxu0 0.0
    %2134 = vmatprep.subr.mxu0 0.0
    %2135 = vmatpush1.msra.mxu0 0.0
    %2136 = vmatprep.subr.mxu0 0.0
    %2137 = vmatpush1.msra.mxu0 0.0
    %2138 = vmatprep.subr.mxu0 0.0
    %2139 = vmatpush1.msra.mxu0 0.0
    %2140 = vmatprep.subr.mxu0 0.0
    %2141 = vmatpush1.msra.mxu0 0.0
    %2142 = vmatprep.subr.mxu0 0.0
    %2143 = vmatpush1.msra.mxu0 0.0
    %2144 = vmatprep.subr.mxu0 0.0
    %2145 = vmatpush1.msra.mxu0 0.0
    %2146 = vmatprep.subr.mxu0 0.0
    %2147 = vmatpush1.msra.mxu0 0.0
    %2148 = vmatprep.subr.mxu0 0.0
    %2149 = vmatpush1.msra.mxu0 0.0
    %2150 = vmatprep.subr.mxu0 0.0
    %2151 = vmatpush1.msra.mxu0 0.0
    %2152 = vmatprep.subr.mxu0 0.0
    %2153 = vmatpush1.msra.mxu0 0.0
    %2154 = vmatprep.subr.mxu0 0.0
    %2155 = vmatpush1.msra.mxu0 0.0
    %2156 = vmatprep.subr.mxu0 0.0
    %2157 = vmatpush1.msra.mxu0 %v403
    %2158 = vmatprep.subr.mxu0 0.0
    %2159 = vmatpush2.msra.mxu0 0.0
    %2160 = vmatprep.subr.mxu0 0.0
    %2161 = vmatpush2.msra.mxu0 0.0
    %2162 = vmatprep.subr.mxu0 0.0
    %2163 = vmatpush2.msra.mxu0 0.0
    %2164 = vmatprep.subr.mxu0 0.0
    %2165 = vmatpush2.msra.mxu0 0.0
    %2166 = vmatprep.subr.mxu0 0.0
    %2167 = vmatpush2.msra.mxu0 0.0
    %2168 = vmatprep.subr.mxu0 0.0
    %2169 = vmatpush2.msra.mxu0 0.0
    %2170 = vmatprep.subr.mxu0 0.0
    %2171 = vmatpush2.msra.mxu0 0.0
    %2172 = vmatprep.subr.mxu0 0.0
    %2173 = vmatpush2.msra.mxu0 0.0
    %2174 = vmatprep.subr.mxu0 0.0
    %2175 = vmatpush2.msra.mxu0 0.0
    %2176 = vmatprep.subr.mxu0 0.0
    %2177 = vmatpush2.msra.mxu0 0.0
    %2178 = vmatprep.subr.mxu0 0.0
    %2179 = vmatpush2.msra.mxu0 0.0
    %2180 = vmatprep.subr.mxu0 0.0
    %2181 = vmatpush2.msra.mxu0 0.0
    %2182 = vmatprep.subr.mxu0 0.0
    %2183 = vmatpush2.msra.mxu0 0.0
    %2184 = vmatprep.subr.mxu0 0.0
    %2185 = vmatpush2.msra.mxu0 0.0
    %2186 = vmatprep.subr.mxu0 0.0
    %2187 = vmatpush2.msra.mxu0 0.0
    %2188 = vmatprep.subr.mxu0 0.0
    %2189 = vmatpush2.msra.mxu0 0.0
    %2190 = vmatprep.mubr.f32.mxu0 0.0
    %2191 = vmatmul.mubr.f32.gmra.mxu0 %v2121
    %v2192 = vpop.f32.mrf.mxu0
    %v2193 = vadd.f32 0.0, %v2192
    %v2194 = vpop.f32.mrf.mxu0
    %2195 = vmatprep.mubr.f32.mxu0 0.0
    %2196 = vmatmul.mubr.f32.gmra.mxu0 %v2124
    %v2197 = vpop.f32.mrf.mxu0
    %v2198 = vadd.f32 0.0, %v2197
    %v2199 = vpop.f32.mrf.mxu0
    %2200 = vdwg.mxu0
    %v2201 = vadd.f32 %v1915, %v2193
    %v2202 = vadd.f32 %v1916, %v2198
    %2203 = vrot.lane.b32.xlu0 %v1630, 112
    %v2204 = vpop.permute.xlu0 %2203
    %2205 = vrot.lane.b32.xlu0 %v1629, 112
    %v2206 = vpop.permute.xlu0 %2205
    %2207 = vrot.lane.b32.xlu0 %v1636, 112
    %v2208 = vpop.permute.xlu0 %2207
    %2209 = vrot.lane.b32.xlu0 %v1638, 112
    %v2210 = vpop.permute.xlu0 %2209
    %v2211 = vsel %vm425, %v2204, 0
    %v2213 = vsel %vm425, %v2206, 0
    %v2215 = vsel %vm425, %v2208, 0
    %v2217 = vsel %vm425, %v2210, 0
    %2219 = vmatprep.subr.mxu0 0.0
    %2220 = vmatpush1.xpose.msra.mxu0 0.0
    %2221 = vmatprep.subr.mxu0 0.0
    %2222 = vmatpush1.xpose.msra.mxu0 0.0
    %2223 = vmatprep.subr.mxu0 0.0
    %2224 = vmatpush1.xpose.msra.mxu0 0.0
    %2225 = vmatprep.subr.mxu0 0.0
    %2226 = vmatpush1.xpose.msra.mxu0 0.0
    %2227 = vmatprep.subr.mxu0 0.0
    %2228 = vmatpush1.xpose.msra.mxu0 0.0
    %2229 = vmatprep.subr.mxu0 0.0
    %2230 = vmatpush1.xpose.msra.mxu0 0.0
    %2231 = vmatprep.subr.mxu0 0.0
    %2232 = vmatpush1.xpose.msra.mxu0 0.0
    %2233 = vmatprep.subr.mxu0 0.0
    %2234 = vmatpush1.xpose.msra.mxu0 0.0
    %2235 = vmatprep.subr.mxu0 0.0
    %2236 = vmatpush1.xpose.msra.mxu0 0.0
    %2237 = vmatprep.subr.mxu0 0.0
    %2238 = vmatpush1.xpose.msra.mxu0 0.0
    %2239 = vmatprep.subr.mxu0 0.0
    %2240 = vmatpush1.xpose.msra.mxu0 0.0
    %2241 = vmatprep.subr.mxu0 0.0
    %2242 = vmatpush1.xpose.msra.mxu0 0.0
    %2243 = vmatprep.subr.mxu0 0.0
    %2244 = vmatpush1.xpose.msra.mxu0 0.0
    %2245 = vmatprep.subr.mxu0 0.0
    %2246 = vmatpush1.xpose.msra.mxu0 0.0
    %2247 = vmatprep.subr.mxu0 0.0
    %2248 = vmatpush1.xpose.msra.mxu0 %v2217
    %2249 = vmatprep.subr.mxu0 0.0
    %2250 = vmatpush1.xpose.msra.mxu0 %v2215
    %2251 = vmatprep.subr.mxu0 0.0
    %2252 = vmatpush2.xpose.msra.mxu0 0.0
    %2253 = vmatprep.subr.mxu0 0.0
    %2254 = vmatpush2.xpose.msra.mxu0 0.0
    %2255 = vmatprep.subr.mxu0 0.0
    %2256 = vmatpush2.xpose.msra.mxu0 0.0
    %2257 = vmatprep.subr.mxu0 0.0
    %2258 = vmatpush2.xpose.msra.mxu0 0.0
    %2259 = vmatprep.subr.mxu0 0.0
    %2260 = vmatpush2.xpose.msra.mxu0 0.0
    %2261 = vmatprep.subr.mxu0 0.0
    %2262 = vmatpush2.xpose.msra.mxu0 0.0
    %2263 = vmatprep.subr.mxu0 0.0
    %2264 = vmatpush2.xpose.msra.mxu0 0.0
    %2265 = vmatprep.subr.mxu0 0.0
    %2266 = vmatpush2.xpose.msra.mxu0 0.0
    %2267 = vmatprep.subr.mxu0 0.0
    %2268 = vmatpush2.xpose.msra.mxu0 0.0
    %2269 = vmatprep.subr.mxu0 0.0
    %2270 = vmatpush2.xpose.msra.mxu0 0.0
    %2271 = vmatprep.subr.mxu0 0.0
    %2272 = vmatpush2.xpose.msra.mxu0 0.0
    %2273 = vmatprep.subr.mxu0 0.0
    %2274 = vmatpush2.xpose.msra.mxu0 0.0
    %2275 = vmatprep.subr.mxu0 0.0
    %2276 = vmatpush2.xpose.msra.mxu0 0.0
    %2277 = vmatprep.subr.mxu0 0.0
    %2278 = vmatpush2.xpose.msra.mxu0 0.0
    %2279 = vmatprep.subr.mxu0 0.0
    %2280 = vmatpush2.xpose.msra.mxu0 0.0
    %2281 = vmatprep.subr.mxu0 0.0
    %2282 = vmatpush2.xpose.msra.mxu0 0.0
    %2283 = vmatprep.mubr.f32.mxu0 0.0
    %2284 = vmatmul.mubr.f32.gmra.mxu0 %v2211
    %v2285 = vpop.f32.mrf.mxu0
    %v2286 = vadd.f32 0.0, %v2285
    %v2287 = vpop.f32.mrf.mxu0
    %2288 = vmatprep.mubr.f32.mxu0 0.0
    %2289 = vmatmul.mubr.f32.gmra.mxu0 %v2213
    %v2290 = vpop.f32.mrf.mxu0
    %v2291 = vadd.f32 0.0, %v2290
    %v2292 = vpop.f32.mrf.mxu0
    %2293 = vdwg.mxu0
    %v2294 = vmul.f32 %v2286, 0.35355338
    %v2295 = vmul.f32 %v2291, 0.35355338
    %v2296 = vsel %vm515, %v2294, -inf
    %2297 = vmax.xlane.f32.xlu0 %v2296
    %v2298 = vpop.xlane.xlu0 %2297
    %v2299 = vsel %vm519, %v2295, -inf
    %2300 = vmax.xlane.f32.xlu0 %v2299
    %v2301 = vpop.xlane.xlu0 %2300
    %v2302 = vsub.f32 %v2294, %v2298
    %v2303 = vsub.f32 %v2295, %v2301
    %v2304 = vmul.f32 %v2302, 1.442695
    %v2305 = vpow.pop %v2304
    %v2306 = vmul.f32 %v2303, 1.442695
    %v2307 = vpow.pop %v2306
    %v2308 = vsel %vm515, %v2305, 0.0
    %2309 = vadd.xlane.f32.xlu0 %v2308
    %v2310 = vpop.xlane.xlu0 %2309
    %v2311 = vsel %vm519, %v2307, 0.0
    %2312 = vadd.xlane.f32.xlu0 %v2311
    %v2313 = vpop.xlane.xlu0 %2312
    %v2314 = vrcp.pop %v2310
    %v2315 = vrcp.pop %v2313
    %v2316 = vmul.f32 %v2305, %v2314
    %v2317 = vmul.f32 %v2307, %v2315
    %2318 = vrot.lane.b32.xlu0 %v1636, 80
    %v2319 = vpop.permute.xlu0 %2318
    %2320 = vrot.lane.b32.xlu0 %v1638, 80
    %v2321 = vpop.permute.xlu0 %2320
    %v2324 = vsel %vm515, %v2316, 0
    %v2327 = vsel %vm515, %v2317, 0
    %v2329 = vsel %vm550, %v2321, 0
    %2331 = vmatprep.subr.mxu0 0.0
    %2332 = vmatpush1.msra.mxu0 0.0
    %2333 = vmatprep.subr.mxu0 0.0
    %2334 = vmatpush1.msra.mxu0 0.0
    %2335 = vmatprep.subr.mxu0 0.0
    %2336 = vmatpush1.msra.mxu0 0.0
    %2337 = vmatprep.subr.mxu0 0.0
    %2338 = vmatpush1.msra.mxu0 0.0
    %2339 = vmatprep.subr.mxu0 0.0
    %2340 = vmatpush1.msra.mxu0 0.0
    %2341 = vmatprep.subr.mxu0 0.0
    %2342 = vmatpush1.msra.mxu0 0.0
    %2343 = vmatprep.subr.mxu0 0.0
    %2344 = vmatpush1.msra.mxu0 0.0
    %2345 = vmatprep.subr.mxu0 0.0
    %2346 = vmatpush1.msra.mxu0 0.0
    %2347 = vmatprep.subr.mxu0 0.0
    %2348 = vmatpush1.msra.mxu0 0.0
    %2349 = vmatprep.subr.mxu0 0.0
    %2350 = vmatpush1.msra.mxu0 0.0
    %2351 = vmatprep.subr.mxu0 0.0
    %2352 = vmatpush1.msra.mxu0 0.0
    %2353 = vmatprep.subr.mxu0 0.0
    %2354 = vmatpush1.msra.mxu0 0.0
    %2355 = vmatprep.subr.mxu0 0.0
    %2356 = vmatpush1.msra.mxu0 0.0
    %2357 = vmatprep.subr.mxu0 0.0
    %2358 = vmatpush1.msra.mxu0 0.0
    %2359 = vmatprep.subr.mxu0 0.0
    %2360 = vmatpush1.msra.mxu0 %v2329
    %2361 = vmatprep.subr.mxu0 0.0
    %2362 = vmatpush1.msra.mxu0 %v2319
    %2363 = vmatprep.subr.mxu0 0.0
    %2364 = vmatpush2.msra.mxu0 0.0
    %2365 = vmatprep.subr.mxu0 0.0
    %2366 = vmatpush2.msra.mxu0 0.0
    %2367 = vmatprep.subr.mxu0 0.0
    %2368 = vmatpush2.msra.mxu0 0.0
    %2369 = vmatprep.subr.mxu0 0.0
    %2370 = vmatpush2.msra.mxu0 0.0
    %2371 = vmatprep.subr.mxu0 0.0
    %2372 = vmatpush2.msra.mxu0 0.0
    %2373 = vmatprep.subr.mxu0 0.0
    %2374 = vmatpush2.msra.mxu0 0.0
    %2375 = vmatprep.subr.mxu0 0.0
    %2376 = vmatpush2.msra.mxu0 0.0
    %2377 = vmatprep.subr.mxu0 0.0
    %2378 = vmatpush2.msra.mxu0 0.0
    %2379 = vmatprep.subr.mxu0 0.0
    %2380 = vmatpush2.msra.mxu0 0.0
    %2381 = vmatprep.subr.mxu0 0.0
    %2382 = vmatpush2.msra.mxu0 0.0
    %2383 = vmatprep.subr.mxu0 0.0
    %2384 = vmatpush2.msra.mxu0 0.0
    %2385 = vmatprep.subr.mxu0 0.0
    %2386 = vmatpush2.msra.mxu0 0.0
    %2387 = vmatprep.subr.mxu0 0.0
    %2388 = vmatpush2.msra.mxu0 0.0
    %2389 = vmatprep.subr.mxu0 0.0
    %2390 = vmatpush2.msra.mxu0 0.0
    %2391 = vmatprep.subr.mxu0 0.0
    %2392 = vmatpush2.msra.mxu0 0.0
    %2393 = vmatprep.subr.mxu0 0.0
    %2394 = vmatpush2.msra.mxu0 0.0
    %2395 = vmatprep.mubr.f32.mxu0 0.0
    %2396 = vmatmul.mubr.f32.gmra.mxu0 %v2324
    %v2397 = vpop.f32.mrf.mxu0
    %v2398 = vadd.f32 0.0, %v2397
    %v2399 = vpop.f32.mrf.mxu0
    %2400 = vmatprep.mubr.f32.mxu0 0.0
    %2401 = vmatmul.mubr.f32.gmra.mxu0 %v2327
    %v2402 = vpop.f32.mrf.mxu0
    %v2403 = vadd.f32 0.0, %v2402
    %v2404 = vpop.f32.mrf.mxu0
    %2405 = vdwg.mxu0
    %v2407 = vsel %vm425, %v2398, 0
    %v2410 = vsel %vm425, %v2403, 0
    %2412 = vmatprep.subr.mxu0 0.0
    %2413 = vmatpush1.msra.mxu0 0.0
    %2414 = vmatprep.subr.mxu0 0.0
    %2415 = vmatpush1.msra.mxu0 0.0
    %2416 = vmatprep.subr.mxu0 0.0
    %2417 = vmatpush1.msra.mxu0 0.0
    %2418 = vmatprep.subr.mxu0 0.0
    %2419 = vmatpush1.msra.mxu0 0.0
    %2420 = vmatprep.subr.mxu0 0.0
    %2421 = vmatpush1.msra.mxu0 0.0
    %2422 = vmatprep.subr.mxu0 0.0
    %2423 = vmatpush1.msra.mxu0 0.0
    %2424 = vmatprep.subr.mxu0 0.0
    %2425 = vmatpush1.msra.mxu0 0.0
    %2426 = vmatprep.subr.mxu0 0.0
    %2427 = vmatpush1.msra.mxu0 0.0
    %2428 = vmatprep.subr.mxu0 0.0
    %2429 = vmatpush1.msra.mxu0 0.0
    %2430 = vmatprep.subr.mxu0 0.0
    %2431 = vmatpush1.msra.mxu0 0.0
    %2432 = vmatprep.subr.mxu0 0.0
    %2433 = vmatpush1.msra.mxu0 0.0
    %2434 = vmatprep.subr.mxu0 0.0
    %2435 = vmatpush1.msra.mxu0 0.0
    %2436 = vmatprep.subr.mxu0 0.0
    %2437 = vmatpush1.msra.mxu0 0.0
    %2438 = vmatprep.subr.mxu0 0.0
    %2439 = vmatpush1.msra.mxu0 0.0
    %2440 = vmatprep.subr.mxu0 0.0
    %2441 = vmatpush1.msra.mxu0 0.0
    %2442 = vmatprep.subr.mxu0 0.0
    %2443 = vmatpush1.msra.mxu0 %v404
    %2444 = vmatprep.subr.mxu0 0.0
    %2445 = vmatpush2.msra.mxu0 0.0
    %2446 = vmatprep.subr.mxu0 0.0
    %2447 = vmatpush2.msra.mxu0 0.0
    %2448 = vmatprep.subr.mxu0 0.0
    %2449 = vmatpush2.msra.mxu0 0.0
    %2450 = vmatprep.subr.mxu0 0.0
    %2451 = vmatpush2.msra.mxu0 0.0
    %2452 = vmatprep.subr.mxu0 0.0
    %2453 = vmatpush2.msra.mxu0 0.0
    %2454 = vmatprep.subr.mxu0 0.0
    %2455 = vmatpush2.msra.mxu0 0.0
    %2456 = vmatprep.subr.mxu0 0.0
    %2457 = vmatpush2.msra.mxu0 0.0
    %2458 = vmatprep.subr.mxu0 0.0
    %2459 = vmatpush2.msra.mxu0 0.0
    %2460 = vmatprep.subr.mxu0 0.0
    %2461 = vmatpush2.msra.mxu0 0.0
    %2462 = vmatprep.subr.mxu0 0.0
    %2463 = vmatpush2.msra.mxu0 0.0
    %2464 = vmatprep.subr.mxu0 0.0
    %2465 = vmatpush2.msra.mxu0 0.0
    %2466 = vmatprep.subr.mxu0 0.0
    %2467 = vmatpush2.msra.mxu0 0.0
    %2468 = vmatprep.subr.mxu0 0.0
    %2469 = vmatpush2.msra.mxu0 0.0
    %2470 = vmatprep.subr.mxu0 0.0
    %2471 = vmatpush2.msra.mxu0 0.0
    %2472 = vmatprep.subr.mxu0 0.0
    %2473 = vmatpush2.msra.mxu0 0.0
    %2474 = vmatprep.subr.mxu0 0.0
    %2475 = vmatpush2.msra.mxu0 0.0
    %2476 = vmatprep.mubr.f32.mxu0 0.0
    %2477 = vmatmul.mubr.f32.gmra.mxu0 %v2407
    %v2478 = vpop.f32.mrf.mxu0
    %v2479 = vadd.f32 0.0, %v2478
    %v2480 = vpop.f32.mrf.mxu0
    %2481 = vmatprep.mubr.f32.mxu0 0.0
    %2482 = vmatmul.mubr.f32.gmra.mxu0 %v2410
    %v2483 = vpop.f32.mrf.mxu0
    %v2484 = vadd.f32 0.0, %v2483
    %v2485 = vpop.f32.mrf.mxu0
    %2486 = vdwg.mxu0
    %v2487 = vadd.f32 %v2201, %v2479
    %v2488 = vadd.f32 %v2202, %v2484
    %2489 = vrot.lane.b32.xlu0 %v1630, 104
    %v2490 = vpop.permute.xlu0 %2489
    %2491 = vrot.lane.b32.xlu0 %v1629, 104
    %v2492 = vpop.permute.xlu0 %2491
    %2493 = vrot.lane.b32.xlu0 %v1636, 104
    %v2494 = vpop.permute.xlu0 %2493
    %2495 = vrot.lane.b32.xlu0 %v1638, 104
    %v2496 = vpop.permute.xlu0 %2495
    %v2497 = vsel %vm425, %v2490, 0
    %v2499 = vsel %vm425, %v2492, 0
    %v2501 = vsel %vm425, %v2494, 0
    %v2503 = vsel %vm425, %v2496, 0
    %2505 = vmatprep.subr.mxu0 0.0
    %2506 = vmatpush1.xpose.msra.mxu0 0.0
    %2507 = vmatprep.subr.mxu0 0.0
    %2508 = vmatpush1.xpose.msra.mxu0 0.0
    %2509 = vmatprep.subr.mxu0 0.0
    %2510 = vmatpush1.xpose.msra.mxu0 0.0
    %2511 = vmatprep.subr.mxu0 0.0
    %2512 = vmatpush1.xpose.msra.mxu0 0.0
    %2513 = vmatprep.subr.mxu0 0.0
    %2514 = vmatpush1.xpose.msra.mxu0 0.0
    %2515 = vmatprep.subr.mxu0 0.0
    %2516 = vmatpush1.xpose.msra.mxu0 0.0
    %2517 = vmatprep.subr.mxu0 0.0
    %2518 = vmatpush1.xpose.msra.mxu0 0.0
    %2519 = vmatprep.subr.mxu0 0.0
    %2520 = vmatpush1.xpose.msra.mxu0 0.0
    %2521 = vmatprep.subr.mxu0 0.0
    %2522 = vmatpush1.xpose.msra.mxu0 0.0
    %2523 = vmatprep.subr.mxu0 0.0
    %2524 = vmatpush1.xpose.msra.mxu0 0.0
    %2525 = vmatprep.subr.mxu0 0.0
    %2526 = vmatpush1.xpose.msra.mxu0 0.0
    %2527 = vmatprep.subr.mxu0 0.0
    %2528 = vmatpush1.xpose.msra.mxu0 0.0
    %2529 = vmatprep.subr.mxu0 0.0
    %2530 = vmatpush1.xpose.msra.mxu0 0.0
    %2531 = vmatprep.subr.mxu0 0.0
    %2532 = vmatpush1.xpose.msra.mxu0 0.0
    %2533 = vmatprep.subr.mxu0 0.0
    %2534 = vmatpush1.xpose.msra.mxu0 %v2503
    %2535 = vmatprep.subr.mxu0 0.0
    %2536 = vmatpush1.xpose.msra.mxu0 %v2501
    %2537 = vmatprep.subr.mxu0 0.0
    %2538 = vmatpush2.xpose.msra.mxu0 0.0
    %2539 = vmatprep.subr.mxu0 0.0
    %2540 = vmatpush2.xpose.msra.mxu0 0.0
    %2541 = vmatprep.subr.mxu0 0.0
    %2542 = vmatpush2.xpose.msra.mxu0 0.0
    %2543 = vmatprep.subr.mxu0 0.0
    %2544 = vmatpush2.xpose.msra.mxu0 0.0
    %2545 = vmatprep.subr.mxu0 0.0
    %2546 = vmatpush2.xpose.msra.mxu0 0.0
    %2547 = vmatprep.subr.mxu0 0.0
    %2548 = vmatpush2.xpose.msra.mxu0 0.0
    %2549 = vmatprep.subr.mxu0 0.0
    %2550 = vmatpush2.xpose.msra.mxu0 0.0
    %2551 = vmatprep.subr.mxu0 0.0
    %2552 = vmatpush2.xpose.msra.mxu0 0.0
    %2553 = vmatprep.subr.mxu0 0.0
    %2554 = vmatpush2.xpose.msra.mxu0 0.0
    %2555 = vmatprep.subr.mxu0 0.0
    %2556 = vmatpush2.xpose.msra.mxu0 0.0
    %2557 = vmatprep.subr.mxu0 0.0
    %2558 = vmatpush2.xpose.msra.mxu0 0.0
    %2559 = vmatprep.subr.mxu0 0.0
    %2560 = vmatpush2.xpose.msra.mxu0 0.0
    %2561 = vmatprep.subr.mxu0 0.0
    %2562 = vmatpush2.xpose.msra.mxu0 0.0
    %2563 = vmatprep.subr.mxu0 0.0
    %2564 = vmatpush2.xpose.msra.mxu0 0.0
    %2565 = vmatprep.subr.mxu0 0.0
    %2566 = vmatpush2.xpose.msra.mxu0 0.0
    %2567 = vmatprep.subr.mxu0 0.0
    %2568 = vmatpush2.xpose.msra.mxu0 0.0
    %2569 = vmatprep.mubr.f32.mxu0 0.0
    %2570 = vmatmul.mubr.f32.gmra.mxu0 %v2497
    %v2571 = vpop.f32.mrf.mxu0
    %v2572 = vadd.f32 0.0, %v2571
    %v2573 = vpop.f32.mrf.mxu0
    %2574 = vmatprep.mubr.f32.mxu0 0.0
    %2575 = vmatmul.mubr.f32.gmra.mxu0 %v2499
    %v2576 = vpop.f32.mrf.mxu0
    %v2577 = vadd.f32 0.0, %v2576
    %v2578 = vpop.f32.mrf.mxu0
    %2579 = vdwg.mxu0
    %v2580 = vmul.f32 %v2572, 0.35355338
    %v2581 = vmul.f32 %v2577, 0.35355338
    %v2582 = vsel %vm515, %v2580, -inf
    %2583 = vmax.xlane.f32.xlu0 %v2582
    %v2584 = vpop.xlane.xlu0 %2583
    %v2585 = vsel %vm519, %v2581, -inf
    %2586 = vmax.xlane.f32.xlu0 %v2585
    %v2587 = vpop.xlane.xlu0 %2586
    %v2588 = vsub.f32 %v2580, %v2584
    %v2589 = vsub.f32 %v2581, %v2587
    %v2590 = vmul.f32 %v2588, 1.442695
    %v2591 = vpow.pop %v2590
    %v2592 = vmul.f32 %v2589, 1.442695
    %v2593 = vpow.pop %v2592
    %v2594 = vsel %vm515, %v2591, 0.0
    %2595 = vadd.xlane.f32.xlu0 %v2594
    %v2596 = vpop.xlane.xlu0 %2595
    %v2597 = vsel %vm519, %v2593, 0.0
    %2598 = vadd.xlane.f32.xlu0 %v2597
    %v2599 = vpop.xlane.xlu0 %2598
    %v2600 = vrcp.pop %v2596
    %v2601 = vrcp.pop %v2599
    %v2602 = vmul.f32 %v2591, %v2600
    %v2603 = vmul.f32 %v2593, %v2601
    %2604 = vrot.lane.b32.xlu0 %v1636, 72
    %v2605 = vpop.permute.xlu0 %2604
    %2606 = vrot.lane.b32.xlu0 %v1638, 72
    %v2607 = vpop.permute.xlu0 %2606
    %v2610 = vsel %vm515, %v2602, 0
    %v2613 = vsel %vm515, %v2603, 0
    %v2615 = vsel %vm550, %v2607, 0
    %2617 = vmatprep.subr.mxu0 0.0
    %2618 = vmatpush1.msra.mxu0 0.0
    %2619 = vmatprep.subr.mxu0 0.0
    %2620 = vmatpush1.msra.mxu0 0.0
    %2621 = vmatprep.subr.mxu0 0.0
    %2622 = vmatpush1.msra.mxu0 0.0
    %2623 = vmatprep.subr.mxu0 0.0
    %2624 = vmatpush1.msra.mxu0 0.0
    %2625 = vmatprep.subr.mxu0 0.0
    %2626 = vmatpush1.msra.mxu0 0.0
    %2627 = vmatprep.subr.mxu0 0.0
    %2628 = vmatpush1.msra.mxu0 0.0
    %2629 = vmatprep.subr.mxu0 0.0
    %2630 = vmatpush1.msra.mxu0 0.0
    %2631 = vmatprep.subr.mxu0 0.0
    %2632 = vmatpush1.msra.mxu0 0.0
    %2633 = vmatprep.subr.mxu0 0.0
    %2634 = vmatpush1.msra.mxu0 0.0
    %2635 = vmatprep.subr.mxu0 0.0
    %2636 = vmatpush1.msra.mxu0 0.0
    %2637 = vmatprep.subr.mxu0 0.0
    %2638 = vmatpush1.msra.mxu0 0.0
    %2639 = vmatprep.subr.mxu0 0.0
    %2640 = vmatpush1.msra.mxu0 0.0
    %2641 = vmatprep.subr.mxu0 0.0
    %2642 = vmatpush1.msra.mxu0 0.0
    %2643 = vmatprep.subr.mxu0 0.0
    %2644 = vmatpush1.msra.mxu0 0.0
    %2645 = vmatprep.subr.mxu0 0.0
    %2646 = vmatpush1.msra.mxu0 %v2615
    %2647 = vmatprep.subr.mxu0 0.0
    %2648 = vmatpush1.msra.mxu0 %v2605
    %2649 = vmatprep.subr.mxu0 0.0
    %2650 = vmatpush2.msra.mxu0 0.0
    %2651 = vmatprep.subr.mxu0 0.0
    %2652 = vmatpush2.msra.mxu0 0.0
    %2653 = vmatprep.subr.mxu0 0.0
    %2654 = vmatpush2.msra.mxu0 0.0
    %2655 = vmatprep.subr.mxu0 0.0
    %2656 = vmatpush2.msra.mxu0 0.0
    %2657 = vmatprep.subr.mxu0 0.0
    %2658 = vmatpush2.msra.mxu0 0.0
    %2659 = vmatprep.subr.mxu0 0.0
    %2660 = vmatpush2.msra.mxu0 0.0
    %2661 = vmatprep.subr.mxu0 0.0
    %2662 = vmatpush2.msra.mxu0 0.0
    %2663 = vmatprep.subr.mxu0 0.0
    %2664 = vmatpush2.msra.mxu0 0.0
    %2665 = vmatprep.subr.mxu0 0.0
    %2666 = vmatpush2.msra.mxu0 0.0
    %2667 = vmatprep.subr.mxu0 0.0
    %2668 = vmatpush2.msra.mxu0 0.0
    %2669 = vmatprep.subr.mxu0 0.0
    %2670 = vmatpush2.msra.mxu0 0.0
    %2671 = vmatprep.subr.mxu0 0.0
    %2672 = vmatpush2.msra.mxu0 0.0
    %2673 = vmatprep.subr.mxu0 0.0
    %2674 = vmatpush2.msra.mxu0 0.0
    %2675 = vmatprep.subr.mxu0 0.0
    %2676 = vmatpush2.msra.mxu0 0.0
    %2677 = vmatprep.subr.mxu0 0.0
    %2678 = vmatpush2.msra.mxu0 0.0
    %2679 = vmatprep.subr.mxu0 0.0
    %2680 = vmatpush2.msra.mxu0 0.0
    %2681 = vmatprep.mubr.f32.mxu0 0.0
    %2682 = vmatmul.mubr.f32.gmra.mxu0 %v2610
    %v2683 = vpop.f32.mrf.mxu0
    %v2684 = vadd.f32 0.0, %v2683
    %v2685 = vpop.f32.mrf.mxu0
    %2686 = vmatprep.mubr.f32.mxu0 0.0
    %2687 = vmatmul.mubr.f32.gmra.mxu0 %v2613
    %v2688 = vpop.f32.mrf.mxu0
    %v2689 = vadd.f32 0.0, %v2688
    %v2690 = vpop.f32.mrf.mxu0
    %2691 = vdwg.mxu0
    %v2693 = vsel %vm425, %v2684, 0
    %v2696 = vsel %vm425, %v2689, 0
    %2698 = vmatprep.subr.mxu0 0.0
    %2699 = vmatpush1.msra.mxu0 0.0
    %2700 = vmatprep.subr.mxu0 0.0
    %2701 = vmatpush1.msra.mxu0 0.0
    %2702 = vmatprep.subr.mxu0 0.0
    %2703 = vmatpush1.msra.mxu0 0.0
    %2704 = vmatprep.subr.mxu0 0.0
    %2705 = vmatpush1.msra.mxu0 0.0
    %2706 = vmatprep.subr.mxu0 0.0
    %2707 = vmatpush1.msra.mxu0 0.0
    %2708 = vmatprep.subr.mxu0 0.0
    %2709 = vmatpush1.msra.mxu0 0.0
    %2710 = vmatprep.subr.mxu0 0.0
    %2711 = vmatpush1.msra.mxu0 0.0
    %2712 = vmatprep.subr.mxu0 0.0
    %2713 = vmatpush1.msra.mxu0 0.0
    %2714 = vmatprep.subr.mxu0 0.0
    %2715 = vmatpush1.msra.mxu0 0.0
    %2716 = vmatprep.subr.mxu0 0.0
    %2717 = vmatpush1.msra.mxu0 0.0
    %2718 = vmatprep.subr.mxu0 0.0
    %2719 = vmatpush1.msra.mxu0 0.0
    %2720 = vmatprep.subr.mxu0 0.0
    %2721 = vmatpush1.msra.mxu0 0.0
    %2722 = vmatprep.subr.mxu0 0.0
    %2723 = vmatpush1.msra.mxu0 0.0
    %2724 = vmatprep.subr.mxu0 0.0
    %2725 = vmatpush1.msra.mxu0 0.0
    %2726 = vmatprep.subr.mxu0 0.0
    %2727 = vmatpush1.msra.mxu0 0.0
    %2728 = vmatprep.subr.mxu0 0.0
    %2729 = vmatpush1.msra.mxu0 %v405
    %2730 = vmatprep.subr.mxu0 0.0
    %2731 = vmatpush2.msra.mxu0 0.0
    %2732 = vmatprep.subr.mxu0 0.0
    %2733 = vmatpush2.msra.mxu0 0.0
    %2734 = vmatprep.subr.mxu0 0.0
    %2735 = vmatpush2.msra.mxu0 0.0
    %2736 = vmatprep.subr.mxu0 0.0
    %2737 = vmatpush2.msra.mxu0 0.0
    %2738 = vmatprep.subr.mxu0 0.0
    %2739 = vmatpush2.msra.mxu0 0.0
    %2740 = vmatprep.subr.mxu0 0.0
    %2741 = vmatpush2.msra.mxu0 0.0
    %2742 = vmatprep.subr.mxu0 0.0
    %2743 = vmatpush2.msra.mxu0 0.0
    %2744 = vmatprep.subr.mxu0 0.0
    %2745 = vmatpush2.msra.mxu0 0.0
    %2746 = vmatprep.subr.mxu0 0.0
    %2747 = vmatpush2.msra.mxu0 0.0
    %2748 = vmatprep.subr.mxu0 0.0
    %2749 = vmatpush2.msra.mxu0 0.0
    %2750 = vmatprep.subr.mxu0 0.0
    %2751 = vmatpush2.msra.mxu0 0.0
    %2752 = vmatprep.subr.mxu0 0.0
    %2753 = vmatpush2.msra.mxu0 0.0
    %2754 = vmatprep.subr.mxu0 0.0
    %2755 = vmatpush2.msra.mxu0 0.0
    %2756 = vmatprep.subr.mxu0 0.0
    %2757 = vmatpush2.msra.mxu0 0.0
    %2758 = vmatprep.subr.mxu0 0.0
    %2759 = vmatpush2.msra.mxu0 0.0
    %2760 = vmatprep.subr.mxu0 0.0
    %2761 = vmatpush2.msra.mxu0 0.0
    %2762 = vmatprep.mubr.f32.mxu0 0.0
    %2763 = vmatmul.mubr.f32.gmra.mxu0 %v2693
    %v2764 = vpop.f32.mrf.mxu0
    %v2765 = vadd.f32 0.0, %v2764
    %v2766 = vpop.f32.mrf.mxu0
    %2767 = vmatprep.mubr.f32.mxu0 0.0
    %2768 = vmatmul.mubr.f32.gmra.mxu0 %v2696
    %v2769 = vpop.f32.mrf.mxu0
    %v2770 = vadd.f32 0.0, %v2769
    %v2771 = vpop.f32.mrf.mxu0
    %2772 = vdwg.mxu0
    %v2773 = vadd.f32 %v2487, %v2765
    %v2774 = vadd.f32 %v2488, %v2770
    %v2777 = vrot.slane %v2773, 5
    %v2778 = vrot.slane %v2774, 5
    %v2779 = vsel %vm1633, %v2777, %v2778
    %v2782 = vadd.f32 %v110, %v2777
    %v2783 = vadd.f32 %v111, %v2779
    %v2786 = vrot.slane %v2782, 3
    %v2787 = vrot.slane %v2783, 3
    %v2788 = vsel %vm550, %v2786, %v2787
    %v2791 = vsel %vm121, %v2788, 0.0
    %v2792 = vsel %vm1572, %v2787, 0.0
    %v2793 = vadd.f32 %v2791, %v2792
    %v2794 = vrot.slane %v2793, 4
    %v2795 = vadd.f32 %v2793, %v2794
    %v2796 = vrot.slane %v2795, 2
    %v2797 = vadd.f32 %v2795, %v2796
    %v2798 = vrot.slane %v2797, 1
    %v2799 = vadd.f32 %v2797, %v2798
    %v2800 = vmul.f32 %v2799, %v1581
    %v2801 = vsub.f32 %v2782, %v2800
    %v2802 = vsub.f32 %v2783, %v2800
    %v2803 = vmul.f32 %v2801, %v2801
    %v2804 = vmul.f32 %v2802, %v2802
    %v2807 = vrot.slane %v2803, 3
    %v2808 = vrot.slane %v2804, 3
    %v2809 = vsel %vm550, %v2807, %v2808
    %v2812 = vsel %vm121, %v2809, 0.0
    %v2813 = vsel %vm1572, %v2808, 0.0
    %v2814 = vadd.f32 %v2812, %v2813
    %v2815 = vrot.slane %v2814, 4
    %v2816 = vadd.f32 %v2814, %v2815
    %v2817 = vrot.slane %v2816, 2
    %v2818 = vadd.f32 %v2816, %v2817
    %v2819 = vrot.slane %v2818, 1
    %v2820 = vadd.f32 %v2818, %v2819
    %v2821 = vmul.f32 %v2820, %v1581
    %v2822 = vadd.f32 %v2821, 1e-05
    %v2823 = vrsqrt.pop %v2822
    %v2824 = vmul.f32 %v2801, %v2823
    %v2825 = vmul.f32 %v2802, %v2823
    %v2826 = vmul.f32 %v2824, %v1605
    %v2827 = vmul.f32 %v2825, %v1605
    %v2828 = vadd.f32 %v2826, %v1613
    %v2829 = vadd.f32 %v2827, %v1613
    %vm2830 = vcmask 261123
    %2831 = vst.msk [vmem:[#allocation2 + $0x8] sm:$0xf8] %vm2830, %v2828
    %vm2832 = vcmask 259072
    %2833 = vst.msk [vmem:[#allocation2 + $0x10] sm:$0x3f] %vm2832, %v2829
    %v2834 = vld [vmem:[#allocation2] sm:$0xff]
    %v2835 = vld [vmem:[#allocation2 + $0x8] sm:$0xff]
    %v2836 = vld [vmem:[#allocation2 + $0x10] sm:$0x3f]
    %v2837 = vld [vmem:[#allocation9] sm:$0xff]
    %v2838 = vld [vmem:[#allocation9 + $0x8] sm:$0xff]
    %v2839 = vld [vmem:[#allocation9 + $0x10] sm:$0xff]
    %v2840 = vld [vmem:[#allocation9 + $0x18] sm:$0xff]
    %v2841 = vld [vmem:[%s11] sm:$0x1]
    %v2843 = vlaneseq
    %v2844 = vshrl.u32 %v2843, 7
    %v2845 = vsub.s32 0, %v2844
    %v2846 = vrot.slane %v2841, %v2845
    %v2849 = vsel %vm121, %v2834, 0
    %v2852 = vsel %vm121, %v2835, 0
    %v2855 = vsel %vm121, %v2836, 0
    %2857 = vmatprep.subr.mxu0 0.0
    %2858 = vmatpush1.msra.mxu0 0.0
    %2859 = vmatprep.subr.mxu0 0.0
    %2860 = vmatpush1.msra.mxu0 0.0
    %2861 = vmatprep.subr.mxu0 0.0
    %2862 = vmatpush1.msra.mxu0 0.0
    %2863 = vmatprep.subr.mxu0 0.0
    %2864 = vmatpush1.msra.mxu0 0.0
    %2865 = vmatprep.subr.mxu0 0.0
    %2866 = vmatpush1.msra.mxu0 0.0
    %2867 = vmatprep.subr.mxu0 0.0
    %2868 = vmatpush1.msra.mxu0 0.0
    %2869 = vmatprep.subr.mxu0 0.0
    %2870 = vmatpush1.msra.mxu0 0.0
    %2871 = vmatprep.subr.mxu0 0.0
    %2872 = vmatpush1.msra.mxu0 0.0
    %2873 = vmatprep.subr.mxu0 0.0
    %2874 = vmatpush1.msra.mxu0 0.0
    %2875 = vmatprep.subr.mxu0 0.0
    %2876 = vmatpush1.msra.mxu0 0.0
    %2877 = vmatprep.subr.mxu0 0.0
    %2878 = vmatpush1.msra.mxu0 0.0
    %2879 = vmatprep.subr.mxu0 0.0
    %2880 = vmatpush1.msra.mxu0 0.0
    %2881 = vmatprep.subr.mxu0 0.0
    %2882 = vmatpush1.msra.mxu0 %v2840
    %2883 = vmatprep.subr.mxu0 0.0
    %2884 = vmatpush1.msra.mxu0 %v2839
    %2885 = vmatprep.subr.mxu0 0.0
    %2886 = vmatpush1.msra.mxu0 %v2838
    %2887 = vmatprep.subr.mxu0 0.0
    %2888 = vmatpush1.msra.mxu0 %v2837
    %2889 = vmatprep.subr.mxu0 0.0
    %2890 = vmatpush2.msra.mxu0 0.0
    %2891 = vmatprep.subr.mxu0 0.0
    %2892 = vmatpush2.msra.mxu0 0.0
    %2893 = vmatprep.subr.mxu0 0.0
    %2894 = vmatpush2.msra.mxu0 0.0
    %2895 = vmatprep.subr.mxu0 0.0
    %2896 = vmatpush2.msra.mxu0 0.0
    %2897 = vmatprep.subr.mxu0 0.0
    %2898 = vmatpush2.msra.mxu0 0.0
    %2899 = vmatprep.subr.mxu0 0.0
    %2900 = vmatpush2.msra.mxu0 0.0
    %2901 = vmatprep.subr.mxu0 0.0
    %2902 = vmatpush2.msra.mxu0 0.0
    %2903 = vmatprep.subr.mxu0 0.0
    %2904 = vmatpush2.msra.mxu0 0.0
    %2905 = vmatprep.subr.mxu0 0.0
    %2906 = vmatpush2.msra.mxu0 0.0
    %2907 = vmatprep.subr.mxu0 0.0
    %2908 = vmatpush2.msra.mxu0 0.0
    %2909 = vmatprep.subr.mxu0 0.0
    %2910 = vmatpush2.msra.mxu0 0.0
    %2911 = vmatprep.subr.mxu0 0.0
    %2912 = vmatpush2.msra.mxu0 0.0
    %2913 = vmatprep.subr.mxu0 0.0
    %2914 = vmatpush2.msra.mxu0 0.0
    %2915 = vmatprep.subr.mxu0 0.0
    %2916 = vmatpush2.msra.mxu0 0.0
    %2917 = vmatprep.subr.mxu0 0.0
    %2918 = vmatpush2.msra.mxu0 0.0
    %2919 = vmatprep.subr.mxu0 0.0
    %2920 = vmatpush2.msra.mxu0 0.0
    %2921 = vmatprep.mubr.f32.mxu0 0.0
    %2922 = vmatmul.mubr.f32.gmra.mxu0 %v2849
    %v2923 = vpop.f32.mrf.mxu0
    %v2924 = vadd.f32 %v2846, %v2923
    %v2925 = vpop.f32.mrf.mxu0
    %2926 = vmatprep.mubr.f32.mxu0 0.0
    %2927 = vmatmul.mubr.f32.gmra.mxu0 %v2852
    %v2928 = vpop.f32.mrf.mxu0
    %v2929 = vadd.f32 %v2846, %v2928
    %v2930 = vpop.f32.mrf.mxu0
    %2931 = vmatprep.mubr.f32.mxu0 0.0
    %2932 = vmatmul.mubr.f32.gmra.mxu0 %v2855
    %v2933 = vpop.f32.mrf.mxu0
    %v2934 = vadd.f32 %v2846, %v2933
    %v2935 = vpop.f32.mrf.mxu0
    %2936 = vdwg.mxu0
    %v2937 = vmul.f32 %v2924, 0.5
    %v2938 = vmul.f32 %v2929, 0.5
    %v2939 = vmul.f32 %v2934, 0.5
    %v2940 = vmul.f32 %v2924, 0.044715
    %v2941 = vmul.f32 %v2929, 0.044715
    %v2942 = vmul.f32 %v2934, 0.044715
    %v2943 = vmul.f32 %v2940, %v2924
    %v2944 = vmul.f32 %v2941, %v2929
    %v2945 = vmul.f32 %v2942, %v2934
    %v2946 = vmul.f32 %v2943, %v2924
    %v2947 = vmul.f32 %v2944, %v2929
    %v2948 = vmul.f32 %v2945, %v2934
    %v2949 = vadd.f32 %v2924, %v2946
    %v2950 = vadd.f32 %v2929, %v2947
    %v2951 = vadd.f32 %v2934, %v2948
    %v2952 = vmul.f32 %v2949, 0.7978846
    %v2953 = vmul.f32 %v2950, 0.7978846
    %v2954 = vmul.f32 %v2951, 0.7978846
    %v2955 = vtanh.pop %v2952
    %v2956 = vtanh.pop %v2953
    %v2957 = vtanh.pop %v2954
    %v2958 = vadd.f32 %v2955, 1.0
    %v2959 = vadd.f32 %v2956, 1.0
    %v2960 = vadd.f32 %v2957, 1.0
    %v2961 = vmul.f32 %v2937, %v2958
    %v2962 = vmul.f32 %v2938, %v2959
    %v2963 = vmul.f32 %v2939, %v2960
    %v2964 = vld [vmem:[%s12] sm:$0xff]
    %v2965 = vld [vmem:[%s12 + $0x8] sm:$0xff]
    %v2966 = vld [vmem:[%s12 + $0x10] sm:$0xff]
    %v2967 = vld [vmem:[%s12 + $0x18] sm:$0xff]
    %v2968 = vld [vmem:[%s12 + $0x20] sm:$0xff]
    %v2969 = vld [vmem:[%s12 + $0x28] sm:$0xff]
    %v2970 = vld [vmem:[%s12 + $0x30] sm:$0xff]
    %v2971 = vld [vmem:[%s12 + $0x38] sm:$0xff]
    %v2972 = vld [vmem:[%s13] sm:$0x1]
    %v2974 = vlaneseq
    %v2975 = vshrl.u32 %v2974, 7
    %v2976 = vsub.s32 0, %v2975
    %v2977 = vrot.slane %v2972, %v2976
    %vm2979 = vcmask 523264
    %v2981 = vsel %vm2979, %v2961, 0
    %v2984 = vsel %vm2979, %v2962, 0
    %v2987 = vsel %vm2979, %v2963, 0
    %2989 = vmatprep.subr.mxu0 0.0
    %2990 = vmatpush1.msra.mxu0 0.0
    %2991 = vmatprep.subr.mxu0 0.0
    %2992 = vmatpush1.msra.mxu0 0.0
    %2993 = vmatprep.subr.mxu0 0.0
    %2994 = vmatpush1.msra.mxu0 0.0
    %2995 = vmatprep.subr.mxu0 0.0
    %2996 = vmatpush1.msra.mxu0 0.0
    %2997 = vmatprep.subr.mxu0 0.0
    %2998 = vmatpush1.msra.mxu0 0.0
    %2999 = vmatprep.subr.mxu0 0.0
    %3000 = vmatpush1.msra.mxu0 0.0
    %3001 = vmatprep.subr.mxu0 0.0
    %3002 = vmatpush1.msra.mxu0 0.0
    %3003 = vmatprep.subr.mxu0 0.0
    %3004 = vmatpush1.msra.mxu0 0.0
    %3005 = vmatprep.subr.mxu0 0.0
    %3006 = vmatpush1.msra.mxu0 %v2971
    %3007 = vmatprep.subr.mxu0 0.0
    %3008 = vmatpush1.msra.mxu0 %v2970
    %3009 = vmatprep.subr.mxu0 0.0
    %3010 = vmatpush1.msra.mxu0 %v2969
    %3011 = vmatprep.subr.mxu0 0.0
    %3012 = vmatpush1.msra.mxu0 %v2968
    %3013 = vmatprep.subr.mxu0 0.0
    %3014 = vmatpush1.msra.mxu0 %v2967
    %3015 = vmatprep.subr.mxu0 0.0
    %3016 = vmatpush1.msra.mxu0 %v2966
    %3017 = vmatprep.subr.mxu0 0.0
    %3018 = vmatpush1.msra.mxu0 %v2965
    %3019 = vmatprep.subr.mxu0 0.0
    %3020 = vmatpush1.msra.mxu0 %v2964
    %3021 = vmatprep.subr.mxu0 0.0
    %3022 = vmatpush2.msra.mxu0 0.0
    %3023 = vmatprep.subr.mxu0 0.0
    %3024 = vmatpush2.msra.mxu0 0.0
    %3025 = vmatprep.subr.mxu0 0.0
    %3026 = vmatpush2.msra.mxu0 0.0
    %3027 = vmatprep.subr.mxu0 0.0
    %3028 = vmatpush2.msra.mxu0 0.0
    %3029 = vmatprep.subr.mxu0 0.0
    %3030 = vmatpush2.msra.mxu0 0.0
    %3031 = vmatprep.subr.mxu0 0.0
    %3032 = vmatpush2.msra.mxu0 0.0
    %3033 = vmatprep.subr.mxu0 0.0
    %3034 = vmatpush2.msra.mxu0 0.0
    %3035 = vmatprep.subr.mxu0 0.0
    %3036 = vmatpush2.msra.mxu0 0.0
    %3037 = vmatprep.subr.mxu0 0.0
    %3038 = vmatpush2.msra.mxu0 0.0
    %3039 = vmatprep.subr.mxu0 0.0
    %3040 = vmatpush2.msra.mxu0 0.0
    %3041 = vmatprep.subr.mxu0 0.0
    %3042 = vmatpush2.msra.mxu0 0.0
    %3043 = vmatprep.subr.mxu0 0.0
    %3044 = vmatpush2.msra.mxu0 0.0
    %3045 = vmatprep.subr.mxu0 0.0
    %3046 = vmatpush2.msra.mxu0 0.0
    %3047 = vmatprep.subr.mxu0 0.0
    %3048 = vmatpush2.msra.mxu0 0.0
    %3049 = vmatprep.subr.mxu0 0.0
    %3050 = vmatpush2.msra.mxu0 0.0
    %3051 = vmatprep.subr.mxu0 0.0
    %3052 = vmatpush2.msra.mxu0 0.0
    %3053 = vmatprep.mubr.f32.mxu0 0.0
    %3054 = vmatmul.mubr.f32.gmra.mxu0 %v2981
    %v3055 = vpop.f32.mrf.mxu0
    %v3056 = vadd.f32 %v2977, %v3055
    %v3057 = vpop.f32.mrf.mxu0
    %3058 = vmatprep.mubr.f32.mxu0 0.0
    %3059 = vmatmul.mubr.f32.gmra.mxu0 %v2984
    %v3060 = vpop.f32.mrf.mxu0
    %v3061 = vadd.f32 %v2977, %v3060
    %v3062 = vpop.f32.mrf.mxu0
    %3063 = vmatprep.mubr.f32.mxu0 0.0
    %3064 = vmatmul.mubr.f32.gmra.mxu0 %v2987
    %v3065 = vpop.f32.mrf.mxu0
    %v3066 = vadd.f32 %v2977, %v3065
    %v3067 = vpop.f32.mrf.mxu0
    %3068 = vdwg.mxu0
    %v3069 = vadd.f32 %v2834, %v3056
    %v3070 = vadd.f32 %v2835, %v3061
    %v3071 = vsel %vm121, %v3069, 0.0
    %v3072 = vsel %vm1572, %v3070, 0.0
    %v3073 = vadd.f32 %v3071, %v3072
    %v3074 = vrot.slane %v3073, 4
    %v3075 = vadd.f32 %v3073, %v3074
    %v3076 = vrot.slane %v3075, 2
    %v3077 = vadd.f32 %v3075, %v3076
    %v3078 = vrot.slane %v3077, 1
    %v3079 = vadd.f32 %v3077, %v3078
    %v3080 = vmul.f32 %v3079, %v1581
    %v3081 = vsub.f32 %v3069, %v3080
    %v3082 = vsub.f32 %v3070, %v3080
    %v3083 = vmul.f32 %v3081, %v3081
    %v3084 = vmul.f32 %v3082, %v3082
    %v3085 = vsel %vm121, %v3083, 0.0
    %v3086 = vsel %vm1572, %v3084, 0.0
    %v3087 = vadd.f32 %v3085, %v3086
    %v3088 = vrot.slane %v3087, 4
    %v3089 = vadd.f32 %v3087, %v3088
    %v3090 = vrot.slane %v3089, 2
    %v3091 = vadd.f32 %v3089, %v3090
    %v3092 = vrot.slane %v3091, 1
    %v3093 = vadd.f32 %v3091, %v3092
    %v3094 = vmul.f32 %v3093, %v1581
    %v3095 = vadd.f32 %v3094, 1e-05
    %v3096 = vrsqrt.pop %v3095
    %v3097 = vmul.f32 %v3081, %v3096
    %v3098 = vmul.f32 %v3082, %v3096
    %v3100 = vlaneseq
    %v3101 = vshrl.u32 %v3100, 7
    %v3102 = vsub.s32 0, %v3101
    %v3103 = vrot.slane %v409, %v3102
    %v3105 = vmul.f32 %v3097, %v3103
    %v3106 = vmul.f32 %v3098, %v3103
    %v3108 = vlaneseq
    %v3109 = vshrl.u32 %v3108, 7
    %v3110 = vsub.s32 0, %v3109
    %v3111 = vrot.slane %v410, %v3110
    %v3113 = vadd.f32 %v3105, %v3111
    %v3114 = vadd.f32 %v3106, %v3111
    %3115 = vst.msk [vmem:[#allocation11] sm:$0xff] %vm121, %v3113
    %3116 = vst.msk [vmem:[#allocation11 + $0x8] sm:$0x7] %vm1572, %v3114
    %v3117 = vadd.f32 %v2836, %v3066
    %v3120 = vrot.slane %v3070, 3
    %v3121 = vrot.slane %v3117, 3
    %v3122 = vsel %vm550, %v3120, %v3121
    %v3125 = vsel %vm121, %v3122, 0.0
    %v3126 = vsel %vm1572, %v3121, 0.0
    %v3127 = vadd.f32 %v3125, %v3126
    %v3128 = vrot.slane %v3127, 4
    %v3129 = vadd.f32 %v3127, %v3128
    %v3130 = vrot.slane %v3129, 2
    %v3131 = vadd.f32 %v3129, %v3130
    %v3132 = vrot.slane %v3131, 1
    %v3133 = vadd.f32 %v3131, %v3132
    %v3134 = vmul.f32 %v3133, %v1581
    %v3135 = vsub.f32 %v3070, %v3134
    %v3136 = vsub.f32 %v3117, %v3134
    %v3137 = vmul.f32 %v3135, %v3135
    %v3138 = vmul.f32 %v3136, %v3136
    %v3141 = vrot.slane %v3137, 3
    %v3142 = vrot.slane %v3138, 3
    %v3143 = vsel %vm550, %v3141, %v3142
    %v3146 = vsel %vm121, %v3143, 0.0
    %v3147 = vsel %vm1572, %v3142, 0.0
    %v3148 = vadd.f32 %v3146, %v3147
    %v3149 = vrot.slane %v3148, 4
    %v3150 = vadd.f32 %v3148, %v3149
    %v3151 = vrot.slane %v3150, 2
    %v3152 = vadd.f32 %v3150, %v3151
    %v3153 = vrot.slane %v3152, 1
    %v3154 = vadd.f32 %v3152, %v3153
    %v3155 = vmul.f32 %v3154, %v1581
    %v3156 = vadd.f32 %v3155, 1e-05
    %v3157 = vrsqrt.pop %v3156
    %v3158 = vmul.f32 %v3135, %v3157
    %v3159 = vmul.f32 %v3136, %v3157
    %v3160 = vmul.f32 %v3158, %v3103
    %v3161 = vmul.f32 %v3159, %v3103
    %v3162 = vadd.f32 %v3160, %v3111
    %v3163 = vadd.f32 %v3161, %v3111
    %3164 = vst.msk [vmem:[#allocation11 + $0x8] sm:$0xf8] %vm2830, %v3162
    %3165 = vst.msk [vmem:[#allocation11 + $0x10] sm:$0x3f] %vm2832, %v3163
    // Predicated region
    $region82: #{tpu_custom_call.1} parent=1 // pred_check
      _
    $region83: #{tpu_custom_call.1} parent=1 // pred_check_branch
      %3167 = sbr.rel (0) target = $region85
    $region84: #{tpu_custom_call.1} parent=1 // pred_region
      %s3169 = ssub.s32 384, 384
      %3170 = vsyncadd [#allocation5], %s3169
      %s3171 = sshll.u32 [#allocation11], 4
      %s3172 = int_to_ptr.vmem [resolvable:$true] %s3171
      %3177 = dma.vmem_to_hbm [thread:$0]  %s3172, 384, %s16, [#allocation5], 128, 128, 8
    $region85: #{tpu_custom_call.1} parent=1 // pred_fallthru
      _
    // Predicated region
    $region86: #{tpu_custom_call.1} parent=1 // pred_check
      _
    $region87: #{tpu_custom_call.1} parent=1 // pred_check_branch
      %3179 = sbr.rel (0) target = $region89
    $region88: #{tpu_custom_call.1} parent=1 // pred_region
      %3180 = dma.done [#allocation5], 384
    $region89: #{tpu_custom_call.1} parent=1 // pred_fallthru
      _
    %3181 = vsyncpa [#allocation4], 1
    %3182 = vsyncpa [#allocation7], 1
    %3183 = vsyncpa [#allocation10], 1
    %3184 = vsyncpa [#allocation5], 1

</llo_original>
